<compile_context>
chip_gen: v7x
topology: tpu7x:2x2x1
jax: 0.10.0
libtpu: 0.0.40
codegen_flags: <defaults>
</compile_context>

<pallas_src>
import jax
import jax.numpy as jnp
from jax import lax
from jax.experimental import pallas as pl
from jax.experimental.pallas import tpu as pltpu

KH = KW = 3  # 3x3 conv stem (stride 1, 'same' padding)


def _hash_keep_mask(idx_u32, seed_u32):
    """lowbias32-style integer hash -> boolean keep mask with p_keep = 0.5."""
    x = idx_u32 + seed_u32 * jnp.uint32(0x9E3779B9)
    x = x ^ (x >> 16)
    x = x * jnp.uint32(0x7FEB352D)
    x = x ^ (x >> 15)
    x = x * jnp.uint32(0x846CA68B)
    x = x ^ (x >> 16)
    return (x >> 31) == jnp.uint32(0)   # top bit clear -> keep (prob 0.5)


def encoder_kernel(seed_ref, img_ref, wconv_ref, bconv_ref, wfc_ref, bfc_ref,
                   out_ref):
    """One batch tile per grid step.

    seed_ref : (1,) int32 SMEM (scalar prefetch)
    img_ref  : (B_TILE, H+2, W+2, Cin)  bf16 'same'-padded NHWC image tile
    wconv_ref: (KH*KW, Cin, Cfeat)      bf16 conv weight, one (Cin,Cfeat) per tap
    bconv_ref: (1, Cfeat)               f32
    wfc_ref  : (Cfeat, E)               bf16 replaced inception fc
    bfc_ref  : (1, E)                   f32
    out_ref  : (B_TILE, E)              f32
    """
    bt = pl.program_id(0)

    img = img_ref[...]                                 # (BT, H+2, W+2, Cin) bf16
    BT, HP, WP, Cin = img.shape
    H, W = HP - (KH - 1), WP - (KW - 1)
    HW = H * W
    wconv = wconv_ref[...]                             # (9, Cin, Cfeat) bf16
    Cfeat = wconv.shape[-1]

    # --- backbone stand-in: 3x3 conv as 9 per-tap matmuls, f32 accumulation ---
    acc = jnp.zeros((BT * HW, Cfeat), jnp.float32)
    for t, (kh, kw) in enumerate((a, b) for a in range(KH) for b in range(KW)):
        tap = img[:, kh:kh + H, kw:kw + W, :].reshape(BT * HW, Cin)
        acc = acc + jnp.dot(tap, wconv[t], preferred_element_type=jnp.float32)
    feat = jnp.maximum(acc + bconv_ref[...], 0.0)      # conv bias + ReLU

    # --- global average pool per sample: sum + one scalar scale ---------------
    pooled = jnp.sum(feat.reshape(BT, HW, Cfeat), axis=1) * (1.0 / HW)  # (BT,Cfeat)

    # --- replaced head: fc -> ReLU -> Dropout(0.5), whole batch tile at once --
    emb = jnp.dot(pooled.astype(wfc_ref.dtype), wfc_ref[...],
                  preferred_element_type=jnp.float32) + bfc_ref[...]    # (BT, E)
    emb = jnp.maximum(emb, 0.0)                        # self.relu

    E = emb.shape[-1]
    row = lax.broadcasted_iota(jnp.int32, emb.shape, 0) + bt * BT  # global batch idx
    col = lax.broadcasted_iota(jnp.int32, emb.shape, 1)
    keep = _hash_keep_mask((row * E + col).astype(jnp.uint32),
                           seed_ref[0].astype(jnp.uint32))
    out_ref[...] = jnp.where(keep, emb * 2.0, 0.0)     # train-mode scale 1/(1-p)


def encoder_cnn_forward(image, params, seed=0):
    """image: (B, Cin, H, W) float32, NCHW like PyTorch."""
    B, Cin, H, W = image.shape
    Cfeat = params["w_conv"].shape[-1]
    E = params["w_fc"].shape[-1]

    B_TILE = B if B <= 8 else 8
    assert B % B_TILE == 0, "batch must be divisible by the batch tile"

    # glue (layout only): NCHW -> NHWC, 'same' pad, bf16 MXU inputs
    x = jnp.transpose(image, (0, 2, 3, 1))
    xp = jnp.pad(x, ((0, 0), (1, 1), (1, 1), (0, 0))).astype(jnp.bfloat16)
    wconv = params["w_conv"].reshape(KH * KW, Cin, Cfeat).astype(jnp.bfloat16)
    bconv = params["b_conv"].reshape(1, Cfeat).astype(jnp.float32)
    wfc = params["w_fc"].astype(jnp.bfloat16)
    bfc = params["b_fc"].reshape(1, E).astype(jnp.float32)
    seed_arr = jnp.array([seed], dtype=jnp.int32)

    # TODO(synk): at real Inception sizes (HW ~ 89k) add a spatial reduction grid
    #             axis with a VMEM GAP accumulator so tiles fit v7x's 64 MiB VMEM.
    out = pl.pallas_call(
        encoder_kernel,
        out_shape=jax.ShapeDtypeStruct((B, E), jnp.float32),
        grid_spec=pltpu.PrefetchScalarGridSpec(
            num_scalar_prefetch=1,
            grid=(B // B_TILE,),
            in_specs=[
                pl.BlockSpec((B_TILE, H + 2, W + 2, Cin),
                             lambda bt, seed: (bt, 0, 0, 0)),
                pl.BlockSpec((KH * KW, Cin, Cfeat), lambda bt, seed: (0, 0, 0)),
                pl.BlockSpec((1, Cfeat), lambda bt, seed: (0, 0)),
                pl.BlockSpec((Cfeat, E), lambda bt, seed: (0, 0)),
                pl.BlockSpec((1, E), lambda bt, seed: (0, 0)),
            ],
            out_specs=pl.BlockSpec((B_TILE, E), lambda bt, seed: (bt, 0)),
        ),
        compiler_params=pltpu.CompilerParams(
            dimension_semantics=("parallel",),
            vmem_limit_bytes=48 * 1024 * 1024),
    )(seed_arr, xp, wconv, bconv, wfc, bfc)
    return out


def encoder_cnn_reference(image, params, seed=0):
    """Pure-JAX reference with the same bf16/f32 mixed precision + dropout hash."""
    B, Cin, H, W = image.shape
    Cfeat = params["w_conv"].shape[-1]
    E = params["w_fc"].shape[-1]
    x = jnp.transpose(image, (0, 2, 3, 1))
    xp = jnp.pad(x, ((0, 0), (1, 1), (1, 1), (0, 0))).astype(jnp.bfloat16)
    wconv = params["w_conv"].astype(jnp.bfloat16)
    acc = jnp.zeros((B, H, W, Cfeat), jnp.float32)
    for kh in range(KH):
        for kw in range(KW):
            acc = acc + jnp.einsum(
                "bhwc,cf->bhwf", xp[:, kh:kh + H, kw:kw + W, :], wconv[kh, kw],
                preferred_element_type=jnp.float32)
    feat = jnp.maximum(acc + params["b_conv"], 0.0)
    pooled = jnp.mean(feat, axis=(1, 2))
    emb = jnp.dot(pooled.astype(jnp.bfloat16),
                  params["w_fc"].astype(jnp.bfloat16),
                  preferred_element_type=jnp.float32) + params["b_fc"]
    emb = jnp.maximum(emb, 0.0)
    row = jnp.arange(B, dtype=jnp.int32)[:, None]
    col = jnp.arange(E, dtype=jnp.int32)[None, :]
    keep = _hash_keep_mask((row * E + col).astype(jnp.uint32), jnp.uint32(seed))
    return jnp.where(keep, emb * 2.0, 0.0)


def init_params(key, cin, cfeat, embed_size):
    k1, k2, k3, k4 = jax.random.split(key, 4)
    return {
        "w_conv": jax.random.normal(k1, (KH, KW, cin, cfeat), jnp.float32) * 0.1,
        "b_conv": jax.random.normal(k2, (cfeat,), jnp.float32) * 0.01,
        "w_fc":   jax.random.normal(k3, (cfeat, embed_size), jnp.float32) * 0.1,
        "b_fc":   jax.random.normal(k4, (embed_size,), jnp.float32) * 0.01,
    }


if __name__ == "__main__":
    key = jax.random.PRNGKey(0)
    kx, kp = jax.random.split(key)

    B, Cin, H, W = 2, 4, 16, 16        # small synthetic image (NCHW)
    Cfeat, embed_size = 32, 32         # stand-in for the 2048 -> embed_size head

    image = jax.random.normal(kx, (B, Cin, H, W), jnp.float32)
    params = init_params(kp, Cin, Cfeat, embed_size)

    out = jax.block_until_ready(encoder_cnn_forward(image, params, seed=0))
    ref = jax.block_until_ready(encoder_cnn_reference(image, params, seed=0))

    assert out.shape == (B, embed_size) and out.dtype == jnp.float32
    assert bool(jnp.all(jnp.isfinite(out)))
    assert bool(jnp.allclose(out, ref, atol=5e-2, rtol=5e-2))
    print("KERNEL_OK")
</pallas_src>

<mosaic_0001>
module attributes {stable_mosaic.version = 11 : i64} {
  func.func @encoder_kernel(%arg0: i32, %arg1: memref<1xi32, #tpu.memory_space<smem>>, %arg2: memref<2x18x18x4xbf16, #tpu.memory_space<vmem>>, %arg3: memref<9x4x32xbf16, #tpu.memory_space<vmem>>, %arg4: memref<1x32xf32, #tpu.memory_space<vmem>>, %arg5: memref<32x32xbf16, #tpu.memory_space<vmem>>, %arg6: memref<1x32xf32, #tpu.memory_space<vmem>>, %arg7: memref<2x32xf32, #tpu.memory_space<vmem>>) attributes {dimension_semantics = [#tpu.dimension_semantics<parallel>], iteration_bounds = array<i64: 1>, scalar_prefetch = 1 : i64, scratch_operands = 0 : i64, tpu.core_type = #tpu.core_type<tc>, window_params = [{transform_indices = @transform_0, window_bounds = array<i64: 2, 18, 18, 4>}, {pipeline_mode = #tpu.pipeline_mode<synchronous>, transform_indices = @transform_1, window_bounds = array<i64: 9, 4, 32>}, {pipeline_mode = #tpu.pipeline_mode<synchronous>, transform_indices = @transform_2, window_bounds = array<i64: 1, 32>}, {pipeline_mode = #tpu.pipeline_mode<synchronous>, transform_indices = @transform_3, window_bounds = array<i64: 32, 32>}, {pipeline_mode = #tpu.pipeline_mode<synchronous>, transform_indices = @transform_4, window_bounds = array<i64: 1, 32>}, {transform_indices = @transform_5, window_bounds = array<i64: 2, 32>}]} {
    %c0 = arith.constant 0 : index
    %c0_0 = arith.constant 0 : index
    %c0_1 = arith.constant 0 : index
    %c0_2 = arith.constant 0 : index
    %0 = vector.load %arg2[%c0, %c0_0, %c0_1, %c0_2] : memref<2x18x18x4xbf16, #tpu.memory_space<vmem>>, vector<2x18x18x4xbf16>
    %c0_3 = arith.constant 0 : index
    %c0_4 = arith.constant 0 : index
    %c0_5 = arith.constant 0 : index
    %1 = vector.load %arg3[%c0_3, %c0_4, %c0_5] : memref<9x4x32xbf16, #tpu.memory_space<vmem>>, vector<9x4x32xbf16>
    %cst = arith.constant 0.000000e+00 : f32
    %2 = vector.broadcast %cst : f32 to vector<512x32xf32>
    %3 = vector.extract_strided_slice %0 {offsets = [0, 0, 0, 0], sizes = [2, 16, 16, 4], strides = [1, 1, 1, 1]} : vector<2x18x18x4xbf16> to vector<2x16x16x4xbf16>
    %4 = vector.shape_cast %3 : vector<2x16x16x4xbf16> to vector<512x4xbf16>
    %5 = vector.extract_strided_slice %1 {offsets = [0, 0, 0], sizes = [1, 4, 32], strides = [1, 1, 1]} : vector<9x4x32xbf16> to vector<1x4x32xbf16>
    %6 = vector.shape_cast %5 : vector<1x4x32xbf16> to vector<4x32xbf16>
    %cst_6 = arith.constant dense<0.000000e+00> : vector<512x32xf32>
    %7 = tpu.matmul %4, %6, %cst_6 {dimension_numbers = #tpu.dot_dimension_numbers<[1], [0], [0], [1], [0, 0, 1, 1], [], []>} : vector<512x4xbf16>, vector<4x32xbf16>, vector<512x32xf32> -> vector<512x32xf32>
    %8 = arith.addf %2, %7 : vector<512x32xf32>
    %9 = vector.extract_strided_slice %0 {offsets = [0, 0, 1, 0], sizes = [2, 16, 16, 4], strides = [1, 1, 1, 1]} : vector<2x18x18x4xbf16> to vector<2x16x16x4xbf16>
    %10 = vector.shape_cast %9 : vector<2x16x16x4xbf16> to vector<512x4xbf16>
    %11 = vector.extract_strided_slice %1 {offsets = [1, 0, 0], sizes = [1, 4, 32], strides = [1, 1, 1]} : vector<9x4x32xbf16> to vector<1x4x32xbf16>
    %12 = vector.shape_cast %11 : vector<1x4x32xbf16> to vector<4x32xbf16>
    %cst_7 = arith.constant dense<0.000000e+00> : vector<512x32xf32>
    %13 = tpu.matmul %10, %12, %cst_7 {dimension_numbers = #tpu.dot_dimension_numbers<[1], [0], [0], [1], [0, 0, 1, 1], [], []>} : vector<512x4xbf16>, vector<4x32xbf16>, vector<512x32xf32> -> vector<512x32xf32>
    %14 = arith.addf %8, %13 : vector<512x32xf32>
    %15 = vector.extract_strided_slice %0 {offsets = [0, 0, 2, 0], sizes = [2, 16, 16, 4], strides = [1, 1, 1, 1]} : vector<2x18x18x4xbf16> to vector<2x16x16x4xbf16>
    %16 = vector.shape_cast %15 : vector<2x16x16x4xbf16> to vector<512x4xbf16>
    %17 = vector.extract_strided_slice %1 {offsets = [2, 0, 0], sizes = [1, 4, 32], strides = [1, 1, 1]} : vector<9x4x32xbf16> to vector<1x4x32xbf16>
    %18 = vector.shape_cast %17 : vector<1x4x32xbf16> to vector<4x32xbf16>
    %cst_8 = arith.constant dense<0.000000e+00> : vector<512x32xf32>
    %19 = tpu.matmul %16, %18, %cst_8 {dimension_numbers = #tpu.dot_dimension_numbers<[1], [0], [0], [1], [0, 0, 1, 1], [], []>} : vector<512x4xbf16>, vector<4x32xbf16>, vector<512x32xf32> -> vector<512x32xf32>
    %20 = arith.addf %14, %19 : vector<512x32xf32>
    %21 = vector.extract_strided_slice %0 {offsets = [0, 1, 0, 0], sizes = [2, 16, 16, 4], strides = [1, 1, 1, 1]} : vector<2x18x18x4xbf16> to vector<2x16x16x4xbf16>
    %22 = vector.shape_cast %21 : vector<2x16x16x4xbf16> to vector<512x4xbf16>
    %23 = vector.extract_strided_slice %1 {offsets = [3, 0, 0], sizes = [1, 4, 32], strides = [1, 1, 1]} : vector<9x4x32xbf16> to vector<1x4x32xbf16>
    %24 = vector.shape_cast %23 : vector<1x4x32xbf16> to vector<4x32xbf16>
    %cst_9 = arith.constant dense<0.000000e+00> : vector<512x32xf32>
    %25 = tpu.matmul %22, %24, %cst_9 {dimension_numbers = #tpu.dot_dimension_numbers<[1], [0], [0], [1], [0, 0, 1, 1], [], []>} : vector<512x4xbf16>, vector<4x32xbf16>, vector<512x32xf32> -> vector<512x32xf32>
    %26 = arith.addf %20, %25 : vector<512x32xf32>
    %27 = vector.extract_strided_slice %0 {offsets = [0, 1, 1, 0], sizes = [2, 16, 16, 4], strides = [1, 1, 1, 1]} : vector<2x18x18x4xbf16> to vector<2x16x16x4xbf16>
    %28 = vector.shape_cast %27 : vector<2x16x16x4xbf16> to vector<512x4xbf16>
    %29 = vector.extract_strided_slice %1 {offsets = [4, 0, 0], sizes = [1, 4, 32], strides = [1, 1, 1]} : vector<9x4x32xbf16> to vector<1x4x32xbf16>
    %30 = vector.shape_cast %29 : vector<1x4x32xbf16> to vector<4x32xbf16>
    %cst_10 = arith.constant dense<0.000000e+00> : vector<512x32xf32>
    %31 = tpu.matmul %28, %30, %cst_10 {dimension_numbers = #tpu.dot_dimension_numbers<[1], [0], [0], [1], [0, 0, 1, 1], [], []>} : vector<512x4xbf16>, vector<4x32xbf16>, vector<512x32xf32> -> vector<512x32xf32>
    %32 = arith.addf %26, %31 : vector<512x32xf32>
    %33 = vector.extract_strided_slice %0 {offsets = [0, 1, 2, 0], sizes = [2, 16, 16, 4], strides = [1, 1, 1, 1]} : vector<2x18x18x4xbf16> to vector<2x16x16x4xbf16>
    %34 = vector.shape_cast %33 : vector<2x16x16x4xbf16> to vector<512x4xbf16>
    %35 = vector.extract_strided_slice %1 {offsets = [5, 0, 0], sizes = [1, 4, 32], strides = [1, 1, 1]} : vector<9x4x32xbf16> to vector<1x4x32xbf16>
    %36 = vector.shape_cast %35 : vector<1x4x32xbf16> to vector<4x32xbf16>
    %cst_11 = arith.constant dense<0.000000e+00> : vector<512x32xf32>
    %37 = tpu.matmul %34, %36, %cst_11 {dimension_numbers = #tpu.dot_dimension_numbers<[1], [0], [0], [1], [0, 0, 1, 1], [], []>} : vector<512x4xbf16>, vector<4x32xbf16>, vector<512x32xf32> -> vector<512x32xf32>
    %38 = arith.addf %32, %37 : vector<512x32xf32>
    %39 = vector.extract_strided_slice %0 {offsets = [0, 2, 0, 0], sizes = [2, 16, 16, 4], strides = [1, 1, 1, 1]} : vector<2x18x18x4xbf16> to vector<2x16x16x4xbf16>
    %40 = vector.shape_cast %39 : vector<2x16x16x4xbf16> to vector<512x4xbf16>
    %41 = vector.extract_strided_slice %1 {offsets = [6, 0, 0], sizes = [1, 4, 32], strides = [1, 1, 1]} : vector<9x4x32xbf16> to vector<1x4x32xbf16>
    %42 = vector.shape_cast %41 : vector<1x4x32xbf16> to vector<4x32xbf16>
    %cst_12 = arith.constant dense<0.000000e+00> : vector<512x32xf32>
    %43 = tpu.matmul %40, %42, %cst_12 {dimension_numbers = #tpu.dot_dimension_numbers<[1], [0], [0], [1], [0, 0, 1, 1], [], []>} : vector<512x4xbf16>, vector<4x32xbf16>, vector<512x32xf32> -> vector<512x32xf32>
    %44 = arith.addf %38, %43 : vector<512x32xf32>
    %45 = vector.extract_strided_slice %0 {offsets = [0, 2, 1, 0], sizes = [2, 16, 16, 4], strides = [1, 1, 1, 1]} : vector<2x18x18x4xbf16> to vector<2x16x16x4xbf16>
    %46 = vector.shape_cast %45 : vector<2x16x16x4xbf16> to vector<512x4xbf16>
    %47 = vector.extract_strided_slice %1 {offsets = [7, 0, 0], sizes = [1, 4, 32], strides = [1, 1, 1]} : vector<9x4x32xbf16> to vector<1x4x32xbf16>
    %48 = vector.shape_cast %47 : vector<1x4x32xbf16> to vector<4x32xbf16>
    %cst_13 = arith.constant dense<0.000000e+00> : vector<512x32xf32>
    %49 = tpu.matmul %46, %48, %cst_13 {dimension_numbers = #tpu.dot_dimension_numbers<[1], [0], [0], [1], [0, 0, 1, 1], [], []>} : vector<512x4xbf16>, vector<4x32xbf16>, vector<512x32xf32> -> vector<512x32xf32>
    %50 = arith.addf %44, %49 : vector<512x32xf32>
    %51 = vector.extract_strided_slice %0 {offsets = [0, 2, 2, 0], sizes = [2, 16, 16, 4], strides = [1, 1, 1, 1]} : vector<2x18x18x4xbf16> to vector<2x16x16x4xbf16>
    %52 = vector.shape_cast %51 : vector<2x16x16x4xbf16> to vector<512x4xbf16>
    %53 = vector.extract_strided_slice %1 {offsets = [8, 0, 0], sizes = [1, 4, 32], strides = [1, 1, 1]} : vector<9x4x32xbf16> to vector<1x4x32xbf16>
    %54 = vector.shape_cast %53 : vector<1x4x32xbf16> to vector<4x32xbf16>
    %cst_14 = arith.constant dense<0.000000e+00> : vector<512x32xf32>
    %55 = tpu.matmul %52, %54, %cst_14 {dimension_numbers = #tpu.dot_dimension_numbers<[1], [0], [0], [1], [0, 0, 1, 1], [], []>} : vector<512x4xbf16>, vector<4x32xbf16>, vector<512x32xf32> -> vector<512x32xf32>
    %56 = arith.addf %50, %55 : vector<512x32xf32>
    %c0_15 = arith.constant 0 : index
    %c0_16 = arith.constant 0 : index
    %57 = vector.load %arg4[%c0_15, %c0_16] : memref<1x32xf32, #tpu.memory_space<vmem>>, vector<1x32xf32>
    %58 = vector.broadcast %57 : vector<1x32xf32> to vector<512x32xf32>
    %59 = arith.addf %56, %58 : vector<512x32xf32>
    %cst_17 = arith.constant 0.000000e+00 : f32
    %60 = vector.broadcast %cst_17 : f32 to vector<512x32xf32>
    %61 = arith.maximumf %59, %60 : vector<512x32xf32>
    %62 = vector.shape_cast %61 : vector<512x32xf32> to vector<2x256x32xf32>
    %cst_18 = arith.constant dense<0.000000e+00> : vector<2x32xf32>
    %63 = vector.multi_reduction <add>, %62, %cst_18 [1] : vector<2x256x32xf32> to vector<2x32xf32>
    %cst_19 = arith.constant 3.906250e-03 : f32
    %64 = vector.broadcast %cst_19 : f32 to vector<2x32xf32>
    %65 = arith.mulf %63, %64 : vector<2x32xf32>
    %66 = arith.truncf %65 : vector<2x32xf32> to vector<2x32xbf16>
    %c0_20 = arith.constant 0 : index
    %c0_21 = arith.constant 0 : index
    %67 = vector.load %arg5[%c0_20, %c0_21] : memref<32x32xbf16, #tpu.memory_space<vmem>>, vector<32x32xbf16>
    %cst_22 = arith.constant dense<0.000000e+00> : vector<2x32xf32>
    %68 = tpu.matmul %66, %67, %cst_22 {dimension_numbers = #tpu.dot_dimension_numbers<[1], [0], [0], [1], [0, 0, 1, 1], [], []>} : vector<2x32xbf16>, vector<32x32xbf16>, vector<2x32xf32> -> vector<2x32xf32>
    %c0_23 = arith.constant 0 : index
    %c0_24 = arith.constant 0 : index
    %69 = vector.load %arg6[%c0_23, %c0_24] : memref<1x32xf32, #tpu.memory_space<vmem>>, vector<1x32xf32>
    %70 = vector.broadcast %69 : vector<1x32xf32> to vector<2x32xf32>
    %71 = arith.addf %68, %70 : vector<2x32xf32>
    %cst_25 = arith.constant 0.000000e+00 : f32
    %72 = vector.broadcast %cst_25 : f32 to vector<2x32xf32>
    %73 = arith.maximumf %71, %72 : vector<2x32xf32>
    %74 = tpu.iota {dimensions = array<i32: 0>} : vector<2x32xi32>
    %c2_i32 = arith.constant 2 : i32
    %75 = arith.muli %arg0, %c2_i32 : i32
    %76 = vector.broadcast %75 : i32 to vector<2x32xi32>
    %77 = arith.addi %74, %76 : vector<2x32xi32>
    %78 = tpu.iota {dimensions = array<i32: 1>} : vector<2x32xi32>
    %c32_i32 = arith.constant 32 : i32
    %79 = vector.broadcast %c32_i32 : i32 to vector<2x32xi32>
    %80 = arith.muli %77, %79 : vector<2x32xi32>
    %81 = arith.addi %80, %78 : vector<2x32xi32>
    %c0_26 = arith.constant 0 : index
    %82 = memref.load %arg1[%c0_26] : memref<1xi32, #tpu.memory_space<smem>>
    %c-1640531527_i32 = arith.constant -1640531527 : i32
    %83 = arith.muli %82, %c-1640531527_i32 : i32
    %84 = vector.broadcast %83 : i32 to vector<2x32xi32>
    %85 = arith.addi %81, %84 : vector<2x32xi32>
    %c16_i32 = arith.constant 16 : i32
    %86 = vector.broadcast %c16_i32 : i32 to vector<2x32xi32>
    %87 = arith.shrui %85, %86 : vector<2x32xi32>
    %88 = arith.xori %85, %87 : vector<2x32xi32>
    %c2146121005_i32 = arith.constant 2146121005 : i32
    %89 = vector.broadcast %c2146121005_i32 : i32 to vector<2x32xi32>
    %90 = arith.muli %88, %89 : vector<2x32xi32>
    %c15_i32 = arith.constant 15 : i32
    %91 = vector.broadcast %c15_i32 : i32 to vector<2x32xi32>
    %92 = arith.shrui %90, %91 : vector<2x32xi32>
    %93 = arith.xori %90, %92 : vector<2x32xi32>
    %c-2073254261_i32 = arith.constant -2073254261 : i32
    %94 = vector.broadcast %c-2073254261_i32 : i32 to vector<2x32xi32>
    %95 = arith.muli %93, %94 : vector<2x32xi32>
    %c16_i32_27 = arith.constant 16 : i32
    %96 = vector.broadcast %c16_i32_27 : i32 to vector<2x32xi32>
    %97 = arith.shrui %95, %96 : vector<2x32xi32>
    %98 = arith.xori %95, %97 : vector<2x32xi32>
    %c31_i32 = arith.constant 31 : i32
    %99 = vector.broadcast %c31_i32 : i32 to vector<2x32xi32>
    %100 = arith.shrui %98, %99 : vector<2x32xi32>
    %c0_i32 = arith.constant 0 : i32
    %101 = vector.broadcast %c0_i32 : i32 to vector<2x32xi32>
    %102 = arith.cmpi eq, %100, %101 : vector<2x32xi32>
    %cst_28 = arith.constant 2.000000e+00 : f32
    %103 = vector.broadcast %cst_28 : f32 to vector<2x32xf32>
    %104 = arith.mulf %73, %103 : vector<2x32xf32>
    %cst_29 = arith.constant 0.000000e+00 : f32
    %105 = vector.broadcast %cst_29 : f32 to vector<2x32xf32>
    %106 = arith.select %102, %104, %105 : vector<2x32xi1>, vector<2x32xf32>
    %c0_30 = arith.constant 0 : index
    %c0_31 = arith.constant 0 : index
    %107 = vector.load %arg7[%c0_30, %c0_31] : memref<2x32xf32, #tpu.memory_space<vmem>>, vector<2x32xf32>
    tpu.vector_store %arg7[%c0_30, %c0_31], %106 {strides = array<i32>} : memref<2x32xf32, #tpu.memory_space<vmem>>, vector<2x32xf32>,
    return
  }
  func.func @transform_0(%arg0: i32, %arg1: memref<1xi32, #tpu.memory_space<smem>>) -> (i32, i32, i32, i32) {
    %c0_i32 = arith.constant 0 : i32
    %c0_i32_0 = arith.constant 0 : i32
    %c0_i32_1 = arith.constant 0 : i32
    %c0_i32_2 = arith.constant 0 : i32
    return %arg0, %c0_i32, %c0_i32_0, %c0_i32_1 : i32, i32, i32, i32
  }
  func.func @transform_1(%arg0: i32, %arg1: memref<1xi32, #tpu.memory_space<smem>>) -> (i32, i32, i32) {
    %c0_i32 = arith.constant 0 : i32
    %c0_i32_0 = arith.constant 0 : i32
    %c0_i32_1 = arith.constant 0 : i32
    %c0_i32_2 = arith.constant 0 : i32
    return %c0_i32, %c0_i32_0, %c0_i32_1 : i32, i32, i32
  }
  func.func @transform_2(%arg0: i32, %arg1: memref<1xi32, #tpu.memory_space<smem>>) -> (i32, i32) {
    %c0_i32 = arith.constant 0 : i32
    %c0_i32_0 = arith.constant 0 : i32
    %c0_i32_1 = arith.constant 0 : i32
    return %c0_i32, %c0_i32_0 : i32, i32
  }
  func.func @transform_3(%arg0: i32, %arg1: memref<1xi32, #tpu.memory_space<smem>>) -> (i32, i32) {
    %c0_i32 = arith.constant 0 : i32
    %c0_i32_0 = arith.constant 0 : i32
    %c0_i32_1 = arith.constant 0 : i32
    return %c0_i32, %c0_i32_0 : i32, i32
  }
  func.func @transform_4(%arg0: i32, %arg1: memref<1xi32, #tpu.memory_space<smem>>) -> (i32, i32) {
    %c0_i32 = arith.constant 0 : i32
    %c0_i32_0 = arith.constant 0 : i32
    %c0_i32_1 = arith.constant 0 : i32
    return %c0_i32, %c0_i32_0 : i32, i32
  }
  func.func @transform_5(%arg0: i32, %arg1: memref<1xi32, #tpu.memory_space<smem>>) -> (i32, i32) {
    %c0_i32 = arith.constant 0 : i32
    %c0_i32_0 = arith.constant 0 : i32
    return %arg0, %c0_i32 : i32, i32
  }
}

</mosaic_0001>

<llo_original>
// kernel: tpu_custom_call.1
$region0: #{tpu_custom_call.1}
  #allocation0 [shape = 'u32[]', space=smem, size = 0x4, offset = 0x4, fixed_abs, tag = 'smem constant byte address 0x4 - core index']
  #allocation1 [shape = 'u32[144,128]{1,0:T(1,128)}', space=vmem, size = 0x12000, scoped, tag = 'internal scratch']
  #allocation2 [shape = 's32[1]{0}', space=sflag, size = 0x4, scoped, tag = 'scoped memory for tpu_custom_call.1']
  #allocation3 [shape = 's32[1]{0:T(128)S(6)}', space=smem, size = 0x200, scoped, tag = 'prefetched SMEM operand 0']
  %s0 = inlined_call_operand.<no memory space> [shape: s32[1], index: 0, kind: input, shape index: {}]
  %s1 = inlined_call_operand.vmem [shape: bf16[2,18,18,4], index: 1, kind: input, shape index: {}]
  %s2 = inlined_call_operand.vmem [shape: bf16[9,4,32], index: 2, kind: input, shape index: {}]
  %s3 = inlined_call_operand.vmem [shape: f32[1,32], index: 3, kind: input, shape index: {}]
  %s4 = inlined_call_operand.vmem [shape: bf16[32,32], index: 4, kind: input, shape index: {}]
  %s5 = inlined_call_operand.vmem [shape: f32[1,32], index: 5, kind: input, shape index: {}]
  %s6 = inlined_call_operand.hbm [shape: f32[2,32], index: 6, kind: output, shape index: {}]
  %s7 = sld [smem:[#allocation0]]
  $region30: #{tpu_custom_call.1} parent=0
    _
  %s9 = ssub.s32 1, %s7
  %s10 = scalar_select 0, %s9, %s7
  %11 = sst [smem:[#allocation3]] %s0
  $region1: #{tpu_custom_call.1} parent=0
    #allocation4 [shape = 'u8[1024]{0}', space=vmem, size = 0x400, scoped, tag = 'output window, operand 0, single buffered']
    #allocation5 [shape = 's32[1]{0}', space=sflag, size = 0x4, scoped, tag = 'scoped memory for tpu_custom_call.1']
    %12 = vsyncpa [#allocation5], 0
    // Predicated region
    $region2: #{tpu_custom_call.1} parent=1 // pred_check
      _
    $region3: #{tpu_custom_call.1} parent=1 // pred_check_branch
      %14 = sbr.rel (0) target = $region5
    $region4: #{tpu_custom_call.1} parent=1 // pred_region
      _
    $region5: #{tpu_custom_call.1} parent=1 // pred_fallthru
      _
    // Predicated region
    $region6: #{tpu_custom_call.1} parent=1 // pred_check
      _
    $region7: #{tpu_custom_call.1} parent=1 // pred_check_branch
      %16 = sbr.rel (0) target = $region9
    $region8: #{tpu_custom_call.1} parent=1 // pred_region
      _
    $region9: #{tpu_custom_call.1} parent=1 // pred_fallthru
      _
    // Predicated region
    $region10: #{tpu_custom_call.1} parent=1 // pred_check
      _
    $region11: #{tpu_custom_call.1} parent=1 // pred_check_branch
      %18 = sbr.rel (0) target = $region13
    $region12: #{tpu_custom_call.1} parent=1 // pred_region
      _
    $region13: #{tpu_custom_call.1} parent=1 // pred_fallthru
      _
    // Predicated region
    $region14: #{tpu_custom_call.1} parent=1 // pred_check
      _
    $region15: #{tpu_custom_call.1} parent=1 // pred_check_branch
      %20 = sbr.rel (0) target = $region17
    $region16: #{tpu_custom_call.1} parent=1 // pred_region
      _
    $region17: #{tpu_custom_call.1} parent=1 // pred_fallthru
      _
    // Predicated region
    $region18: #{tpu_custom_call.1} parent=1 // pred_check
      _
    $region19: #{tpu_custom_call.1} parent=1 // pred_check_branch
      %22 = sbr.rel (0) target = $region21
    $region20: #{tpu_custom_call.1} parent=1 // pred_region
      _
    $region21: #{tpu_custom_call.1} parent=1 // pred_fallthru
      _
    %v24 = vld [vmem:[%s1] sm:$0xf]
    %v25 = vld [vmem:[%s1 + $0x4] sm:$0xf]
    %v26 = vld [vmem:[%s1 + $0x8] sm:$0x1]
    %v27 = vld [vmem:[%s1 + $0xc] sm:$0xf]
    %v28 = vld [vmem:[%s1 + $0x10] sm:$0xf]
    %v29 = vld [vmem:[%s1 + $0x14] sm:$0x1]
    %v30 = vld [vmem:[%s1 + $0x18] sm:$0xf]
    %v31 = vld [vmem:[%s1 + $0x1c] sm:$0xf]
    %v32 = vld [vmem:[%s1 + $0x20] sm:$0x1]
    %v33 = vld [vmem:[%s1 + $0x24] sm:$0xf]
    %v34 = vld [vmem:[%s1 + $0x28] sm:$0xf]
    %v35 = vld [vmem:[%s1 + $0x2c] sm:$0x1]
    %v36 = vld [vmem:[%s1 + $0x30] sm:$0xf]
    %v37 = vld [vmem:[%s1 + $0x34] sm:$0xf]
    %v38 = vld [vmem:[%s1 + $0x38] sm:$0x1]
    %v39 = vld [vmem:[%s1 + $0x3c] sm:$0xf]
    %v40 = vld [vmem:[%s1 + $0x40] sm:$0xf]
    %v41 = vld [vmem:[%s1 + $0x44] sm:$0x1]
    %v42 = vld [vmem:[%s1 + $0x48] sm:$0xf]
    %v43 = vld [vmem:[%s1 + $0x4c] sm:$0xf]
    %v44 = vld [vmem:[%s1 + $0x50] sm:$0x1]
    %v45 = vld [vmem:[%s1 + $0x54] sm:$0xf]
    %v46 = vld [vmem:[%s1 + $0x58] sm:$0xf]
    %v47 = vld [vmem:[%s1 + $0x5c] sm:$0x1]
    %v48 = vld [vmem:[%s1 + $0x60] sm:$0xf]
    %v49 = vld [vmem:[%s1 + $0x64] sm:$0xf]
    %v50 = vld [vmem:[%s1 + $0x68] sm:$0x1]
    %v51 = vld [vmem:[%s1 + $0x6c] sm:$0xf]
    %v52 = vld [vmem:[%s1 + $0x70] sm:$0xf]
    %v53 = vld [vmem:[%s1 + $0x74] sm:$0x1]
    %v54 = vld [vmem:[%s1 + $0x78] sm:$0xf]
    %v55 = vld [vmem:[%s1 + $0x7c] sm:$0xf]
    %v56 = vld [vmem:[%s1 + $0x80] sm:$0x1]
    %v57 = vld [vmem:[%s1 + $0x84] sm:$0xf]
    %v58 = vld [vmem:[%s1 + $0x88] sm:$0xf]
    %v59 = vld [vmem:[%s1 + $0x8c] sm:$0x1]
    %v60 = vld [vmem:[%s1 + $0x90] sm:$0xf]
    %v61 = vld [vmem:[%s1 + $0x94] sm:$0xf]
    %v62 = vld [vmem:[%s1 + $0x98] sm:$0x1]
    %v63 = vld [vmem:[%s1 + $0x9c] sm:$0xf]
    %v64 = vld [vmem:[%s1 + $0xa0] sm:$0xf]
    %v65 = vld [vmem:[%s1 + $0xa4] sm:$0x1]
    %v66 = vld [vmem:[%s1 + $0xa8] sm:$0xf]
    %v67 = vld [vmem:[%s1 + $0xac] sm:$0xf]
    %v68 = vld [vmem:[%s1 + $0xb0] sm:$0x1]
    %v69 = vld [vmem:[%s1 + $0xb4] sm:$0xf]
    %v70 = vld [vmem:[%s1 + $0xb8] sm:$0xf]
    %v71 = vld [vmem:[%s1 + $0xbc] sm:$0x1]
    %v72 = vld [vmem:[%s1 + $0xc0] sm:$0xf]
    %v73 = vld [vmem:[%s1 + $0xc4] sm:$0xf]
    %v74 = vld [vmem:[%s1 + $0xc8] sm:$0x1]
    %v75 = vld [vmem:[%s1 + $0xcc] sm:$0xf]
    %v76 = vld [vmem:[%s1 + $0xd0] sm:$0xf]
    %v77 = vld [vmem:[%s1 + $0xd4] sm:$0x1]
    %v78 = vld [vmem:[%s1 + $0xd8] sm:$0xf]
    %v79 = vld [vmem:[%s1 + $0xdc] sm:$0xf]
    %v80 = vld [vmem:[%s1 + $0xe0] sm:$0x1]
    %v81 = vld [vmem:[%s1 + $0xe4] sm:$0xf]
    %v82 = vld [vmem:[%s1 + $0xe8] sm:$0xf]
    %v83 = vld [vmem:[%s1 + $0xec] sm:$0x1]
    %v84 = vld [vmem:[%s1 + $0xf0] sm:$0xf]
    %v85 = vld [vmem:[%s1 + $0xf4] sm:$0xf]
    %v86 = vld [vmem:[%s1 + $0xf8] sm:$0x1]
    %v87 = vld [vmem:[%s1 + $0xfc] sm:$0xf]
    %v88 = vld [vmem:[%s1 + $0x100] sm:$0xf]
    %v89 = vld [vmem:[%s1 + $0x104] sm:$0x1]
    %v90 = vld [vmem:[%s1 + $0x108] sm:$0xf]
    %v91 = vld [vmem:[%s1 + $0x10c] sm:$0xf]
    %v92 = vld [vmem:[%s1 + $0x110] sm:$0x1]
    %v93 = vld [vmem:[%s1 + $0x114] sm:$0xf]
    %v94 = vld [vmem:[%s1 + $0x118] sm:$0xf]
    %v95 = vld [vmem:[%s1 + $0x11c] sm:$0x1]
    %v96 = vld [vmem:[%s1 + $0x120] sm:$0xf]
    %v97 = vld [vmem:[%s1 + $0x124] sm:$0xf]
    %v98 = vld [vmem:[%s1 + $0x128] sm:$0x1]
    %v99 = vld [vmem:[%s1 + $0x12c] sm:$0xf]
    %v100 = vld [vmem:[%s1 + $0x130] sm:$0xf]
    %v101 = vld [vmem:[%s1 + $0x134] sm:$0x1]
    %v102 = vld [vmem:[%s1 + $0x138] sm:$0xf]
    %v103 = vld [vmem:[%s1 + $0x13c] sm:$0xf]
    %v104 = vld [vmem:[%s1 + $0x140] sm:$0x1]
    %v105 = vld [vmem:[%s1 + $0x144] sm:$0xf]
    %v106 = vld [vmem:[%s1 + $0x148] sm:$0xf]
    %v107 = vld [vmem:[%s1 + $0x14c] sm:$0x1]
    %v108 = vld [vmem:[%s1 + $0x150] sm:$0xf]
    %v109 = vld [vmem:[%s1 + $0x154] sm:$0xf]
    %v110 = vld [vmem:[%s1 + $0x158] sm:$0x1]
    %v111 = vld [vmem:[%s1 + $0x15c] sm:$0xf]
    %v112 = vld [vmem:[%s1 + $0x160] sm:$0xf]
    %v113 = vld [vmem:[%s1 + $0x164] sm:$0x1]
    %v114 = vld [vmem:[%s1 + $0x168] sm:$0xf]
    %v115 = vld [vmem:[%s1 + $0x16c] sm:$0xf]
    %v116 = vld [vmem:[%s1 + $0x170] sm:$0x1]
    %v117 = vld [vmem:[%s1 + $0x174] sm:$0xf]
    %v118 = vld [vmem:[%s1 + $0x178] sm:$0xf]
    %v119 = vld [vmem:[%s1 + $0x17c] sm:$0x1]
    %v120 = vld [vmem:[%s1 + $0x180] sm:$0xf]
    %v121 = vld [vmem:[%s1 + $0x184] sm:$0xf]
    %v122 = vld [vmem:[%s1 + $0x188] sm:$0x1]
    %v123 = vld [vmem:[%s1 + $0x18c] sm:$0xf]
    %v124 = vld [vmem:[%s1 + $0x190] sm:$0xf]
    %v125 = vld [vmem:[%s1 + $0x194] sm:$0x1]
    %v126 = vld [vmem:[%s1 + $0x198] sm:$0xf]
    %v127 = vld [vmem:[%s1 + $0x19c] sm:$0xf]
    %v128 = vld [vmem:[%s1 + $0x1a0] sm:$0x1]
    %v129 = vld [vmem:[%s1 + $0x1a4] sm:$0xf]
    %v130 = vld [vmem:[%s1 + $0x1a8] sm:$0xf]
    %v131 = vld [vmem:[%s1 + $0x1ac] sm:$0x1]
    %v132 = vld [vmem:[%s2] sm:$0x3]
    %v133 = vld [vmem:[%s2 + $0x2] sm:$0x3]
    %v134 = vld [vmem:[%s2 + $0x4] sm:$0x3]
    %v135 = vld [vmem:[%s2 + $0x6] sm:$0x3]
    %v136 = vld [vmem:[%s2 + $0x8] sm:$0x3]
    %v137 = vld [vmem:[%s2 + $0xa] sm:$0x3]
    %v138 = vld [vmem:[%s2 + $0xc] sm:$0x3]
    %v139 = vld [vmem:[%s2 + $0xe] sm:$0x3]
    %v140 = vld [vmem:[%s2 + $0x10] sm:$0x3]
    %vm141 = vsmask.f32 3328
    %vm142 = vsmask.f32 7440
    %vm143 = vmor %vm141, %vm142
    %v145 = vshrl.u32 %v24, 16
    %v147 = vrot.slane %v145, 4
    %v148 = vshll.u32 %v24, 16
    %v150 = vrot.slane %v148, 5
    %v151 = vor.u32 %v147, %v150
    %v152 = vrot.slane %v151, 4
    %v154 = vshll.u32 %v25, 16
    %v156 = vrot.slane %v154, 5
    %v157 = vsel %vm143, %v152, %v156
    %v158 = vshrl.u32 %v25, 16
    %v160 = vrot.slane %v158, 4
    %v161 = vor.u32 %v160, %v156
    %v162 = vrot.slane %v161, 4
    %v164 = vshll.u32 %v26, 16
    %v166 = vrot.slane %v164, 5
    %v167 = vsel %vm143, %v162, %v166
    %v169 = vshrl.u32 %v27, 16
    %v171 = vrot.slane %v169, 4
    %v172 = vshll.u32 %v27, 16
    %v174 = vrot.slane %v172, 5
    %v175 = vor.u32 %v171, %v174
    %v176 = vrot.slane %v175, 4
    %v178 = vshll.u32 %v28, 16
    %v180 = vrot.slane %v178, 5
    %v181 = vsel %vm143, %v176, %v180
    %v182 = vshrl.u32 %v28, 16
    %v184 = vrot.slane %v182, 4
    %v185 = vor.u32 %v184, %v180
    %v186 = vrot.slane %v185, 4
    %v188 = vshll.u32 %v29, 16
    %v190 = vrot.slane %v188, 5
    %v191 = vsel %vm143, %v186, %v190
    %v193 = vshrl.u32 %v30, 16
    %v195 = vrot.slane %v193, 4
    %v196 = vshll.u32 %v30, 16
    %v198 = vrot.slane %v196, 5
    %v199 = vor.u32 %v195, %v198
    %v200 = vrot.slane %v199, 4
    %v202 = vshll.u32 %v31, 16
    %v204 = vrot.slane %v202, 5
    %v205 = vsel %vm143, %v200, %v204
    %v206 = vshrl.u32 %v31, 16
    %v208 = vrot.slane %v206, 4
    %v209 = vor.u32 %v208, %v204
    %v210 = vrot.slane %v209, 4
    %v212 = vshll.u32 %v32, 16
    %v214 = vrot.slane %v212, 5
    %v215 = vsel %vm143, %v210, %v214
    %v217 = vshrl.u32 %v33, 16
    %v219 = vrot.slane %v217, 4
    %v220 = vshll.u32 %v33, 16
    %v222 = vrot.slane %v220, 5
    %v223 = vor.u32 %v219, %v222
    %v224 = vrot.slane %v223, 4
    %v226 = vshll.u32 %v34, 16
    %v228 = vrot.slane %v226, 5
    %v229 = vsel %vm143, %v224, %v228
    %v230 = vshrl.u32 %v34, 16
    %v232 = vrot.slane %v230, 4
    %v233 = vor.u32 %v232, %v228
    %v234 = vrot.slane %v233, 4
    %v236 = vshll.u32 %v35, 16
    %v238 = vrot.slane %v236, 5
    %v239 = vsel %vm143, %v234, %v238
    %v241 = vshrl.u32 %v36, 16
    %v243 = vrot.slane %v241, 4
    %v244 = vshll.u32 %v36, 16
    %v246 = vrot.slane %v244, 5
    %v247 = vor.u32 %v243, %v246
    %v248 = vrot.slane %v247, 4
    %v250 = vshll.u32 %v37, 16
    %v252 = vrot.slane %v250, 5
    %v253 = vsel %vm143, %v248, %v252
    %v254 = vshrl.u32 %v37, 16
    %v256 = vrot.slane %v254, 4
    %v257 = vor.u32 %v256, %v252
    %v258 = vrot.slane %v257, 4
    %v260 = vshll.u32 %v38, 16
    %v262 = vrot.slane %v260, 5
    %v263 = vsel %vm143, %v258, %v262
    %v265 = vshrl.u32 %v39, 16
    %v267 = vrot.slane %v265, 4
    %v268 = vshll.u32 %v39, 16
    %v270 = vrot.slane %v268, 5
    %v271 = vor.u32 %v267, %v270
    %v272 = vrot.slane %v271, 4
    %v274 = vshll.u32 %v40, 16
    %v276 = vrot.slane %v274, 5
    %v277 = vsel %vm143, %v272, %v276
    %v278 = vshrl.u32 %v40, 16
    %v280 = vrot.slane %v278, 4
    %v281 = vor.u32 %v280, %v276
    %v282 = vrot.slane %v281, 4
    %v284 = vshll.u32 %v41, 16
    %v286 = vrot.slane %v284, 5
    %v287 = vsel %vm143, %v282, %v286
    %v289 = vshrl.u32 %v42, 16
    %v291 = vrot.slane %v289, 4
    %v292 = vshll.u32 %v42, 16
    %v294 = vrot.slane %v292, 5
    %v295 = vor.u32 %v291, %v294
    %v296 = vrot.slane %v295, 4
    %v298 = vshll.u32 %v43, 16
    %v300 = vrot.slane %v298, 5
    %v301 = vsel %vm143, %v296, %v300
    %v302 = vshrl.u32 %v43, 16
    %v304 = vrot.slane %v302, 4
    %v305 = vor.u32 %v304, %v300
    %v306 = vrot.slane %v305, 4
    %v308 = vshll.u32 %v44, 16
    %v310 = vrot.slane %v308, 5
    %v311 = vsel %vm143, %v306, %v310
    %v313 = vshrl.u32 %v45, 16
    %v315 = vrot.slane %v313, 4
    %v316 = vshll.u32 %v45, 16
    %v318 = vrot.slane %v316, 5
    %v319 = vor.u32 %v315, %v318
    %v320 = vrot.slane %v319, 4
    %v322 = vshll.u32 %v46, 16
    %v324 = vrot.slane %v322, 5
    %v325 = vsel %vm143, %v320, %v324
    %v326 = vshrl.u32 %v46, 16
    %v328 = vrot.slane %v326, 4
    %v329 = vor.u32 %v328, %v324
    %v330 = vrot.slane %v329, 4
    %v332 = vshll.u32 %v47, 16
    %v334 = vrot.slane %v332, 5
    %v335 = vsel %vm143, %v330, %v334
    %v337 = vshrl.u32 %v48, 16
    %v339 = vrot.slane %v337, 4
    %v340 = vshll.u32 %v48, 16
    %v342 = vrot.slane %v340, 5
    %v343 = vor.u32 %v339, %v342
    %v344 = vrot.slane %v343, 4
    %v346 = vshll.u32 %v49, 16
    %v348 = vrot.slane %v346, 5
    %v349 = vsel %vm143, %v344, %v348
    %v350 = vshrl.u32 %v49, 16
    %v352 = vrot.slane %v350, 4
    %v353 = vor.u32 %v352, %v348
    %v354 = vrot.slane %v353, 4
    %v356 = vshll.u32 %v50, 16
    %v358 = vrot.slane %v356, 5
    %v359 = vsel %vm143, %v354, %v358
    %v361 = vshrl.u32 %v51, 16
    %v363 = vrot.slane %v361, 4
    %v364 = vshll.u32 %v51, 16
    %v366 = vrot.slane %v364, 5
    %v367 = vor.u32 %v363, %v366
    %v368 = vrot.slane %v367, 4
    %v370 = vshll.u32 %v52, 16
    %v372 = vrot.slane %v370, 5
    %v373 = vsel %vm143, %v368, %v372
    %v374 = vshrl.u32 %v52, 16
    %v376 = vrot.slane %v374, 4
    %v377 = vor.u32 %v376, %v372
    %v378 = vrot.slane %v377, 4
    %v380 = vshll.u32 %v53, 16
    %v382 = vrot.slane %v380, 5
    %v383 = vsel %vm143, %v378, %v382
    %v385 = vshrl.u32 %v54, 16
    %v387 = vrot.slane %v385, 4
    %v388 = vshll.u32 %v54, 16
    %v390 = vrot.slane %v388, 5
    %v391 = vor.u32 %v387, %v390
    %v392 = vrot.slane %v391, 4
    %v394 = vshll.u32 %v55, 16
    %v396 = vrot.slane %v394, 5
    %v397 = vsel %vm143, %v392, %v396
    %v398 = vshrl.u32 %v55, 16
    %v400 = vrot.slane %v398, 4
    %v401 = vor.u32 %v400, %v396
    %v402 = vrot.slane %v401, 4
    %v404 = vshll.u32 %v56, 16
    %v406 = vrot.slane %v404, 5
    %v407 = vsel %vm143, %v402, %v406
    %v409 = vshrl.u32 %v57, 16
    %v411 = vrot.slane %v409, 4
    %v412 = vshll.u32 %v57, 16
    %v414 = vrot.slane %v412, 5
    %v415 = vor.u32 %v411, %v414
    %v416 = vrot.slane %v415, 4
    %v418 = vshll.u32 %v58, 16
    %v420 = vrot.slane %v418, 5
    %v421 = vsel %vm143, %v416, %v420
    %v422 = vshrl.u32 %v58, 16
    %v424 = vrot.slane %v422, 4
    %v425 = vor.u32 %v424, %v420
    %v426 = vrot.slane %v425, 4
    %v428 = vshll.u32 %v59, 16
    %v430 = vrot.slane %v428, 5
    %v431 = vsel %vm143, %v426, %v430
    %v433 = vshrl.u32 %v60, 16
    %v435 = vrot.slane %v433, 4
    %v436 = vshll.u32 %v60, 16
    %v438 = vrot.slane %v436, 5
    %v439 = vor.u32 %v435, %v438
    %v440 = vrot.slane %v439, 4
    %v442 = vshll.u32 %v61, 16
    %v444 = vrot.slane %v442, 5
    %v445 = vsel %vm143, %v440, %v444
    %v446 = vshrl.u32 %v61, 16
    %v448 = vrot.slane %v446, 4
    %v449 = vor.u32 %v448, %v444
    %v450 = vrot.slane %v449, 4
    %v452 = vshll.u32 %v62, 16
    %v454 = vrot.slane %v452, 5
    %v455 = vsel %vm143, %v450, %v454
    %v457 = vshrl.u32 %v63, 16
    %v459 = vrot.slane %v457, 4
    %v460 = vshll.u32 %v63, 16
    %v462 = vrot.slane %v460, 5
    %v463 = vor.u32 %v459, %v462
    %v464 = vrot.slane %v463, 4
    %v466 = vshll.u32 %v64, 16
    %v468 = vrot.slane %v466, 5
    %v469 = vsel %vm143, %v464, %v468
    %v470 = vshrl.u32 %v64, 16
    %v472 = vrot.slane %v470, 4
    %v473 = vor.u32 %v472, %v468
    %v474 = vrot.slane %v473, 4
    %v476 = vshll.u32 %v65, 16
    %v478 = vrot.slane %v476, 5
    %v479 = vsel %vm143, %v474, %v478
    %v481 = vshrl.u32 %v66, 16
    %v483 = vrot.slane %v481, 4
    %v484 = vshll.u32 %v66, 16
    %v486 = vrot.slane %v484, 5
    %v487 = vor.u32 %v483, %v486
    %v488 = vrot.slane %v487, 4
    %v490 = vshll.u32 %v67, 16
    %v492 = vrot.slane %v490, 5
    %v493 = vsel %vm143, %v488, %v492
    %v494 = vshrl.u32 %v67, 16
    %v496 = vrot.slane %v494, 4
    %v497 = vor.u32 %v496, %v492
    %v498 = vrot.slane %v497, 4
    %v500 = vshll.u32 %v68, 16
    %v502 = vrot.slane %v500, 5
    %v503 = vsel %vm143, %v498, %v502
    %v505 = vshrl.u32 %v69, 16
    %v507 = vrot.slane %v505, 4
    %v508 = vshll.u32 %v69, 16
    %v510 = vrot.slane %v508, 5
    %v511 = vor.u32 %v507, %v510
    %v512 = vrot.slane %v511, 4
    %v514 = vshll.u32 %v70, 16
    %v516 = vrot.slane %v514, 5
    %v517 = vsel %vm143, %v512, %v516
    %v518 = vshrl.u32 %v70, 16
    %v520 = vrot.slane %v518, 4
    %v521 = vor.u32 %v520, %v516
    %v522 = vrot.slane %v521, 4
    %v524 = vshll.u32 %v71, 16
    %v526 = vrot.slane %v524, 5
    %v527 = vsel %vm143, %v522, %v526
    %v529 = vshrl.u32 %v78, 16
    %v531 = vrot.slane %v529, 4
    %v532 = vshll.u32 %v78, 16
    %v534 = vrot.slane %v532, 5
    %v535 = vor.u32 %v531, %v534
    %v536 = vrot.slane %v535, 4
    %v538 = vshll.u32 %v79, 16
    %v540 = vrot.slane %v538, 5
    %v541 = vsel %vm143, %v536, %v540
    %v542 = vshrl.u32 %v79, 16
    %v544 = vrot.slane %v542, 4
    %v545 = vor.u32 %v544, %v540
    %v546 = vrot.slane %v545, 4
    %v548 = vshll.u32 %v80, 16
    %v550 = vrot.slane %v548, 5
    %v551 = vsel %vm143, %v546, %v550
    %v553 = vshrl.u32 %v81, 16
    %v555 = vrot.slane %v553, 4
    %v556 = vshll.u32 %v81, 16
    %v558 = vrot.slane %v556, 5
    %v559 = vor.u32 %v555, %v558
    %v560 = vrot.slane %v559, 4
    %v562 = vshll.u32 %v82, 16
    %v564 = vrot.slane %v562, 5
    %v565 = vsel %vm143, %v560, %v564
    %v566 = vshrl.u32 %v82, 16
    %v568 = vrot.slane %v566, 4
    %v569 = vor.u32 %v568, %v564
    %v570 = vrot.slane %v569, 4
    %v572 = vshll.u32 %v83, 16
    %v574 = vrot.slane %v572, 5
    %v575 = vsel %vm143, %v570, %v574
    %v577 = vshrl.u32 %v84, 16
    %v579 = vrot.slane %v577, 4
    %v580 = vshll.u32 %v84, 16
    %v582 = vrot.slane %v580, 5
    %v583 = vor.u32 %v579, %v582
    %v584 = vrot.slane %v583, 4
    %v586 = vshll.u32 %v85, 16
    %v588 = vrot.slane %v586, 5
    %v589 = vsel %vm143, %v584, %v588
    %v590 = vshrl.u32 %v85, 16
    %v592 = vrot.slane %v590, 4
    %v593 = vor.u32 %v592, %v588
    %v594 = vrot.slane %v593, 4
    %v596 = vshll.u32 %v86, 16
    %v598 = vrot.slane %v596, 5
    %v599 = vsel %vm143, %v594, %v598
    %v601 = vshrl.u32 %v87, 16
    %v603 = vrot.slane %v601, 4
    %v604 = vshll.u32 %v87, 16
    %v606 = vrot.slane %v604, 5
    %v607 = vor.u32 %v603, %v606
    %v608 = vrot.slane %v607, 4
    %v610 = vshll.u32 %v88, 16
    %v612 = vrot.slane %v610, 5
    %v613 = vsel %vm143, %v608, %v612
    %v614 = vshrl.u32 %v88, 16
    %v616 = vrot.slane %v614, 4
    %v617 = vor.u32 %v616, %v612
    %v618 = vrot.slane %v617, 4
    %v620 = vshll.u32 %v89, 16
    %v622 = vrot.slane %v620, 5
    %v623 = vsel %vm143, %v618, %v622
    %v625 = vshrl.u32 %v90, 16
    %v627 = vrot.slane %v625, 4
    %v628 = vshll.u32 %v90, 16
    %v630 = vrot.slane %v628, 5
    %v631 = vor.u32 %v627, %v630
    %v632 = vrot.slane %v631, 4
    %v634 = vshll.u32 %v91, 16
    %v636 = vrot.slane %v634, 5
    %v637 = vsel %vm143, %v632, %v636
    %v638 = vshrl.u32 %v91, 16
    %v640 = vrot.slane %v638, 4
    %v641 = vor.u32 %v640, %v636
    %v642 = vrot.slane %v641, 4
    %v644 = vshll.u32 %v92, 16
    %v646 = vrot.slane %v644, 5
    %v647 = vsel %vm143, %v642, %v646
    %v649 = vshrl.u32 %v93, 16
    %v651 = vrot.slane %v649, 4
    %v652 = vshll.u32 %v93, 16
    %v654 = vrot.slane %v652, 5
    %v655 = vor.u32 %v651, %v654
    %v656 = vrot.slane %v655, 4
    %v658 = vshll.u32 %v94, 16
    %v660 = vrot.slane %v658, 5
    %v661 = vsel %vm143, %v656, %v660
    %v662 = vshrl.u32 %v94, 16
    %v664 = vrot.slane %v662, 4
    %v665 = vor.u32 %v664, %v660
    %v666 = vrot.slane %v665, 4
    %v668 = vshll.u32 %v95, 16
    %v670 = vrot.slane %v668, 5
    %v671 = vsel %vm143, %v666, %v670
    %v673 = vshrl.u32 %v96, 16
    %v675 = vrot.slane %v673, 4
    %v676 = vshll.u32 %v96, 16
    %v678 = vrot.slane %v676, 5
    %v679 = vor.u32 %v675, %v678
    %v680 = vrot.slane %v679, 4
    %v682 = vshll.u32 %v97, 16
    %v684 = vrot.slane %v682, 5
    %v685 = vsel %vm143, %v680, %v684
    %v686 = vshrl.u32 %v97, 16
    %v688 = vrot.slane %v686, 4
    %v689 = vor.u32 %v688, %v684
    %v690 = vrot.slane %v689, 4
    %v692 = vshll.u32 %v98, 16
    %v694 = vrot.slane %v692, 5
    %v695 = vsel %vm143, %v690, %v694
    %v697 = vshrl.u32 %v99, 16
    %v699 = vrot.slane %v697, 4
    %v700 = vshll.u32 %v99, 16
    %v702 = vrot.slane %v700, 5
    %v703 = vor.u32 %v699, %v702
    %v704 = vrot.slane %v703, 4
    %v706 = vshll.u32 %v100, 16
    %v708 = vrot.slane %v706, 5
    %v709 = vsel %vm143, %v704, %v708
    %v710 = vshrl.u32 %v100, 16
    %v712 = vrot.slane %v710, 4
    %v713 = vor.u32 %v712, %v708
    %v714 = vrot.slane %v713, 4
    %v716 = vshll.u32 %v101, 16
    %v718 = vrot.slane %v716, 5
    %v719 = vsel %vm143, %v714, %v718
    %v721 = vshrl.u32 %v102, 16
    %v723 = vrot.slane %v721, 4
    %v724 = vshll.u32 %v102, 16
    %v726 = vrot.slane %v724, 5
    %v727 = vor.u32 %v723, %v726
    %v728 = vrot.slane %v727, 4
    %v730 = vshll.u32 %v103, 16
    %v732 = vrot.slane %v730, 5
    %v733 = vsel %vm143, %v728, %v732
    %v734 = vshrl.u32 %v103, 16
    %v736 = vrot.slane %v734, 4
    %v737 = vor.u32 %v736, %v732
    %v738 = vrot.slane %v737, 4
    %v740 = vshll.u32 %v104, 16
    %v742 = vrot.slane %v740, 5
    %v743 = vsel %vm143, %v738, %v742
    %v745 = vshrl.u32 %v105, 16
    %v747 = vrot.slane %v745, 4
    %v748 = vshll.u32 %v105, 16
    %v750 = vrot.slane %v748, 5
    %v751 = vor.u32 %v747, %v750
    %v752 = vrot.slane %v751, 4
    %v754 = vshll.u32 %v106, 16
    %v756 = vrot.slane %v754, 5
    %v757 = vsel %vm143, %v752, %v756
    %v758 = vshrl.u32 %v106, 16
    %v760 = vrot.slane %v758, 4
    %v761 = vor.u32 %v760, %v756
    %v762 = vrot.slane %v761, 4
    %v764 = vshll.u32 %v107, 16
    %v766 = vrot.slane %v764, 5
    %v767 = vsel %vm143, %v762, %v766
    %v769 = vshrl.u32 %v108, 16
    %v771 = vrot.slane %v769, 4
    %v772 = vshll.u32 %v108, 16
    %v774 = vrot.slane %v772, 5
    %v775 = vor.u32 %v771, %v774
    %v776 = vrot.slane %v775, 4
    %v778 = vshll.u32 %v109, 16
    %v780 = vrot.slane %v778, 5
    %v781 = vsel %vm143, %v776, %v780
    %v782 = vshrl.u32 %v109, 16
    %v784 = vrot.slane %v782, 4
    %v785 = vor.u32 %v784, %v780
    %v786 = vrot.slane %v785, 4
    %v788 = vshll.u32 %v110, 16
    %v790 = vrot.slane %v788, 5
    %v791 = vsel %vm143, %v786, %v790
    %v793 = vshrl.u32 %v111, 16
    %v795 = vrot.slane %v793, 4
    %v796 = vshll.u32 %v111, 16
    %v798 = vrot.slane %v796, 5
    %v799 = vor.u32 %v795, %v798
    %v800 = vrot.slane %v799, 4
    %v802 = vshll.u32 %v112, 16
    %v804 = vrot.slane %v802, 5
    %v805 = vsel %vm143, %v800, %v804
    %v806 = vshrl.u32 %v112, 16
    %v808 = vrot.slane %v806, 4
    %v809 = vor.u32 %v808, %v804
    %v810 = vrot.slane %v809, 4
    %v812 = vshll.u32 %v113, 16
    %v814 = vrot.slane %v812, 5
    %v815 = vsel %vm143, %v810, %v814
    %v817 = vshrl.u32 %v114, 16
    %v819 = vrot.slane %v817, 4
    %v820 = vshll.u32 %v114, 16
    %v822 = vrot.slane %v820, 5
    %v823 = vor.u32 %v819, %v822
    %v824 = vrot.slane %v823, 4
    %v826 = vshll.u32 %v115, 16
    %v828 = vrot.slane %v826, 5
    %v829 = vsel %vm143, %v824, %v828
    %v830 = vshrl.u32 %v115, 16
    %v832 = vrot.slane %v830, 4
    %v833 = vor.u32 %v832, %v828
    %v834 = vrot.slane %v833, 4
    %v836 = vshll.u32 %v116, 16
    %v838 = vrot.slane %v836, 5
    %v839 = vsel %vm143, %v834, %v838
    %v841 = vshrl.u32 %v117, 16
    %v843 = vrot.slane %v841, 4
    %v844 = vshll.u32 %v117, 16
    %v846 = vrot.slane %v844, 5
    %v847 = vor.u32 %v843, %v846
    %v848 = vrot.slane %v847, 4
    %v850 = vshll.u32 %v118, 16
    %v852 = vrot.slane %v850, 5
    %v853 = vsel %vm143, %v848, %v852
    %v854 = vshrl.u32 %v118, 16
    %v856 = vrot.slane %v854, 4
    %v857 = vor.u32 %v856, %v852
    %v858 = vrot.slane %v857, 4
    %v860 = vshll.u32 %v119, 16
    %v862 = vrot.slane %v860, 5
    %v863 = vsel %vm143, %v858, %v862
    %v865 = vshrl.u32 %v120, 16
    %v867 = vrot.slane %v865, 4
    %v868 = vshll.u32 %v120, 16
    %v870 = vrot.slane %v868, 5
    %v871 = vor.u32 %v867, %v870
    %v872 = vrot.slane %v871, 4
    %v874 = vshll.u32 %v121, 16
    %v876 = vrot.slane %v874, 5
    %v877 = vsel %vm143, %v872, %v876
    %v878 = vshrl.u32 %v121, 16
    %v880 = vrot.slane %v878, 4
    %v881 = vor.u32 %v880, %v876
    %v882 = vrot.slane %v881, 4
    %v884 = vshll.u32 %v122, 16
    %v886 = vrot.slane %v884, 5
    %v887 = vsel %vm143, %v882, %v886
    %v889 = vshrl.u32 %v123, 16
    %v891 = vrot.slane %v889, 4
    %v892 = vshll.u32 %v123, 16
    %v894 = vrot.slane %v892, 5
    %v895 = vor.u32 %v891, %v894
    %v896 = vrot.slane %v895, 4
    %v898 = vshll.u32 %v124, 16
    %v900 = vrot.slane %v898, 5
    %v901 = vsel %vm143, %v896, %v900
    %v902 = vshrl.u32 %v124, 16
    %v904 = vrot.slane %v902, 4
    %v905 = vor.u32 %v904, %v900
    %v906 = vrot.slane %v905, 4
    %v908 = vshll.u32 %v125, 16
    %v910 = vrot.slane %v908, 5
    %v911 = vsel %vm143, %v906, %v910
    %v912 = vunpack.c.l.b16 %v157
    %v913 = vunpack.c.l.b16 %v167
    %v914 = vunpack.c.l.b16 %v181
    %v915 = vunpack.c.l.b16 %v191
    %v916 = vunpack.c.l.b16 %v205
    %v917 = vunpack.c.l.b16 %v215
    %v918 = vunpack.c.l.b16 %v229
    %v919 = vunpack.c.l.b16 %v239
    %v920 = vunpack.c.l.b16 %v253
    %v921 = vunpack.c.l.b16 %v263
    %v922 = vunpack.c.l.b16 %v277
    %v923 = vunpack.c.l.b16 %v287
    %v924 = vunpack.c.l.b16 %v301
    %v925 = vunpack.c.l.b16 %v311
    %v926 = vunpack.c.l.b16 %v325
    %v927 = vunpack.c.l.b16 %v335
    %v928 = vunpack.c.l.b16 %v349
    %v929 = vunpack.c.l.b16 %v359
    %v930 = vunpack.c.l.b16 %v373
    %v931 = vunpack.c.l.b16 %v383
    %v932 = vunpack.c.l.b16 %v397
    %v933 = vunpack.c.l.b16 %v407
    %v934 = vunpack.c.l.b16 %v421
    %v935 = vunpack.c.l.b16 %v431
    %v936 = vunpack.c.l.b16 %v445
    %v937 = vunpack.c.l.b16 %v455
    %v938 = vunpack.c.l.b16 %v469
    %v939 = vunpack.c.l.b16 %v479
    %v940 = vunpack.c.l.b16 %v493
    %v941 = vunpack.c.l.b16 %v503
    %v942 = vunpack.c.l.b16 %v517
    %v943 = vunpack.c.l.b16 %v527
    %v944 = vunpack.c.l.b16 %v541
    %v945 = vunpack.c.l.b16 %v551
    %v946 = vunpack.c.l.b16 %v565
    %v947 = vunpack.c.l.b16 %v575
    %v948 = vunpack.c.l.b16 %v589
    %v949 = vunpack.c.l.b16 %v599
    %v950 = vunpack.c.l.b16 %v613
    %v951 = vunpack.c.l.b16 %v623
    %v952 = vunpack.c.l.b16 %v637
    %v953 = vunpack.c.l.b16 %v647
    %v954 = vunpack.c.l.b16 %v661
    %v955 = vunpack.c.l.b16 %v671
    %v956 = vunpack.c.l.b16 %v685
    %v957 = vunpack.c.l.b16 %v695
    %v958 = vunpack.c.l.b16 %v709
    %v959 = vunpack.c.l.b16 %v719
    %v960 = vunpack.c.l.b16 %v733
    %v961 = vunpack.c.l.b16 %v743
    %v962 = vunpack.c.l.b16 %v757
    %v963 = vunpack.c.l.b16 %v767
    %v964 = vunpack.c.l.b16 %v781
    %v965 = vunpack.c.l.b16 %v791
    %v966 = vunpack.c.l.b16 %v805
    %v967 = vunpack.c.l.b16 %v815
    %v968 = vunpack.c.l.b16 %v829
    %v969 = vunpack.c.l.b16 %v839
    %v970 = vunpack.c.l.b16 %v853
    %v971 = vunpack.c.l.b16 %v863
    %v972 = vunpack.c.l.b16 %v877
    %v973 = vunpack.c.l.b16 %v887
    %v974 = vunpack.c.l.b16 %v901
    %v975 = vunpack.c.l.b16 %v911
    %v976 = vpack.c.b16 %v913, %v912
    %v977 = vpack.c.b16 %v915, %v914
    %v978 = vpack.c.b16 %v917, %v916
    %v979 = vpack.c.b16 %v919, %v918
    %v980 = vpack.c.b16 %v921, %v920
    %v981 = vpack.c.b16 %v923, %v922
    %v982 = vpack.c.b16 %v925, %v924
    %v983 = vpack.c.b16 %v927, %v926
    %v984 = vpack.c.b16 %v929, %v928
    %v985 = vpack.c.b16 %v931, %v930
    %v986 = vpack.c.b16 %v933, %v932
    %v987 = vpack.c.b16 %v935, %v934
    %v988 = vpack.c.b16 %v937, %v936
    %v989 = vpack.c.b16 %v939, %v938
    %v990 = vpack.c.b16 %v941, %v940
    %v991 = vpack.c.b16 %v943, %v942
    %v992 = vpack.c.b16 %v945, %v944
    %v993 = vpack.c.b16 %v947, %v946
    %v994 = vpack.c.b16 %v949, %v948
    %v995 = vpack.c.b16 %v951, %v950
    %v996 = vpack.c.b16 %v953, %v952
    %v997 = vpack.c.b16 %v955, %v954
    %v998 = vpack.c.b16 %v957, %v956
    %v999 = vpack.c.b16 %v959, %v958
    %v1000 = vpack.c.b16 %v961, %v960
    %v1001 = vpack.c.b16 %v963, %v962
    %v1002 = vpack.c.b16 %v965, %v964
    %v1003 = vpack.c.b16 %v967, %v966
    %v1004 = vpack.c.b16 %v969, %v968
    %v1005 = vpack.c.b16 %v971, %v970
    %v1006 = vpack.c.b16 %v973, %v972
    %v1007 = vpack.c.b16 %v975, %v974
    %vm1008 = vcmask 31744
    %v1010 = vsel %vm1008, %v976, 0
    %v1013 = vsel %vm1008, %v977, 0
    %v1016 = vsel %vm1008, %v978, 0
    %v1019 = vsel %vm1008, %v979, 0
    %v1022 = vsel %vm1008, %v980, 0
    %v1025 = vsel %vm1008, %v981, 0
    %v1028 = vsel %vm1008, %v982, 0
    %v1031 = vsel %vm1008, %v983, 0
    %v1034 = vsel %vm1008, %v984, 0
    %v1037 = vsel %vm1008, %v985, 0
    %v1040 = vsel %vm1008, %v986, 0
    %v1043 = vsel %vm1008, %v987, 0
    %v1046 = vsel %vm1008, %v988, 0
    %v1049 = vsel %vm1008, %v989, 0
    %v1052 = vsel %vm1008, %v990, 0
    %v1055 = vsel %vm1008, %v991, 0
    %v1058 = vsel %vm1008, %v992, 0
    %v1061 = vsel %vm1008, %v993, 0
    %v1064 = vsel %vm1008, %v994, 0
    %v1067 = vsel %vm1008, %v995, 0
    %v1070 = vsel %vm1008, %v996, 0
    %v1073 = vsel %vm1008, %v997, 0
    %v1076 = vsel %vm1008, %v998, 0
    %v1079 = vsel %vm1008, %v999, 0
    %v1082 = vsel %vm1008, %v1000, 0
    %v1085 = vsel %vm1008, %v1001, 0
    %v1088 = vsel %vm1008, %v1002, 0
    %v1091 = vsel %vm1008, %v1003, 0
    %v1094 = vsel %vm1008, %v1004, 0
    %v1097 = vsel %vm1008, %v1005, 0
    %v1100 = vsel %vm1008, %v1006, 0
    %v1103 = vsel %vm1008, %v1007, 0
    %vm1105 = vcmask 1041408
    %v1107 = vsel %vm1105, %v133, 0
    %1109 = vmatprep.subr.bf16.mxu0 0
    %1110 = vmatpush1.bf16.msra.mxu0 %v1107
    %1111 = vmatprep.subr.bf16.mxu0 0
    %1112 = vmatpush1.bf16.msra.mxu0 0
    %1113 = vmatprep.subr.bf16.mxu0 0
    %1114 = vmatpush1.bf16.msra.mxu0 0
    %1115 = vmatprep.subr.bf16.mxu0 0
    %1116 = vmatpush1.bf16.msra.mxu0 0
    %1117 = vmatprep.subr.bf16.mxu0 0
    %1118 = vmatpush1.bf16.msra.mxu0 0
    %1119 = vmatprep.subr.bf16.mxu0 0
    %1120 = vmatpush1.bf16.msra.mxu0 0
    %1121 = vmatprep.subr.bf16.mxu0 0
    %1122 = vmatpush1.bf16.msra.mxu0 0
    %1123 = vmatprep.subr.bf16.mxu0 0
    %1124 = vmatpush1.bf16.msra.mxu0 0
    %1125 = vmatprep.subr.bf16.mxu0 0
    %1126 = vmatpush1.bf16.msra.mxu0 0
    %1127 = vmatprep.subr.bf16.mxu0 0
    %1128 = vmatpush1.bf16.msra.mxu0 0
    %1129 = vmatprep.subr.bf16.mxu0 0
    %1130 = vmatpush1.bf16.msra.mxu0 0
    %1131 = vmatprep.subr.bf16.mxu0 0
    %1132 = vmatpush1.bf16.msra.mxu0 0
    %1133 = vmatprep.subr.bf16.mxu0 0
    %1134 = vmatpush1.bf16.msra.mxu0 0
    %1135 = vmatprep.subr.bf16.mxu0 0
    %1136 = vmatpush1.bf16.msra.mxu0 0
    %1137 = vmatprep.subr.bf16.mxu0 0
    %1138 = vmatpush1.bf16.msra.mxu0 0
    %1139 = vmatprep.subr.bf16.mxu0 0
    %1140 = vmatpush1.bf16.msra.mxu0 0
    %1141 = vmatprep.mubr.bf16.mxu0 0
    %1142 = vmatmul.mubr.bf16.gmra.mrb[0].mxu0 %v1010
    %v1143 = vpop.f32.mrb[0].mxu0
    %v1144 = vadd.f32 0.0, %v1143
    %v1145 = vpop.f32.mrb[0].mxu0
    %v1146 = vpop.f32.mrb[0].mxu0
    %v1147 = vadd.f32 0.0, %v1146
    %v1148 = vpop.f32.mrb[0].mxu0
    %1149 = vmatprep.mubr.bf16.mxu0 0
    %1150 = vmatmul.mubr.bf16.gmra.mrb[0].mxu0 %v1013
    %v1151 = vpop.f32.mrb[0].mxu0
    %v1152 = vadd.f32 0.0, %v1151
    %v1153 = vpop.f32.mrb[0].mxu0
    %v1154 = vpop.f32.mrb[0].mxu0
    %v1155 = vadd.f32 0.0, %v1154
    %v1156 = vpop.f32.mrb[0].mxu0
    %1157 = vmatprep.mubr.bf16.mxu0 0
    %1158 = vmatmul.mubr.bf16.gmra.mrb[0].mxu0 %v1016
    %v1159 = vpop.f32.mrb[0].mxu0
    %v1160 = vadd.f32 0.0, %v1159
    %v1161 = vpop.f32.mrb[0].mxu0
    %v1162 = vpop.f32.mrb[0].mxu0
    %v1163 = vadd.f32 0.0, %v1162
    %v1164 = vpop.f32.mrb[0].mxu0
    %1165 = vmatprep.mubr.bf16.mxu0 0
    %1166 = vmatmul.mubr.bf16.gmra.mrb[0].mxu0 %v1019
    %v1167 = vpop.f32.mrb[0].mxu0
    %v1168 = vadd.f32 0.0, %v1167
    %v1169 = vpop.f32.mrb[0].mxu0
    %v1170 = vpop.f32.mrb[0].mxu0
    %v1171 = vadd.f32 0.0, %v1170
    %v1172 = vpop.f32.mrb[0].mxu0
    %1173 = vmatprep.mubr.bf16.mxu0 0
    %1174 = vmatmul.mubr.bf16.gmra.mrb[0].mxu0 %v1022
    %v1175 = vpop.f32.mrb[0].mxu0
    %v1176 = vadd.f32 0.0, %v1175
    %v1177 = vpop.f32.mrb[0].mxu0
    %v1178 = vpop.f32.mrb[0].mxu0
    %v1179 = vadd.f32 0.0, %v1178
    %v1180 = vpop.f32.mrb[0].mxu0
    %1181 = vmatprep.mubr.bf16.mxu0 0
    %1182 = vmatmul.mubr.bf16.gmra.mrb[0].mxu0 %v1025
    %v1183 = vpop.f32.mrb[0].mxu0
    %v1184 = vadd.f32 0.0, %v1183
    %v1185 = vpop.f32.mrb[0].mxu0
    %v1186 = vpop.f32.mrb[0].mxu0
    %v1187 = vadd.f32 0.0, %v1186
    %v1188 = vpop.f32.mrb[0].mxu0
    %1189 = vmatprep.mubr.bf16.mxu0 0
    %1190 = vmatmul.mubr.bf16.gmra.mrb[0].mxu0 %v1028
    %v1191 = vpop.f32.mrb[0].mxu0
    %v1192 = vadd.f32 0.0, %v1191
    %v1193 = vpop.f32.mrb[0].mxu0
    %v1194 = vpop.f32.mrb[0].mxu0
    %v1195 = vadd.f32 0.0, %v1194
    %v1196 = vpop.f32.mrb[0].mxu0
    %1197 = vmatprep.mubr.bf16.mxu0 0
    %1198 = vmatmul.mubr.bf16.gmra.mrb[0].mxu0 %v1031
    %v1199 = vpop.f32.mrb[0].mxu0
    %v1200 = vadd.f32 0.0, %v1199
    %v1201 = vpop.f32.mrb[0].mxu0
    %v1202 = vpop.f32.mrb[0].mxu0
    %v1203 = vadd.f32 0.0, %v1202
    %v1204 = vpop.f32.mrb[0].mxu0
    %1205 = vmatprep.mubr.bf16.mxu0 0
    %1206 = vmatmul.mubr.bf16.gmra.mrb[0].mxu0 %v1034
    %v1207 = vpop.f32.mrb[0].mxu0
    %v1208 = vadd.f32 0.0, %v1207
    %v1209 = vpop.f32.mrb[0].mxu0
    %v1210 = vpop.f32.mrb[0].mxu0
    %v1211 = vadd.f32 0.0, %v1210
    %v1212 = vpop.f32.mrb[0].mxu0
    %1213 = vmatprep.mubr.bf16.mxu0 0
    %1214 = vmatmul.mubr.bf16.gmra.mrb[0].mxu0 %v1037
    %v1215 = vpop.f32.mrb[0].mxu0
    %v1216 = vadd.f32 0.0, %v1215
    %v1217 = vpop.f32.mrb[0].mxu0
    %v1218 = vpop.f32.mrb[0].mxu0
    %v1219 = vadd.f32 0.0, %v1218
    %v1220 = vpop.f32.mrb[0].mxu0
    %1221 = vmatprep.mubr.bf16.mxu0 0
    %1222 = vmatmul.mubr.bf16.gmra.mrb[0].mxu0 %v1040
    %v1223 = vpop.f32.mrb[0].mxu0
    %v1224 = vadd.f32 0.0, %v1223
    %v1225 = vpop.f32.mrb[0].mxu0
    %v1226 = vpop.f32.mrb[0].mxu0
    %v1227 = vadd.f32 0.0, %v1226
    %v1228 = vpop.f32.mrb[0].mxu0
    %1229 = vmatprep.mubr.bf16.mxu0 0
    %1230 = vmatmul.mubr.bf16.gmra.mrb[0].mxu0 %v1043
    %v1231 = vpop.f32.mrb[0].mxu0
    %v1232 = vadd.f32 0.0, %v1231
    %v1233 = vpop.f32.mrb[0].mxu0
    %v1234 = vpop.f32.mrb[0].mxu0
    %v1235 = vadd.f32 0.0, %v1234
    %v1236 = vpop.f32.mrb[0].mxu0
    %1237 = vmatprep.mubr.bf16.mxu0 0
    %1238 = vmatmul.mubr.bf16.gmra.mrb[0].mxu0 %v1046
    %v1239 = vpop.f32.mrb[0].mxu0
    %v1240 = vadd.f32 0.0, %v1239
    %v1241 = vpop.f32.mrb[0].mxu0
    %v1242 = vpop.f32.mrb[0].mxu0
    %v1243 = vadd.f32 0.0, %v1242
    %v1244 = vpop.f32.mrb[0].mxu0
    %1245 = vmatprep.mubr.bf16.mxu0 0
    %1246 = vmatmul.mubr.bf16.gmra.mrb[0].mxu0 %v1049
    %v1247 = vpop.f32.mrb[0].mxu0
    %v1248 = vadd.f32 0.0, %v1247
    %v1249 = vpop.f32.mrb[0].mxu0
    %v1250 = vpop.f32.mrb[0].mxu0
    %v1251 = vadd.f32 0.0, %v1250
    %v1252 = vpop.f32.mrb[0].mxu0
    %1253 = vmatprep.mubr.bf16.mxu0 0
    %1254 = vmatmul.mubr.bf16.gmra.mrb[0].mxu0 %v1052
    %v1255 = vpop.f32.mrb[0].mxu0
    %v1256 = vadd.f32 0.0, %v1255
    %v1257 = vpop.f32.mrb[0].mxu0
    %v1258 = vpop.f32.mrb[0].mxu0
    %v1259 = vadd.f32 0.0, %v1258
    %v1260 = vpop.f32.mrb[0].mxu0
    %1261 = vmatprep.mubr.bf16.mxu0 0
    %1262 = vmatmul.mubr.bf16.gmra.mrb[0].mxu0 %v1055
    %v1263 = vpop.f32.mrb[0].mxu0
    %v1264 = vadd.f32 0.0, %v1263
    %v1265 = vpop.f32.mrb[0].mxu0
    %v1266 = vpop.f32.mrb[0].mxu0
    %v1267 = vadd.f32 0.0, %v1266
    %v1268 = vpop.f32.mrb[0].mxu0
    %1269 = vmatprep.mubr.bf16.mxu0 0
    %1270 = vmatmul.mubr.bf16.gmra.mrb[0].mxu0 %v1058
    %v1271 = vpop.f32.mrb[0].mxu0
    %v1272 = vadd.f32 0.0, %v1271
    %v1273 = vpop.f32.mrb[0].mxu0
    %v1274 = vpop.f32.mrb[0].mxu0
    %v1275 = vadd.f32 0.0, %v1274
    %v1276 = vpop.f32.mrb[0].mxu0
    %1277 = vmatprep.mubr.bf16.mxu0 0
    %1278 = vmatmul.mubr.bf16.gmra.mrb[0].mxu0 %v1061
    %v1279 = vpop.f32.mrb[0].mxu0
    %v1280 = vadd.f32 0.0, %v1279
    %v1281 = vpop.f32.mrb[0].mxu0
    %v1282 = vpop.f32.mrb[0].mxu0
    %v1283 = vadd.f32 0.0, %v1282
    %v1284 = vpop.f32.mrb[0].mxu0
    %1285 = vmatprep.mubr.bf16.mxu0 0
    %1286 = vmatmul.mubr.bf16.gmra.mrb[0].mxu0 %v1064
    %v1287 = vpop.f32.mrb[0].mxu0
    %v1288 = vadd.f32 0.0, %v1287
    %v1289 = vpop.f32.mrb[0].mxu0
    %v1290 = vpop.f32.mrb[0].mxu0
    %v1291 = vadd.f32 0.0, %v1290
    %v1292 = vpop.f32.mrb[0].mxu0
    %1293 = vmatprep.mubr.bf16.mxu0 0
    %1294 = vmatmul.mubr.bf16.gmra.mrb[0].mxu0 %v1067
    %v1295 = vpop.f32.mrb[0].mxu0
    %v1296 = vadd.f32 0.0, %v1295
    %v1297 = vpop.f32.mrb[0].mxu0
    %v1298 = vpop.f32.mrb[0].mxu0
    %v1299 = vadd.f32 0.0, %v1298
    %v1300 = vpop.f32.mrb[0].mxu0
    %1301 = vmatprep.mubr.bf16.mxu0 0
    %1302 = vmatmul.mubr.bf16.gmra.mrb[0].mxu0 %v1070
    %v1303 = vpop.f32.mrb[0].mxu0
    %v1304 = vadd.f32 0.0, %v1303
    %v1305 = vpop.f32.mrb[0].mxu0
    %v1306 = vpop.f32.mrb[0].mxu0
    %v1307 = vadd.f32 0.0, %v1306
    %v1308 = vpop.f32.mrb[0].mxu0
    %1309 = vmatprep.mubr.bf16.mxu0 0
    %1310 = vmatmul.mubr.bf16.gmra.mrb[0].mxu0 %v1073
    %v1311 = vpop.f32.mrb[0].mxu0
    %v1312 = vadd.f32 0.0, %v1311
    %v1313 = vpop.f32.mrb[0].mxu0
    %v1314 = vpop.f32.mrb[0].mxu0
    %v1315 = vadd.f32 0.0, %v1314
    %v1316 = vpop.f32.mrb[0].mxu0
    %1317 = vmatprep.mubr.bf16.mxu0 0
    %1318 = vmatmul.mubr.bf16.gmra.mrb[0].mxu0 %v1076
    %v1319 = vpop.f32.mrb[0].mxu0
    %v1320 = vadd.f32 0.0, %v1319
    %v1321 = vpop.f32.mrb[0].mxu0
    %v1322 = vpop.f32.mrb[0].mxu0
    %v1323 = vadd.f32 0.0, %v1322
    %v1324 = vpop.f32.mrb[0].mxu0
    %1325 = vmatprep.mubr.bf16.mxu0 0
    %1326 = vmatmul.mubr.bf16.gmra.mrb[0].mxu0 %v1079
    %v1327 = vpop.f32.mrb[0].mxu0
    %v1328 = vadd.f32 0.0, %v1327
    %v1329 = vpop.f32.mrb[0].mxu0
    %v1330 = vpop.f32.mrb[0].mxu0
    %v1331 = vadd.f32 0.0, %v1330
    %v1332 = vpop.f32.mrb[0].mxu0
    %1333 = vmatprep.mubr.bf16.mxu0 0
    %1334 = vmatmul.mubr.bf16.gmra.mrb[0].mxu0 %v1082
    %v1335 = vpop.f32.mrb[0].mxu0
    %v1336 = vadd.f32 0.0, %v1335
    %v1337 = vpop.f32.mrb[0].mxu0
    %v1338 = vpop.f32.mrb[0].mxu0
    %v1339 = vadd.f32 0.0, %v1338
    %v1340 = vpop.f32.mrb[0].mxu0
    %1341 = vmatprep.mubr.bf16.mxu0 0
    %1342 = vmatmul.mubr.bf16.gmra.mrb[0].mxu0 %v1085
    %v1343 = vpop.f32.mrb[0].mxu0
    %v1344 = vadd.f32 0.0, %v1343
    %v1345 = vpop.f32.mrb[0].mxu0
    %v1346 = vpop.f32.mrb[0].mxu0
    %v1347 = vadd.f32 0.0, %v1346
    %v1348 = vpop.f32.mrb[0].mxu0
    %1349 = vmatprep.mubr.bf16.mxu0 0
    %1350 = vmatmul.mubr.bf16.gmra.mrb[0].mxu0 %v1088
    %v1351 = vpop.f32.mrb[0].mxu0
    %v1352 = vadd.f32 0.0, %v1351
    %v1353 = vpop.f32.mrb[0].mxu0
    %v1354 = vpop.f32.mrb[0].mxu0
    %v1355 = vadd.f32 0.0, %v1354
    %v1356 = vpop.f32.mrb[0].mxu0
    %1357 = vmatprep.mubr.bf16.mxu0 0
    %1358 = vmatmul.mubr.bf16.gmra.mrb[0].mxu0 %v1091
    %v1359 = vpop.f32.mrb[0].mxu0
    %v1360 = vadd.f32 0.0, %v1359
    %v1361 = vpop.f32.mrb[0].mxu0
    %v1362 = vpop.f32.mrb[0].mxu0
    %v1363 = vadd.f32 0.0, %v1362
    %v1364 = vpop.f32.mrb[0].mxu0
    %1365 = vmatprep.mubr.bf16.mxu0 0
    %1366 = vmatmul.mubr.bf16.gmra.mrb[0].mxu0 %v1094
    %v1367 = vpop.f32.mrb[0].mxu0
    %v1368 = vadd.f32 0.0, %v1367
    %v1369 = vpop.f32.mrb[0].mxu0
    %v1370 = vpop.f32.mrb[0].mxu0
    %v1371 = vadd.f32 0.0, %v1370
    %v1372 = vpop.f32.mrb[0].mxu0
    %1373 = vmatprep.mubr.bf16.mxu0 0
    %1374 = vmatmul.mubr.bf16.gmra.mrb[0].mxu0 %v1097
    %v1375 = vpop.f32.mrb[0].mxu0
    %v1376 = vadd.f32 0.0, %v1375
    %v1377 = vpop.f32.mrb[0].mxu0
    %v1378 = vpop.f32.mrb[0].mxu0
    %v1379 = vadd.f32 0.0, %v1378
    %v1380 = vpop.f32.mrb[0].mxu0
    %1381 = vmatprep.mubr.bf16.mxu0 0
    %1382 = vmatmul.mubr.bf16.gmra.mrb[0].mxu0 %v1100
    %v1383 = vpop.f32.mrb[0].mxu0
    %v1384 = vadd.f32 0.0, %v1383
    %v1385 = vpop.f32.mrb[0].mxu0
    %v1386 = vpop.f32.mrb[0].mxu0
    %v1387 = vadd.f32 0.0, %v1386
    %v1388 = vpop.f32.mrb[0].mxu0
    %1389 = vmatprep.mubr.bf16.mxu0 0
    %1390 = vmatmul.mubr.bf16.gmra.mrb[0].mxu0 %v1103
    %v1391 = vpop.f32.mrb[0].mxu0
    %v1392 = vadd.f32 0.0, %v1391
    %v1393 = vpop.f32.mrb[0].mxu0
    %v1394 = vpop.f32.mrb[0].mxu0
    %v1395 = vadd.f32 0.0, %v1394
    %v1396 = vpop.f32.mrb[0].mxu0
    %1397 = vdwg.mxu0
    %v1462 = vunpack.c.l.b16 %v24
    %v1463 = vunpack.c.l.b16 %v25
    %v1464 = vunpack.c.l.b16 %v27
    %v1465 = vunpack.c.l.b16 %v28
    %v1466 = vunpack.c.l.b16 %v30
    %v1467 = vunpack.c.l.b16 %v31
    %v1468 = vunpack.c.l.b16 %v33
    %v1469 = vunpack.c.l.b16 %v34
    %v1470 = vunpack.c.l.b16 %v36
    %v1471 = vunpack.c.l.b16 %v37
    %v1472 = vunpack.c.l.b16 %v39
    %v1473 = vunpack.c.l.b16 %v40
    %v1474 = vunpack.c.l.b16 %v42
    %v1475 = vunpack.c.l.b16 %v43
    %v1476 = vunpack.c.l.b16 %v45
    %v1477 = vunpack.c.l.b16 %v46
    %v1478 = vunpack.c.l.b16 %v48
    %v1479 = vunpack.c.l.b16 %v49
    %v1480 = vunpack.c.l.b16 %v51
    %v1481 = vunpack.c.l.b16 %v52
    %v1482 = vunpack.c.l.b16 %v54
    %v1483 = vunpack.c.l.b16 %v55
    %v1484 = vunpack.c.l.b16 %v57
    %v1485 = vunpack.c.l.b16 %v58
    %v1486 = vunpack.c.l.b16 %v60
    %v1487 = vunpack.c.l.b16 %v61
    %v1488 = vunpack.c.l.b16 %v63
    %v1489 = vunpack.c.l.b16 %v64
    %v1490 = vunpack.c.l.b16 %v66
    %v1491 = vunpack.c.l.b16 %v67
    %v1492 = vunpack.c.l.b16 %v69
    %v1493 = vunpack.c.l.b16 %v70
    %v1494 = vunpack.c.l.b16 %v78
    %v1495 = vunpack.c.l.b16 %v79
    %v1496 = vunpack.c.l.b16 %v81
    %v1497 = vunpack.c.l.b16 %v82
    %v1498 = vunpack.c.l.b16 %v84
    %v1499 = vunpack.c.l.b16 %v85
    %v1500 = vunpack.c.l.b16 %v87
    %v1501 = vunpack.c.l.b16 %v88
    %v1502 = vunpack.c.l.b16 %v90
    %v1503 = vunpack.c.l.b16 %v91
    %v1504 = vunpack.c.l.b16 %v93
    %v1505 = vunpack.c.l.b16 %v94
    %v1506 = vunpack.c.l.b16 %v96
    %v1507 = vunpack.c.l.b16 %v97
    %v1508 = vunpack.c.l.b16 %v99
    %v1509 = vunpack.c.l.b16 %v100
    %v1510 = vunpack.c.l.b16 %v102
    %v1511 = vunpack.c.l.b16 %v103
    %v1512 = vunpack.c.l.b16 %v105
    %v1513 = vunpack.c.l.b16 %v106
    %v1514 = vunpack.c.l.b16 %v108
    %v1515 = vunpack.c.l.b16 %v109
    %v1516 = vunpack.c.l.b16 %v111
    %v1517 = vunpack.c.l.b16 %v112
    %v1518 = vunpack.c.l.b16 %v114
    %v1519 = vunpack.c.l.b16 %v115
    %v1520 = vunpack.c.l.b16 %v117
    %v1521 = vunpack.c.l.b16 %v118
    %v1522 = vunpack.c.l.b16 %v120
    %v1523 = vunpack.c.l.b16 %v121
    %v1524 = vunpack.c.l.b16 %v123
    %v1525 = vunpack.c.l.b16 %v124
    %v1526 = vpack.c.b16 %v1463, %v1462
    %v1527 = vpack.c.b16 %v1465, %v1464
    %v1528 = vpack.c.b16 %v1467, %v1466
    %v1529 = vpack.c.b16 %v1469, %v1468
    %v1530 = vpack.c.b16 %v1471, %v1470
    %v1531 = vpack.c.b16 %v1473, %v1472
    %v1532 = vpack.c.b16 %v1475, %v1474
    %v1533 = vpack.c.b16 %v1477, %v1476
    %v1534 = vpack.c.b16 %v1479, %v1478
    %v1535 = vpack.c.b16 %v1481, %v1480
    %v1536 = vpack.c.b16 %v1483, %v1482
    %v1537 = vpack.c.b16 %v1485, %v1484
    %v1538 = vpack.c.b16 %v1487, %v1486
    %v1539 = vpack.c.b16 %v1489, %v1488
    %v1540 = vpack.c.b16 %v1491, %v1490
    %v1541 = vpack.c.b16 %v1493, %v1492
    %v1542 = vpack.c.b16 %v1495, %v1494
    %v1543 = vpack.c.b16 %v1497, %v1496
    %v1544 = vpack.c.b16 %v1499, %v1498
    %v1545 = vpack.c.b16 %v1501, %v1500
    %v1546 = vpack.c.b16 %v1503, %v1502
    %v1547 = vpack.c.b16 %v1505, %v1504
    %v1548 = vpack.c.b16 %v1507, %v1506
    %v1549 = vpack.c.b16 %v1509, %v1508
    %v1550 = vpack.c.b16 %v1511, %v1510
    %v1551 = vpack.c.b16 %v1513, %v1512
    %v1552 = vpack.c.b16 %v1515, %v1514
    %v1553 = vpack.c.b16 %v1517, %v1516
    %v1554 = vpack.c.b16 %v1519, %v1518
    %v1555 = vpack.c.b16 %v1521, %v1520
    %v1556 = vpack.c.b16 %v1523, %v1522
    %v1557 = vpack.c.b16 %v1525, %v1524
    %v1559 = vsel %vm1008, %v1526, 0
    %v1562 = vsel %vm1008, %v1527, 0
    %v1565 = vsel %vm1008, %v1528, 0
    %v1568 = vsel %vm1008, %v1529, 0
    %v1571 = vsel %vm1008, %v1530, 0
    %v1574 = vsel %vm1008, %v1531, 0
    %v1577 = vsel %vm1008, %v1532, 0
    %v1580 = vsel %vm1008, %v1533, 0
    %v1583 = vsel %vm1008, %v1534, 0
    %v1586 = vsel %vm1008, %v1535, 0
    %v1589 = vsel %vm1008, %v1536, 0
    %v1592 = vsel %vm1008, %v1537, 0
    %v1595 = vsel %vm1008, %v1538, 0
    %v1598 = vsel %vm1008, %v1539, 0
    %v1601 = vsel %vm1008, %v1540, 0
    %v1604 = vsel %vm1008, %v1541, 0
    %v1607 = vsel %vm1008, %v1542, 0
    %v1610 = vsel %vm1008, %v1543, 0
    %v1613 = vsel %vm1008, %v1544, 0
    %v1616 = vsel %vm1008, %v1545, 0
    %v1619 = vsel %vm1008, %v1546, 0
    %v1622 = vsel %vm1008, %v1547, 0
    %v1625 = vsel %vm1008, %v1548, 0
    %v1628 = vsel %vm1008, %v1549, 0
    %v1631 = vsel %vm1008, %v1550, 0
    %v1634 = vsel %vm1008, %v1551, 0
    %v1637 = vsel %vm1008, %v1552, 0
    %v1640 = vsel %vm1008, %v1553, 0
    %v1643 = vsel %vm1008, %v1554, 0
    %v1646 = vsel %vm1008, %v1555, 0
    %v1649 = vsel %vm1008, %v1556, 0
    %v1652 = vsel %vm1008, %v1557, 0
    %v1655 = vsel %vm1105, %v132, 0
    %1657 = vmatprep.subr.bf16.mxu0 0
    %1658 = vmatpush1.bf16.msra.mxu0 %v1655
    %1659 = vmatprep.subr.bf16.mxu0 0
    %1660 = vmatpush1.bf16.msra.mxu0 0
    %1661 = vmatprep.subr.bf16.mxu0 0
    %1662 = vmatpush1.bf16.msra.mxu0 0
    %1663 = vmatprep.subr.bf16.mxu0 0
    %1664 = vmatpush1.bf16.msra.mxu0 0
    %1665 = vmatprep.subr.bf16.mxu0 0
    %1666 = vmatpush1.bf16.msra.mxu0 0
    %1667 = vmatprep.subr.bf16.mxu0 0
    %1668 = vmatpush1.bf16.msra.mxu0 0
    %1669 = vmatprep.subr.bf16.mxu0 0
    %1670 = vmatpush1.bf16.msra.mxu0 0
    %1671 = vmatprep.subr.bf16.mxu0 0
    %1672 = vmatpush1.bf16.msra.mxu0 0
    %1673 = vmatprep.subr.bf16.mxu0 0
    %1674 = vmatpush1.bf16.msra.mxu0 0
    %1675 = vmatprep.subr.bf16.mxu0 0
    %1676 = vmatpush1.bf16.msra.mxu0 0
    %1677 = vmatprep.subr.bf16.mxu0 0
    %1678 = vmatpush1.bf16.msra.mxu0 0
    %1679 = vmatprep.subr.bf16.mxu0 0
    %1680 = vmatpush1.bf16.msra.mxu0 0
    %1681 = vmatprep.subr.bf16.mxu0 0
    %1682 = vmatpush1.bf16.msra.mxu0 0
    %1683 = vmatprep.subr.bf16.mxu0 0
    %1684 = vmatpush1.bf16.msra.mxu0 0
    %1685 = vmatprep.subr.bf16.mxu0 0
    %1686 = vmatpush1.bf16.msra.mxu0 0
    %1687 = vmatprep.subr.bf16.mxu0 0
    %1688 = vmatpush1.bf16.msra.mxu0 0
    %1689 = vmatprep.mubr.bf16.mxu0 0
    %1690 = vmatmul.mubr.bf16.gmra.mrb[0].mxu0 %v1559
    %v1691 = vpop.f32.mrb[0].mxu0
    %v1692 = vadd.f32 %v1144, %v1691
    %v1693 = vpop.f32.mrb[0].mxu0
    %v1694 = vpop.f32.mrb[0].mxu0
    %v1695 = vadd.f32 %v1147, %v1694
    %v1696 = vpop.f32.mrb[0].mxu0
    %1697 = vmatprep.mubr.bf16.mxu0 0
    %1698 = vmatmul.mubr.bf16.gmra.mrb[0].mxu0 %v1562
    %v1699 = vpop.f32.mrb[0].mxu0
    %v1700 = vadd.f32 %v1152, %v1699
    %v1701 = vpop.f32.mrb[0].mxu0
    %v1702 = vpop.f32.mrb[0].mxu0
    %v1703 = vadd.f32 %v1155, %v1702
    %v1704 = vpop.f32.mrb[0].mxu0
    %1705 = vmatprep.mubr.bf16.mxu0 0
    %1706 = vmatmul.mubr.bf16.gmra.mrb[0].mxu0 %v1565
    %v1707 = vpop.f32.mrb[0].mxu0
    %v1708 = vadd.f32 %v1160, %v1707
    %v1709 = vpop.f32.mrb[0].mxu0
    %v1710 = vpop.f32.mrb[0].mxu0
    %v1711 = vadd.f32 %v1163, %v1710
    %v1712 = vpop.f32.mrb[0].mxu0
    %1713 = vmatprep.mubr.bf16.mxu0 0
    %1714 = vmatmul.mubr.bf16.gmra.mrb[0].mxu0 %v1568
    %v1715 = vpop.f32.mrb[0].mxu0
    %v1716 = vadd.f32 %v1168, %v1715
    %v1717 = vpop.f32.mrb[0].mxu0
    %v1718 = vpop.f32.mrb[0].mxu0
    %v1719 = vadd.f32 %v1171, %v1718
    %v1720 = vpop.f32.mrb[0].mxu0
    %1721 = vmatprep.mubr.bf16.mxu0 0
    %1722 = vmatmul.mubr.bf16.gmra.mrb[0].mxu0 %v1571
    %v1723 = vpop.f32.mrb[0].mxu0
    %v1724 = vadd.f32 %v1176, %v1723
    %v1725 = vpop.f32.mrb[0].mxu0
    %v1726 = vpop.f32.mrb[0].mxu0
    %v1727 = vadd.f32 %v1179, %v1726
    %v1728 = vpop.f32.mrb[0].mxu0
    %1729 = vmatprep.mubr.bf16.mxu0 0
    %1730 = vmatmul.mubr.bf16.gmra.mrb[0].mxu0 %v1574
    %v1731 = vpop.f32.mrb[0].mxu0
    %v1732 = vadd.f32 %v1184, %v1731
    %v1733 = vpop.f32.mrb[0].mxu0
    %v1734 = vpop.f32.mrb[0].mxu0
    %v1735 = vadd.f32 %v1187, %v1734
    %v1736 = vpop.f32.mrb[0].mxu0
    %1737 = vmatprep.mubr.bf16.mxu0 0
    %1738 = vmatmul.mubr.bf16.gmra.mrb[0].mxu0 %v1577
    %v1739 = vpop.f32.mrb[0].mxu0
    %v1740 = vadd.f32 %v1192, %v1739
    %v1741 = vpop.f32.mrb[0].mxu0
    %v1742 = vpop.f32.mrb[0].mxu0
    %v1743 = vadd.f32 %v1195, %v1742
    %v1744 = vpop.f32.mrb[0].mxu0
    %1745 = vmatprep.mubr.bf16.mxu0 0
    %1746 = vmatmul.mubr.bf16.gmra.mrb[0].mxu0 %v1580
    %v1747 = vpop.f32.mrb[0].mxu0
    %v1748 = vadd.f32 %v1200, %v1747
    %v1749 = vpop.f32.mrb[0].mxu0
    %v1750 = vpop.f32.mrb[0].mxu0
    %v1751 = vadd.f32 %v1203, %v1750
    %v1752 = vpop.f32.mrb[0].mxu0
    %1753 = vmatprep.mubr.bf16.mxu0 0
    %1754 = vmatmul.mubr.bf16.gmra.mrb[0].mxu0 %v1583
    %v1755 = vpop.f32.mrb[0].mxu0
    %v1756 = vadd.f32 %v1208, %v1755
    %v1757 = vpop.f32.mrb[0].mxu0
    %v1758 = vpop.f32.mrb[0].mxu0
    %v1759 = vadd.f32 %v1211, %v1758
    %v1760 = vpop.f32.mrb[0].mxu0
    %1761 = vmatprep.mubr.bf16.mxu0 0
    %1762 = vmatmul.mubr.bf16.gmra.mrb[0].mxu0 %v1586
    %v1763 = vpop.f32.mrb[0].mxu0
    %v1764 = vadd.f32 %v1216, %v1763
    %v1765 = vpop.f32.mrb[0].mxu0
    %v1766 = vpop.f32.mrb[0].mxu0
    %v1767 = vadd.f32 %v1219, %v1766
    %v1768 = vpop.f32.mrb[0].mxu0
    %1769 = vmatprep.mubr.bf16.mxu0 0
    %1770 = vmatmul.mubr.bf16.gmra.mrb[0].mxu0 %v1589
    %v1771 = vpop.f32.mrb[0].mxu0
    %v1772 = vadd.f32 %v1224, %v1771
    %v1773 = vpop.f32.mrb[0].mxu0
    %v1774 = vpop.f32.mrb[0].mxu0
    %v1775 = vadd.f32 %v1227, %v1774
    %v1776 = vpop.f32.mrb[0].mxu0
    %1777 = vmatprep.mubr.bf16.mxu0 0
    %1778 = vmatmul.mubr.bf16.gmra.mrb[0].mxu0 %v1592
    %v1779 = vpop.f32.mrb[0].mxu0
    %v1780 = vadd.f32 %v1232, %v1779
    %v1781 = vpop.f32.mrb[0].mxu0
    %v1782 = vpop.f32.mrb[0].mxu0
    %v1783 = vadd.f32 %v1235, %v1782
    %v1784 = vpop.f32.mrb[0].mxu0
    %1785 = vmatprep.mubr.bf16.mxu0 0
    %1786 = vmatmul.mubr.bf16.gmra.mrb[0].mxu0 %v1595
    %v1787 = vpop.f32.mrb[0].mxu0
    %v1788 = vadd.f32 %v1240, %v1787
    %v1789 = vpop.f32.mrb[0].mxu0
    %v1790 = vpop.f32.mrb[0].mxu0
    %v1791 = vadd.f32 %v1243, %v1790
    %v1792 = vpop.f32.mrb[0].mxu0
    %1793 = vmatprep.mubr.bf16.mxu0 0
    %1794 = vmatmul.mubr.bf16.gmra.mrb[0].mxu0 %v1598
    %v1795 = vpop.f32.mrb[0].mxu0
    %v1796 = vadd.f32 %v1248, %v1795
    %v1797 = vpop.f32.mrb[0].mxu0
    %v1798 = vpop.f32.mrb[0].mxu0
    %v1799 = vadd.f32 %v1251, %v1798
    %v1800 = vpop.f32.mrb[0].mxu0
    %1801 = vmatprep.mubr.bf16.mxu0 0
    %1802 = vmatmul.mubr.bf16.gmra.mrb[0].mxu0 %v1601
    %v1803 = vpop.f32.mrb[0].mxu0
    %v1804 = vadd.f32 %v1256, %v1803
    %v1805 = vpop.f32.mrb[0].mxu0
    %v1806 = vpop.f32.mrb[0].mxu0
    %v1807 = vadd.f32 %v1259, %v1806
    %v1808 = vpop.f32.mrb[0].mxu0
    %1809 = vmatprep.mubr.bf16.mxu0 0
    %1810 = vmatmul.mubr.bf16.gmra.mrb[0].mxu0 %v1604
    %v1811 = vpop.f32.mrb[0].mxu0
    %v1812 = vadd.f32 %v1264, %v1811
    %v1813 = vpop.f32.mrb[0].mxu0
    %v1814 = vpop.f32.mrb[0].mxu0
    %v1815 = vadd.f32 %v1267, %v1814
    %v1816 = vpop.f32.mrb[0].mxu0
    %1817 = vmatprep.mubr.bf16.mxu0 0
    %1818 = vmatmul.mubr.bf16.gmra.mrb[0].mxu0 %v1607
    %v1819 = vpop.f32.mrb[0].mxu0
    %v1820 = vadd.f32 %v1272, %v1819
    %v1821 = vpop.f32.mrb[0].mxu0
    %v1822 = vpop.f32.mrb[0].mxu0
    %v1823 = vadd.f32 %v1275, %v1822
    %v1824 = vpop.f32.mrb[0].mxu0
    %1825 = vmatprep.mubr.bf16.mxu0 0
    %1826 = vmatmul.mubr.bf16.gmra.mrb[0].mxu0 %v1610
    %v1827 = vpop.f32.mrb[0].mxu0
    %v1828 = vadd.f32 %v1280, %v1827
    %v1829 = vpop.f32.mrb[0].mxu0
    %v1830 = vpop.f32.mrb[0].mxu0
    %v1831 = vadd.f32 %v1283, %v1830
    %v1832 = vpop.f32.mrb[0].mxu0
    %1833 = vmatprep.mubr.bf16.mxu0 0
    %1834 = vmatmul.mubr.bf16.gmra.mrb[0].mxu0 %v1613
    %v1835 = vpop.f32.mrb[0].mxu0
    %v1836 = vadd.f32 %v1288, %v1835
    %v1837 = vpop.f32.mrb[0].mxu0
    %v1838 = vpop.f32.mrb[0].mxu0
    %v1839 = vadd.f32 %v1291, %v1838
    %v1840 = vpop.f32.mrb[0].mxu0
    %1841 = vmatprep.mubr.bf16.mxu0 0
    %1842 = vmatmul.mubr.bf16.gmra.mrb[0].mxu0 %v1616
    %v1843 = vpop.f32.mrb[0].mxu0
    %v1844 = vadd.f32 %v1296, %v1843
    %v1845 = vpop.f32.mrb[0].mxu0
    %v1846 = vpop.f32.mrb[0].mxu0
    %v1847 = vadd.f32 %v1299, %v1846
    %v1848 = vpop.f32.mrb[0].mxu0
    %1849 = vmatprep.mubr.bf16.mxu0 0
    %1850 = vmatmul.mubr.bf16.gmra.mrb[0].mxu0 %v1619
    %v1851 = vpop.f32.mrb[0].mxu0
    %v1852 = vadd.f32 %v1304, %v1851
    %v1853 = vpop.f32.mrb[0].mxu0
    %v1854 = vpop.f32.mrb[0].mxu0
    %v1855 = vadd.f32 %v1307, %v1854
    %v1856 = vpop.f32.mrb[0].mxu0
    %1857 = vmatprep.mubr.bf16.mxu0 0
    %1858 = vmatmul.mubr.bf16.gmra.mrb[0].mxu0 %v1622
    %v1859 = vpop.f32.mrb[0].mxu0
    %v1860 = vadd.f32 %v1312, %v1859
    %v1861 = vpop.f32.mrb[0].mxu0
    %v1862 = vpop.f32.mrb[0].mxu0
    %v1863 = vadd.f32 %v1315, %v1862
    %v1864 = vpop.f32.mrb[0].mxu0
    %1865 = vmatprep.mubr.bf16.mxu0 0
    %1866 = vmatmul.mubr.bf16.gmra.mrb[0].mxu0 %v1625
    %v1867 = vpop.f32.mrb[0].mxu0
    %v1868 = vadd.f32 %v1320, %v1867
    %v1869 = vpop.f32.mrb[0].mxu0
    %v1870 = vpop.f32.mrb[0].mxu0
    %v1871 = vadd.f32 %v1323, %v1870
    %v1872 = vpop.f32.mrb[0].mxu0
    %1873 = vmatprep.mubr.bf16.mxu0 0
    %1874 = vmatmul.mubr.bf16.gmra.mrb[0].mxu0 %v1628
    %v1875 = vpop.f32.mrb[0].mxu0
    %v1876 = vadd.f32 %v1328, %v1875
    %v1877 = vpop.f32.mrb[0].mxu0
    %v1878 = vpop.f32.mrb[0].mxu0
    %v1879 = vadd.f32 %v1331, %v1878
    %v1880 = vpop.f32.mrb[0].mxu0
    %1881 = vmatprep.mubr.bf16.mxu0 0
    %1882 = vmatmul.mubr.bf16.gmra.mrb[0].mxu0 %v1631
    %v1883 = vpop.f32.mrb[0].mxu0
    %v1884 = vadd.f32 %v1336, %v1883
    %v1885 = vpop.f32.mrb[0].mxu0
    %v1886 = vpop.f32.mrb[0].mxu0
    %v1887 = vadd.f32 %v1339, %v1886
    %v1888 = vpop.f32.mrb[0].mxu0
    %1889 = vmatprep.mubr.bf16.mxu0 0
    %1890 = vmatmul.mubr.bf16.gmra.mrb[0].mxu0 %v1634
    %v1891 = vpop.f32.mrb[0].mxu0
    %v1892 = vadd.f32 %v1344, %v1891
    %v1893 = vpop.f32.mrb[0].mxu0
    %v1894 = vpop.f32.mrb[0].mxu0
    %v1895 = vadd.f32 %v1347, %v1894
    %v1896 = vpop.f32.mrb[0].mxu0
    %1897 = vmatprep.mubr.bf16.mxu0 0
    %1898 = vmatmul.mubr.bf16.gmra.mrb[0].mxu0 %v1637
    %v1899 = vpop.f32.mrb[0].mxu0
    %v1900 = vadd.f32 %v1352, %v1899
    %v1901 = vpop.f32.mrb[0].mxu0
    %v1902 = vpop.f32.mrb[0].mxu0
    %v1903 = vadd.f32 %v1355, %v1902
    %v1904 = vpop.f32.mrb[0].mxu0
    %1905 = vmatprep.mubr.bf16.mxu0 0
    %1906 = vmatmul.mubr.bf16.gmra.mrb[0].mxu0 %v1640
    %v1907 = vpop.f32.mrb[0].mxu0
    %v1908 = vadd.f32 %v1360, %v1907
    %v1909 = vpop.f32.mrb[0].mxu0
    %v1910 = vpop.f32.mrb[0].mxu0
    %v1911 = vadd.f32 %v1363, %v1910
    %v1912 = vpop.f32.mrb[0].mxu0
    %1913 = vmatprep.mubr.bf16.mxu0 0
    %1914 = vmatmul.mubr.bf16.gmra.mrb[0].mxu0 %v1643
    %v1915 = vpop.f32.mrb[0].mxu0
    %v1916 = vadd.f32 %v1368, %v1915
    %v1917 = vpop.f32.mrb[0].mxu0
    %v1918 = vpop.f32.mrb[0].mxu0
    %v1919 = vadd.f32 %v1371, %v1918
    %v1920 = vpop.f32.mrb[0].mxu0
    %1921 = vmatprep.mubr.bf16.mxu0 0
    %1922 = vmatmul.mubr.bf16.gmra.mrb[0].mxu0 %v1646
    %v1923 = vpop.f32.mrb[0].mxu0
    %v1924 = vadd.f32 %v1376, %v1923
    %v1925 = vpop.f32.mrb[0].mxu0
    %v1926 = vpop.f32.mrb[0].mxu0
    %v1927 = vadd.f32 %v1379, %v1926
    %v1928 = vpop.f32.mrb[0].mxu0
    %1929 = vmatprep.mubr.bf16.mxu0 0
    %1930 = vmatmul.mubr.bf16.gmra.mrb[0].mxu0 %v1649
    %v1931 = vpop.f32.mrb[0].mxu0
    %v1932 = vadd.f32 %v1384, %v1931
    %v1933 = vpop.f32.mrb[0].mxu0
    %v1934 = vpop.f32.mrb[0].mxu0
    %v1935 = vadd.f32 %v1387, %v1934
    %v1936 = vpop.f32.mrb[0].mxu0
    %1937 = vmatprep.mubr.bf16.mxu0 0
    %1938 = vmatmul.mubr.bf16.gmra.mrb[0].mxu0 %v1652
    %v1939 = vpop.f32.mrb[0].mxu0
    %v1940 = vadd.f32 %v1392, %v1939
    %v1941 = vpop.f32.mrb[0].mxu0
    %v1942 = vpop.f32.mrb[0].mxu0
    %v1943 = vadd.f32 %v1395, %v1942
    %v1944 = vpop.f32.mrb[0].mxu0
    %1945 = vdwg.mxu0
    %vm1978 = vcmask 1042432
    %vm1979 = vcmask 1046532
    %vm1980 = vmor %vm1978, %vm1979
    %v1981 = vrot.slane %v24, 5
    %v1982 = vrot.slane %v1981, 4
    %v1983 = vrot.slane %v25, 5
    %v1984 = vsel %vm1980, %v1982, %v1983
    %v1985 = vrot.slane %v1983, 4
    %v1986 = vrot.slane %v26, 5
    %v1987 = vsel %vm1980, %v1985, %v1986
    %v1988 = vrot.slane %v27, 5
    %v1989 = vrot.slane %v1988, 4
    %v1990 = vrot.slane %v28, 5
    %v1991 = vsel %vm1980, %v1989, %v1990
    %v1992 = vrot.slane %v1990, 4
    %v1993 = vrot.slane %v29, 5
    %v1994 = vsel %vm1980, %v1992, %v1993
    %v1995 = vrot.slane %v30, 5
    %v1996 = vrot.slane %v1995, 4
    %v1997 = vrot.slane %v31, 5
    %v1998 = vsel %vm1980, %v1996, %v1997
    %v1999 = vrot.slane %v1997, 4
    %v2000 = vrot.slane %v32, 5
    %v2001 = vsel %vm1980, %v1999, %v2000
    %v2002 = vrot.slane %v33, 5
    %v2003 = vrot.slane %v2002, 4
    %v2004 = vrot.slane %v34, 5
    %v2005 = vsel %vm1980, %v2003, %v2004
    %v2006 = vrot.slane %v2004, 4
    %v2007 = vrot.slane %v35, 5
    %v2008 = vsel %vm1980, %v2006, %v2007
    %v2009 = vrot.slane %v36, 5
    %v2010 = vrot.slane %v2009, 4
    %v2011 = vrot.slane %v37, 5
    %v2012 = vsel %vm1980, %v2010, %v2011
    %v2013 = vrot.slane %v2011, 4
    %v2014 = vrot.slane %v38, 5
    %v2015 = vsel %vm1980, %v2013, %v2014
    %v2016 = vrot.slane %v39, 5
    %v2017 = vrot.slane %v2016, 4
    %v2018 = vrot.slane %v40, 5
    %v2019 = vsel %vm1980, %v2017, %v2018
    %v2020 = vrot.slane %v2018, 4
    %v2021 = vrot.slane %v41, 5
    %v2022 = vsel %vm1980, %v2020, %v2021
    %v2023 = vrot.slane %v42, 5
    %v2024 = vrot.slane %v2023, 4
    %v2025 = vrot.slane %v43, 5
    %v2026 = vsel %vm1980, %v2024, %v2025
    %v2027 = vrot.slane %v2025, 4
    %v2028 = vrot.slane %v44, 5
    %v2029 = vsel %vm1980, %v2027, %v2028
    %v2030 = vrot.slane %v45, 5
    %v2031 = vrot.slane %v2030, 4
    %v2032 = vrot.slane %v46, 5
    %v2033 = vsel %vm1980, %v2031, %v2032
    %v2034 = vrot.slane %v2032, 4
    %v2035 = vrot.slane %v47, 5
    %v2036 = vsel %vm1980, %v2034, %v2035
    %v2037 = vrot.slane %v48, 5
    %v2038 = vrot.slane %v2037, 4
    %v2039 = vrot.slane %v49, 5
    %v2040 = vsel %vm1980, %v2038, %v2039
    %v2041 = vrot.slane %v2039, 4
    %v2042 = vrot.slane %v50, 5
    %v2043 = vsel %vm1980, %v2041, %v2042
    %v2044 = vrot.slane %v51, 5
    %v2045 = vrot.slane %v2044, 4
    %v2046 = vrot.slane %v52, 5
    %v2047 = vsel %vm1980, %v2045, %v2046
    %v2048 = vrot.slane %v2046, 4
    %v2049 = vrot.slane %v53, 5
    %v2050 = vsel %vm1980, %v2048, %v2049
    %v2051 = vrot.slane %v54, 5
    %v2052 = vrot.slane %v2051, 4
    %v2053 = vrot.slane %v55, 5
    %v2054 = vsel %vm1980, %v2052, %v2053
    %v2055 = vrot.slane %v2053, 4
    %v2056 = vrot.slane %v56, 5
    %v2057 = vsel %vm1980, %v2055, %v2056
    %v2058 = vrot.slane %v57, 5
    %v2059 = vrot.slane %v2058, 4
    %v2060 = vrot.slane %v58, 5
    %v2061 = vsel %vm1980, %v2059, %v2060
    %v2062 = vrot.slane %v2060, 4
    %v2063 = vrot.slane %v59, 5
    %v2064 = vsel %vm1980, %v2062, %v2063
    %v2065 = vrot.slane %v60, 5
    %v2066 = vrot.slane %v2065, 4
    %v2067 = vrot.slane %v61, 5
    %v2068 = vsel %vm1980, %v2066, %v2067
    %v2069 = vrot.slane %v2067, 4
    %v2070 = vrot.slane %v62, 5
    %v2071 = vsel %vm1980, %v2069, %v2070
    %v2072 = vrot.slane %v63, 5
    %v2073 = vrot.slane %v2072, 4
    %v2074 = vrot.slane %v64, 5
    %v2075 = vsel %vm1980, %v2073, %v2074
    %v2076 = vrot.slane %v2074, 4
    %v2077 = vrot.slane %v65, 5
    %v2078 = vsel %vm1980, %v2076, %v2077
    %v2079 = vrot.slane %v66, 5
    %v2080 = vrot.slane %v2079, 4
    %v2081 = vrot.slane %v67, 5
    %v2082 = vsel %vm1980, %v2080, %v2081
    %v2083 = vrot.slane %v2081, 4
    %v2084 = vrot.slane %v68, 5
    %v2085 = vsel %vm1980, %v2083, %v2084
    %v2086 = vrot.slane %v69, 5
    %v2087 = vrot.slane %v2086, 4
    %v2088 = vrot.slane %v70, 5
    %v2089 = vsel %vm1980, %v2087, %v2088
    %v2090 = vrot.slane %v2088, 4
    %v2091 = vrot.slane %v71, 5
    %v2092 = vsel %vm1980, %v2090, %v2091
    %v2093 = vrot.slane %v78, 5
    %v2094 = vrot.slane %v2093, 4
    %v2095 = vrot.slane %v79, 5
    %v2096 = vsel %vm1980, %v2094, %v2095
    %v2097 = vrot.slane %v2095, 4
    %v2098 = vrot.slane %v80, 5
    %v2099 = vsel %vm1980, %v2097, %v2098
    %v2100 = vrot.slane %v81, 5
    %v2101 = vrot.slane %v2100, 4
    %v2102 = vrot.slane %v82, 5
    %v2103 = vsel %vm1980, %v2101, %v2102
    %v2104 = vrot.slane %v2102, 4
    %v2105 = vrot.slane %v83, 5
    %v2106 = vsel %vm1980, %v2104, %v2105
    %v2107 = vrot.slane %v84, 5
    %v2108 = vrot.slane %v2107, 4
    %v2109 = vrot.slane %v85, 5
    %v2110 = vsel %vm1980, %v2108, %v2109
    %v2111 = vrot.slane %v2109, 4
    %v2112 = vrot.slane %v86, 5
    %v2113 = vsel %vm1980, %v2111, %v2112
    %v2114 = vrot.slane %v87, 5
    %v2115 = vrot.slane %v2114, 4
    %v2116 = vrot.slane %v88, 5
    %v2117 = vsel %vm1980, %v2115, %v2116
    %v2118 = vrot.slane %v2116, 4
    %v2119 = vrot.slane %v89, 5
    %v2120 = vsel %vm1980, %v2118, %v2119
    %v2121 = vrot.slane %v90, 5
    %v2122 = vrot.slane %v2121, 4
    %v2123 = vrot.slane %v91, 5
    %v2124 = vsel %vm1980, %v2122, %v2123
    %v2125 = vrot.slane %v2123, 4
    %v2126 = vrot.slane %v92, 5
    %v2127 = vsel %vm1980, %v2125, %v2126
    %v2128 = vrot.slane %v93, 5
    %v2129 = vrot.slane %v2128, 4
    %v2130 = vrot.slane %v94, 5
    %v2131 = vsel %vm1980, %v2129, %v2130
    %v2132 = vrot.slane %v2130, 4
    %v2133 = vrot.slane %v95, 5
    %v2134 = vsel %vm1980, %v2132, %v2133
    %v2135 = vrot.slane %v96, 5
    %v2136 = vrot.slane %v2135, 4
    %v2137 = vrot.slane %v97, 5
    %v2138 = vsel %vm1980, %v2136, %v2137
    %v2139 = vrot.slane %v2137, 4
    %v2140 = vrot.slane %v98, 5
    %v2141 = vsel %vm1980, %v2139, %v2140
    %v2142 = vrot.slane %v99, 5
    %v2143 = vrot.slane %v2142, 4
    %v2144 = vrot.slane %v100, 5
    %v2145 = vsel %vm1980, %v2143, %v2144
    %v2146 = vrot.slane %v2144, 4
    %v2147 = vrot.slane %v101, 5
    %v2148 = vsel %vm1980, %v2146, %v2147
    %v2149 = vrot.slane %v102, 5
    %v2150 = vrot.slane %v2149, 4
    %v2151 = vrot.slane %v103, 5
    %v2152 = vsel %vm1980, %v2150, %v2151
    %v2153 = vrot.slane %v2151, 4
    %v2154 = vrot.slane %v104, 5
    %v2155 = vsel %vm1980, %v2153, %v2154
    %v2156 = vrot.slane %v105, 5
    %v2157 = vrot.slane %v2156, 4
    %v2158 = vrot.slane %v106, 5
    %v2159 = vsel %vm1980, %v2157, %v2158
    %v2160 = vrot.slane %v2158, 4
    %v2161 = vrot.slane %v107, 5
    %v2162 = vsel %vm1980, %v2160, %v2161
    %v2163 = vrot.slane %v108, 5
    %v2164 = vrot.slane %v2163, 4
    %v2165 = vrot.slane %v109, 5
    %v2166 = vsel %vm1980, %v2164, %v2165
    %v2167 = vrot.slane %v2165, 4
    %v2168 = vrot.slane %v110, 5
    %v2169 = vsel %vm1980, %v2167, %v2168
    %v2170 = vrot.slane %v111, 5
    %v2171 = vrot.slane %v2170, 4
    %v2172 = vrot.slane %v112, 5
    %v2173 = vsel %vm1980, %v2171, %v2172
    %v2174 = vrot.slane %v2172, 4
    %v2175 = vrot.slane %v113, 5
    %v2176 = vsel %vm1980, %v2174, %v2175
    %v2177 = vrot.slane %v114, 5
    %v2178 = vrot.slane %v2177, 4
    %v2179 = vrot.slane %v115, 5
    %v2180 = vsel %vm1980, %v2178, %v2179
    %v2181 = vrot.slane %v2179, 4
    %v2182 = vrot.slane %v116, 5
    %v2183 = vsel %vm1980, %v2181, %v2182
    %v2184 = vrot.slane %v117, 5
    %v2185 = vrot.slane %v2184, 4
    %v2186 = vrot.slane %v118, 5
    %v2187 = vsel %vm1980, %v2185, %v2186
    %v2188 = vrot.slane %v2186, 4
    %v2189 = vrot.slane %v119, 5
    %v2190 = vsel %vm1980, %v2188, %v2189
    %v2191 = vrot.slane %v120, 5
    %v2192 = vrot.slane %v2191, 4
    %v2193 = vrot.slane %v121, 5
    %v2194 = vsel %vm1980, %v2192, %v2193
    %v2195 = vrot.slane %v2193, 4
    %v2196 = vrot.slane %v122, 5
    %v2197 = vsel %vm1980, %v2195, %v2196
    %v2198 = vrot.slane %v123, 5
    %v2199 = vrot.slane %v2198, 4
    %v2200 = vrot.slane %v124, 5
    %v2201 = vsel %vm1980, %v2199, %v2200
    %v2202 = vrot.slane %v2200, 4
    %v2203 = vrot.slane %v125, 5
    %v2204 = vsel %vm1980, %v2202, %v2203
    %v2205 = vunpack.c.l.b16 %v1984
    %v2206 = vunpack.c.l.b16 %v1987
    %v2207 = vunpack.c.l.b16 %v1991
    %v2208 = vunpack.c.l.b16 %v1994
    %v2209 = vunpack.c.l.b16 %v1998
    %v2210 = vunpack.c.l.b16 %v2001
    %v2211 = vunpack.c.l.b16 %v2005
    %v2212 = vunpack.c.l.b16 %v2008
    %v2213 = vunpack.c.l.b16 %v2012
    %v2214 = vunpack.c.l.b16 %v2015
    %v2215 = vunpack.c.l.b16 %v2019
    %v2216 = vunpack.c.l.b16 %v2022
    %v2217 = vunpack.c.l.b16 %v2026
    %v2218 = vunpack.c.l.b16 %v2029
    %v2219 = vunpack.c.l.b16 %v2033
    %v2220 = vunpack.c.l.b16 %v2036
    %v2221 = vunpack.c.l.b16 %v2040
    %v2222 = vunpack.c.l.b16 %v2043
    %v2223 = vunpack.c.l.b16 %v2047
    %v2224 = vunpack.c.l.b16 %v2050
    %v2225 = vunpack.c.l.b16 %v2054
    %v2226 = vunpack.c.l.b16 %v2057
    %v2227 = vunpack.c.l.b16 %v2061
    %v2228 = vunpack.c.l.b16 %v2064
    %v2229 = vunpack.c.l.b16 %v2068
    %v2230 = vunpack.c.l.b16 %v2071
    %v2231 = vunpack.c.l.b16 %v2075
    %v2232 = vunpack.c.l.b16 %v2078
    %v2233 = vunpack.c.l.b16 %v2082
    %v2234 = vunpack.c.l.b16 %v2085
    %v2235 = vunpack.c.l.b16 %v2089
    %v2236 = vunpack.c.l.b16 %v2092
    %v2237 = vunpack.c.l.b16 %v2096
    %v2238 = vunpack.c.l.b16 %v2099
    %v2239 = vunpack.c.l.b16 %v2103
    %v2240 = vunpack.c.l.b16 %v2106
    %v2241 = vunpack.c.l.b16 %v2110
    %v2242 = vunpack.c.l.b16 %v2113
    %v2243 = vunpack.c.l.b16 %v2117
    %v2244 = vunpack.c.l.b16 %v2120
    %v2245 = vunpack.c.l.b16 %v2124
    %v2246 = vunpack.c.l.b16 %v2127
    %v2247 = vunpack.c.l.b16 %v2131
    %v2248 = vunpack.c.l.b16 %v2134
    %v2249 = vunpack.c.l.b16 %v2138
    %v2250 = vunpack.c.l.b16 %v2141
    %v2251 = vunpack.c.l.b16 %v2145
    %v2252 = vunpack.c.l.b16 %v2148
    %v2253 = vunpack.c.l.b16 %v2152
    %v2254 = vunpack.c.l.b16 %v2155
    %v2255 = vunpack.c.l.b16 %v2159
    %v2256 = vunpack.c.l.b16 %v2162
    %v2257 = vunpack.c.l.b16 %v2166
    %v2258 = vunpack.c.l.b16 %v2169
    %v2259 = vunpack.c.l.b16 %v2173
    %v2260 = vunpack.c.l.b16 %v2176
    %v2261 = vunpack.c.l.b16 %v2180
    %v2262 = vunpack.c.l.b16 %v2183
    %v2263 = vunpack.c.l.b16 %v2187
    %v2264 = vunpack.c.l.b16 %v2190
    %v2265 = vunpack.c.l.b16 %v2194
    %v2266 = vunpack.c.l.b16 %v2197
    %v2267 = vunpack.c.l.b16 %v2201
    %v2268 = vunpack.c.l.b16 %v2204
    %v2269 = vpack.c.b16 %v2206, %v2205
    %v2270 = vpack.c.b16 %v2208, %v2207
    %v2271 = vpack.c.b16 %v2210, %v2209
    %v2272 = vpack.c.b16 %v2212, %v2211
    %v2273 = vpack.c.b16 %v2214, %v2213
    %v2274 = vpack.c.b16 %v2216, %v2215
    %v2275 = vpack.c.b16 %v2218, %v2217
    %v2276 = vpack.c.b16 %v2220, %v2219
    %v2277 = vpack.c.b16 %v2222, %v2221
    %v2278 = vpack.c.b16 %v2224, %v2223
    %v2279 = vpack.c.b16 %v2226, %v2225
    %v2280 = vpack.c.b16 %v2228, %v2227
    %v2281 = vpack.c.b16 %v2230, %v2229
    %v2282 = vpack.c.b16 %v2232, %v2231
    %v2283 = vpack.c.b16 %v2234, %v2233
    %v2284 = vpack.c.b16 %v2236, %v2235
    %v2285 = vpack.c.b16 %v2238, %v2237
    %v2286 = vpack.c.b16 %v2240, %v2239
    %v2287 = vpack.c.b16 %v2242, %v2241
    %v2288 = vpack.c.b16 %v2244, %v2243
    %v2289 = vpack.c.b16 %v2246, %v2245
    %v2290 = vpack.c.b16 %v2248, %v2247
    %v2291 = vpack.c.b16 %v2250, %v2249
    %v2292 = vpack.c.b16 %v2252, %v2251
    %v2293 = vpack.c.b16 %v2254, %v2253
    %v2294 = vpack.c.b16 %v2256, %v2255
    %v2295 = vpack.c.b16 %v2258, %v2257
    %v2296 = vpack.c.b16 %v2260, %v2259
    %v2297 = vpack.c.b16 %v2262, %v2261
    %v2298 = vpack.c.b16 %v2264, %v2263
    %v2299 = vpack.c.b16 %v2266, %v2265
    %v2300 = vpack.c.b16 %v2268, %v2267
    %v2302 = vsel %vm1008, %v2269, 0
    %v2305 = vsel %vm1008, %v2270, 0
    %v2308 = vsel %vm1008, %v2271, 0
    %v2311 = vsel %vm1008, %v2272, 0
    %v2314 = vsel %vm1008, %v2273, 0
    %v2317 = vsel %vm1008, %v2274, 0
    %v2320 = vsel %vm1008, %v2275, 0
    %v2323 = vsel %vm1008, %v2276, 0
    %v2326 = vsel %vm1008, %v2277, 0
    %v2329 = vsel %vm1008, %v2278, 0
    %v2332 = vsel %vm1008, %v2279, 0
    %v2335 = vsel %vm1008, %v2280, 0
    %v2338 = vsel %vm1008, %v2281, 0
    %v2341 = vsel %vm1008, %v2282, 0
    %v2344 = vsel %vm1008, %v2283, 0
    %v2347 = vsel %vm1008, %v2284, 0
    %v2350 = vsel %vm1008, %v2285, 0
    %v2353 = vsel %vm1008, %v2286, 0
    %v2356 = vsel %vm1008, %v2287, 0
    %v2359 = vsel %vm1008, %v2288, 0
    %v2362 = vsel %vm1008, %v2289, 0
    %v2365 = vsel %vm1008, %v2290, 0
    %v2368 = vsel %vm1008, %v2291, 0
    %v2371 = vsel %vm1008, %v2292, 0
    %v2374 = vsel %vm1008, %v2293, 0
    %v2377 = vsel %vm1008, %v2294, 0
    %v2380 = vsel %vm1008, %v2295, 0
    %v2383 = vsel %vm1008, %v2296, 0
    %v2386 = vsel %vm1008, %v2297, 0
    %v2389 = vsel %vm1008, %v2298, 0
    %v2392 = vsel %vm1008, %v2299, 0
    %v2395 = vsel %vm1008, %v2300, 0
    %v2398 = vsel %vm1105, %v134, 0
    %2400 = vmatprep.subr.bf16.mxu0 0
    %2401 = vmatpush1.bf16.msra.mxu0 %v2398
    %2402 = vmatprep.subr.bf16.mxu0 0
    %2403 = vmatpush1.bf16.msra.mxu0 0
    %2404 = vmatprep.subr.bf16.mxu0 0
    %2405 = vmatpush1.bf16.msra.mxu0 0
    %2406 = vmatprep.subr.bf16.mxu0 0
    %2407 = vmatpush1.bf16.msra.mxu0 0
    %2408 = vmatprep.subr.bf16.mxu0 0
    %2409 = vmatpush1.bf16.msra.mxu0 0
    %2410 = vmatprep.subr.bf16.mxu0 0
    %2411 = vmatpush1.bf16.msra.mxu0 0
    %2412 = vmatprep.subr.bf16.mxu0 0
    %2413 = vmatpush1.bf16.msra.mxu0 0
    %2414 = vmatprep.subr.bf16.mxu0 0
    %2415 = vmatpush1.bf16.msra.mxu0 0
    %2416 = vmatprep.subr.bf16.mxu0 0
    %2417 = vmatpush1.bf16.msra.mxu0 0
    %2418 = vmatprep.subr.bf16.mxu0 0
    %2419 = vmatpush1.bf16.msra.mxu0 0
    %2420 = vmatprep.subr.bf16.mxu0 0
    %2421 = vmatpush1.bf16.msra.mxu0 0
    %2422 = vmatprep.subr.bf16.mxu0 0
    %2423 = vmatpush1.bf16.msra.mxu0 0
    %2424 = vmatprep.subr.bf16.mxu0 0
    %2425 = vmatpush1.bf16.msra.mxu0 0
    %2426 = vmatprep.subr.bf16.mxu0 0
    %2427 = vmatpush1.bf16.msra.mxu0 0
    %2428 = vmatprep.subr.bf16.mxu0 0
    %2429 = vmatpush1.bf16.msra.mxu0 0
    %2430 = vmatprep.subr.bf16.mxu0 0
    %2431 = vmatpush1.bf16.msra.mxu0 0
    %2432 = vmatprep.mubr.bf16.mxu0 0
    %2433 = vmatmul.mubr.bf16.gmra.mrb[0].mxu0 %v2302
    %v2434 = vpop.f32.mrb[0].mxu0
    %v2435 = vadd.f32 0.0, %v2434
    %v2436 = vpop.f32.mrb[0].mxu0
    %v2437 = vpop.f32.mrb[0].mxu0
    %v2438 = vadd.f32 0.0, %v2437
    %v2439 = vpop.f32.mrb[0].mxu0
    %2440 = vmatprep.mubr.bf16.mxu0 0
    %2441 = vmatmul.mubr.bf16.gmra.mrb[0].mxu0 %v2305
    %v2442 = vpop.f32.mrb[0].mxu0
    %v2443 = vadd.f32 0.0, %v2442
    %v2444 = vpop.f32.mrb[0].mxu0
    %v2445 = vpop.f32.mrb[0].mxu0
    %v2446 = vadd.f32 0.0, %v2445
    %v2447 = vpop.f32.mrb[0].mxu0
    %2448 = vmatprep.mubr.bf16.mxu0 0
    %2449 = vmatmul.mubr.bf16.gmra.mrb[0].mxu0 %v2308
    %v2450 = vpop.f32.mrb[0].mxu0
    %v2451 = vadd.f32 0.0, %v2450
    %v2452 = vpop.f32.mrb[0].mxu0
    %v2453 = vpop.f32.mrb[0].mxu0
    %v2454 = vadd.f32 0.0, %v2453
    %v2455 = vpop.f32.mrb[0].mxu0
    %2456 = vmatprep.mubr.bf16.mxu0 0
    %2457 = vmatmul.mubr.bf16.gmra.mrb[0].mxu0 %v2311
    %v2458 = vpop.f32.mrb[0].mxu0
    %v2459 = vadd.f32 0.0, %v2458
    %v2460 = vpop.f32.mrb[0].mxu0
    %v2461 = vpop.f32.mrb[0].mxu0
    %v2462 = vadd.f32 0.0, %v2461
    %v2463 = vpop.f32.mrb[0].mxu0
    %2464 = vmatprep.mubr.bf16.mxu0 0
    %2465 = vmatmul.mubr.bf16.gmra.mrb[0].mxu0 %v2314
    %v2466 = vpop.f32.mrb[0].mxu0
    %v2467 = vadd.f32 0.0, %v2466
    %v2468 = vpop.f32.mrb[0].mxu0
    %v2469 = vpop.f32.mrb[0].mxu0
    %v2470 = vadd.f32 0.0, %v2469
    %v2471 = vpop.f32.mrb[0].mxu0
    %2472 = vmatprep.mubr.bf16.mxu0 0
    %2473 = vmatmul.mubr.bf16.gmra.mrb[0].mxu0 %v2317
    %v2474 = vpop.f32.mrb[0].mxu0
    %v2475 = vadd.f32 0.0, %v2474
    %v2476 = vpop.f32.mrb[0].mxu0
    %v2477 = vpop.f32.mrb[0].mxu0
    %v2478 = vadd.f32 0.0, %v2477
    %v2479 = vpop.f32.mrb[0].mxu0
    %2480 = vmatprep.mubr.bf16.mxu0 0
    %2481 = vmatmul.mubr.bf16.gmra.mrb[0].mxu0 %v2320
    %v2482 = vpop.f32.mrb[0].mxu0
    %v2483 = vadd.f32 0.0, %v2482
    %v2484 = vpop.f32.mrb[0].mxu0
    %v2485 = vpop.f32.mrb[0].mxu0
    %v2486 = vadd.f32 0.0, %v2485
    %v2487 = vpop.f32.mrb[0].mxu0
    %2488 = vmatprep.mubr.bf16.mxu0 0
    %2489 = vmatmul.mubr.bf16.gmra.mrb[0].mxu0 %v2323
    %v2490 = vpop.f32.mrb[0].mxu0
    %v2491 = vadd.f32 0.0, %v2490
    %v2492 = vpop.f32.mrb[0].mxu0
    %v2493 = vpop.f32.mrb[0].mxu0
    %v2494 = vadd.f32 0.0, %v2493
    %v2495 = vpop.f32.mrb[0].mxu0
    %2496 = vmatprep.mubr.bf16.mxu0 0
    %2497 = vmatmul.mubr.bf16.gmra.mrb[0].mxu0 %v2326
    %v2498 = vpop.f32.mrb[0].mxu0
    %v2499 = vadd.f32 0.0, %v2498
    %v2500 = vpop.f32.mrb[0].mxu0
    %v2501 = vpop.f32.mrb[0].mxu0
    %v2502 = vadd.f32 0.0, %v2501
    %v2503 = vpop.f32.mrb[0].mxu0
    %2504 = vmatprep.mubr.bf16.mxu0 0
    %2505 = vmatmul.mubr.bf16.gmra.mrb[0].mxu0 %v2329
    %v2506 = vpop.f32.mrb[0].mxu0
    %v2507 = vadd.f32 0.0, %v2506
    %v2508 = vpop.f32.mrb[0].mxu0
    %v2509 = vpop.f32.mrb[0].mxu0
    %v2510 = vadd.f32 0.0, %v2509
    %v2511 = vpop.f32.mrb[0].mxu0
    %2512 = vmatprep.mubr.bf16.mxu0 0
    %2513 = vmatmul.mubr.bf16.gmra.mrb[0].mxu0 %v2332
    %v2514 = vpop.f32.mrb[0].mxu0
    %v2515 = vadd.f32 0.0, %v2514
    %v2516 = vpop.f32.mrb[0].mxu0
    %v2517 = vpop.f32.mrb[0].mxu0
    %v2518 = vadd.f32 0.0, %v2517
    %v2519 = vpop.f32.mrb[0].mxu0
    %2520 = vmatprep.mubr.bf16.mxu0 0
    %2521 = vmatmul.mubr.bf16.gmra.mrb[0].mxu0 %v2335
    %v2522 = vpop.f32.mrb[0].mxu0
    %v2523 = vadd.f32 0.0, %v2522
    %v2524 = vpop.f32.mrb[0].mxu0
    %v2525 = vpop.f32.mrb[0].mxu0
    %v2526 = vadd.f32 0.0, %v2525
    %v2527 = vpop.f32.mrb[0].mxu0
    %2528 = vmatprep.mubr.bf16.mxu0 0
    %2529 = vmatmul.mubr.bf16.gmra.mrb[0].mxu0 %v2338
    %v2530 = vpop.f32.mrb[0].mxu0
    %v2531 = vadd.f32 0.0, %v2530
    %v2532 = vpop.f32.mrb[0].mxu0
    %v2533 = vpop.f32.mrb[0].mxu0
    %v2534 = vadd.f32 0.0, %v2533
    %v2535 = vpop.f32.mrb[0].mxu0
    %2536 = vmatprep.mubr.bf16.mxu0 0
    %2537 = vmatmul.mubr.bf16.gmra.mrb[0].mxu0 %v2341
    %v2538 = vpop.f32.mrb[0].mxu0
    %v2539 = vadd.f32 0.0, %v2538
    %v2540 = vpop.f32.mrb[0].mxu0
    %v2541 = vpop.f32.mrb[0].mxu0
    %v2542 = vadd.f32 0.0, %v2541
    %v2543 = vpop.f32.mrb[0].mxu0
    %2544 = vmatprep.mubr.bf16.mxu0 0
    %2545 = vmatmul.mubr.bf16.gmra.mrb[0].mxu0 %v2344
    %v2546 = vpop.f32.mrb[0].mxu0
    %v2547 = vadd.f32 0.0, %v2546
    %v2548 = vpop.f32.mrb[0].mxu0
    %v2549 = vpop.f32.mrb[0].mxu0
    %v2550 = vadd.f32 0.0, %v2549
    %v2551 = vpop.f32.mrb[0].mxu0
    %2552 = vmatprep.mubr.bf16.mxu0 0
    %2553 = vmatmul.mubr.bf16.gmra.mrb[0].mxu0 %v2347
    %v2554 = vpop.f32.mrb[0].mxu0
    %v2555 = vadd.f32 0.0, %v2554
    %v2556 = vpop.f32.mrb[0].mxu0
    %v2557 = vpop.f32.mrb[0].mxu0
    %v2558 = vadd.f32 0.0, %v2557
    %v2559 = vpop.f32.mrb[0].mxu0
    %2560 = vmatprep.mubr.bf16.mxu0 0
    %2561 = vmatmul.mubr.bf16.gmra.mrb[0].mxu0 %v2350
    %v2562 = vpop.f32.mrb[0].mxu0
    %v2563 = vadd.f32 0.0, %v2562
    %v2564 = vpop.f32.mrb[0].mxu0
    %v2565 = vpop.f32.mrb[0].mxu0
    %v2566 = vadd.f32 0.0, %v2565
    %v2567 = vpop.f32.mrb[0].mxu0
    %2568 = vmatprep.mubr.bf16.mxu0 0
    %2569 = vmatmul.mubr.bf16.gmra.mrb[0].mxu0 %v2353
    %v2570 = vpop.f32.mrb[0].mxu0
    %v2571 = vadd.f32 0.0, %v2570
    %v2572 = vpop.f32.mrb[0].mxu0
    %v2573 = vpop.f32.mrb[0].mxu0
    %v2574 = vadd.f32 0.0, %v2573
    %v2575 = vpop.f32.mrb[0].mxu0
    %2576 = vmatprep.mubr.bf16.mxu0 0
    %2577 = vmatmul.mubr.bf16.gmra.mrb[0].mxu0 %v2356
    %v2578 = vpop.f32.mrb[0].mxu0
    %v2579 = vadd.f32 0.0, %v2578
    %v2580 = vpop.f32.mrb[0].mxu0
    %v2581 = vpop.f32.mrb[0].mxu0
    %v2582 = vadd.f32 0.0, %v2581
    %v2583 = vpop.f32.mrb[0].mxu0
    %2584 = vmatprep.mubr.bf16.mxu0 0
    %2585 = vmatmul.mubr.bf16.gmra.mrb[0].mxu0 %v2359
    %v2586 = vpop.f32.mrb[0].mxu0
    %v2587 = vadd.f32 0.0, %v2586
    %v2588 = vpop.f32.mrb[0].mxu0
    %v2589 = vpop.f32.mrb[0].mxu0
    %v2590 = vadd.f32 0.0, %v2589
    %v2591 = vpop.f32.mrb[0].mxu0
    %2592 = vmatprep.mubr.bf16.mxu0 0
    %2593 = vmatmul.mubr.bf16.gmra.mrb[0].mxu0 %v2362
    %v2594 = vpop.f32.mrb[0].mxu0
    %v2595 = vadd.f32 0.0, %v2594
    %v2596 = vpop.f32.mrb[0].mxu0
    %v2597 = vpop.f32.mrb[0].mxu0
    %v2598 = vadd.f32 0.0, %v2597
    %v2599 = vpop.f32.mrb[0].mxu0
    %2600 = vmatprep.mubr.bf16.mxu0 0
    %2601 = vmatmul.mubr.bf16.gmra.mrb[0].mxu0 %v2365
    %v2602 = vpop.f32.mrb[0].mxu0
    %v2603 = vadd.f32 0.0, %v2602
    %v2604 = vpop.f32.mrb[0].mxu0
    %v2605 = vpop.f32.mrb[0].mxu0
    %v2606 = vadd.f32 0.0, %v2605
    %v2607 = vpop.f32.mrb[0].mxu0
    %2608 = vmatprep.mubr.bf16.mxu0 0
    %2609 = vmatmul.mubr.bf16.gmra.mrb[0].mxu0 %v2368
    %v2610 = vpop.f32.mrb[0].mxu0
    %v2611 = vadd.f32 0.0, %v2610
    %v2612 = vpop.f32.mrb[0].mxu0
    %v2613 = vpop.f32.mrb[0].mxu0
    %v2614 = vadd.f32 0.0, %v2613
    %v2615 = vpop.f32.mrb[0].mxu0
    %2616 = vmatprep.mubr.bf16.mxu0 0
    %2617 = vmatmul.mubr.bf16.gmra.mrb[0].mxu0 %v2371
    %v2618 = vpop.f32.mrb[0].mxu0
    %v2619 = vadd.f32 0.0, %v2618
    %v2620 = vpop.f32.mrb[0].mxu0
    %v2621 = vpop.f32.mrb[0].mxu0
    %v2622 = vadd.f32 0.0, %v2621
    %v2623 = vpop.f32.mrb[0].mxu0
    %2624 = vmatprep.mubr.bf16.mxu0 0
    %2625 = vmatmul.mubr.bf16.gmra.mrb[0].mxu0 %v2374
    %v2626 = vpop.f32.mrb[0].mxu0
    %v2627 = vadd.f32 0.0, %v2626
    %v2628 = vpop.f32.mrb[0].mxu0
    %v2629 = vpop.f32.mrb[0].mxu0
    %v2630 = vadd.f32 0.0, %v2629
    %v2631 = vpop.f32.mrb[0].mxu0
    %2632 = vmatprep.mubr.bf16.mxu0 0
    %2633 = vmatmul.mubr.bf16.gmra.mrb[0].mxu0 %v2377
    %v2634 = vpop.f32.mrb[0].mxu0
    %v2635 = vadd.f32 0.0, %v2634
    %v2636 = vpop.f32.mrb[0].mxu0
    %v2637 = vpop.f32.mrb[0].mxu0
    %v2638 = vadd.f32 0.0, %v2637
    %v2639 = vpop.f32.mrb[0].mxu0
    %2640 = vmatprep.mubr.bf16.mxu0 0
    %2641 = vmatmul.mubr.bf16.gmra.mrb[0].mxu0 %v2380
    %v2642 = vpop.f32.mrb[0].mxu0
    %v2643 = vadd.f32 0.0, %v2642
    %v2644 = vpop.f32.mrb[0].mxu0
    %v2645 = vpop.f32.mrb[0].mxu0
    %v2646 = vadd.f32 0.0, %v2645
    %v2647 = vpop.f32.mrb[0].mxu0
    %2648 = vmatprep.mubr.bf16.mxu0 0
    %2649 = vmatmul.mubr.bf16.gmra.mrb[0].mxu0 %v2383
    %v2650 = vpop.f32.mrb[0].mxu0
    %v2651 = vadd.f32 0.0, %v2650
    %v2652 = vpop.f32.mrb[0].mxu0
    %v2653 = vpop.f32.mrb[0].mxu0
    %v2654 = vadd.f32 0.0, %v2653
    %v2655 = vpop.f32.mrb[0].mxu0
    %2656 = vmatprep.mubr.bf16.mxu0 0
    %2657 = vmatmul.mubr.bf16.gmra.mrb[0].mxu0 %v2386
    %v2658 = vpop.f32.mrb[0].mxu0
    %v2659 = vadd.f32 0.0, %v2658
    %v2660 = vpop.f32.mrb[0].mxu0
    %v2661 = vpop.f32.mrb[0].mxu0
    %v2662 = vadd.f32 0.0, %v2661
    %v2663 = vpop.f32.mrb[0].mxu0
    %2664 = vmatprep.mubr.bf16.mxu0 0
    %2665 = vmatmul.mubr.bf16.gmra.mrb[0].mxu0 %v2389
    %v2666 = vpop.f32.mrb[0].mxu0
    %v2667 = vadd.f32 0.0, %v2666
    %v2668 = vpop.f32.mrb[0].mxu0
    %v2669 = vpop.f32.mrb[0].mxu0
    %v2670 = vadd.f32 0.0, %v2669
    %v2671 = vpop.f32.mrb[0].mxu0
    %2672 = vmatprep.mubr.bf16.mxu0 0
    %2673 = vmatmul.mubr.bf16.gmra.mrb[0].mxu0 %v2392
    %v2674 = vpop.f32.mrb[0].mxu0
    %v2675 = vadd.f32 0.0, %v2674
    %v2676 = vpop.f32.mrb[0].mxu0
    %v2677 = vpop.f32.mrb[0].mxu0
    %v2678 = vadd.f32 0.0, %v2677
    %v2679 = vpop.f32.mrb[0].mxu0
    %2680 = vmatprep.mubr.bf16.mxu0 0
    %2681 = vmatmul.mubr.bf16.gmra.mrb[0].mxu0 %v2395
    %v2682 = vpop.f32.mrb[0].mxu0
    %v2683 = vadd.f32 0.0, %v2682
    %v2684 = vpop.f32.mrb[0].mxu0
    %v2685 = vpop.f32.mrb[0].mxu0
    %v2686 = vadd.f32 0.0, %v2685
    %v2687 = vpop.f32.mrb[0].mxu0
    %2688 = vdwg.mxu0
    %v2689 = vadd.f32 %v1692, %v2435
    %v2690 = vadd.f32 %v1695, %v2438
    %v2691 = vadd.f32 %v1700, %v2443
    %v2692 = vadd.f32 %v1703, %v2446
    %v2693 = vadd.f32 %v1708, %v2451
    %v2694 = vadd.f32 %v1711, %v2454
    %v2695 = vadd.f32 %v1716, %v2459
    %v2696 = vadd.f32 %v1719, %v2462
    %v2697 = vadd.f32 %v1724, %v2467
    %v2698 = vadd.f32 %v1727, %v2470
    %v2699 = vadd.f32 %v1732, %v2475
    %v2700 = vadd.f32 %v1735, %v2478
    %v2701 = vadd.f32 %v1740, %v2483
    %v2702 = vadd.f32 %v1743, %v2486
    %v2703 = vadd.f32 %v1748, %v2491
    %v2704 = vadd.f32 %v1751, %v2494
    %v2705 = vadd.f32 %v1756, %v2499
    %v2706 = vadd.f32 %v1759, %v2502
    %v2707 = vadd.f32 %v1764, %v2507
    %v2708 = vadd.f32 %v1767, %v2510
    %v2709 = vadd.f32 %v1772, %v2515
    %v2710 = vadd.f32 %v1775, %v2518
    %v2711 = vadd.f32 %v1780, %v2523
    %v2712 = vadd.f32 %v1783, %v2526
    %v2713 = vadd.f32 %v1788, %v2531
    %v2714 = vadd.f32 %v1791, %v2534
    %v2715 = vadd.f32 %v1796, %v2539
    %v2716 = vadd.f32 %v1799, %v2542
    %v2717 = vadd.f32 %v1804, %v2547
    %v2718 = vadd.f32 %v1807, %v2550
    %v2719 = vadd.f32 %v1812, %v2555
    %v2720 = vadd.f32 %v1815, %v2558
    %v2721 = vadd.f32 %v1820, %v2563
    %v2722 = vadd.f32 %v1823, %v2566
    %v2723 = vadd.f32 %v1828, %v2571
    %v2724 = vadd.f32 %v1831, %v2574
    %v2725 = vadd.f32 %v1836, %v2579
    %v2726 = vadd.f32 %v1839, %v2582
    %v2727 = vadd.f32 %v1844, %v2587
    %v2728 = vadd.f32 %v1847, %v2590
    %v2729 = vadd.f32 %v1852, %v2595
    %v2730 = vadd.f32 %v1855, %v2598
    %v2731 = vadd.f32 %v1860, %v2603
    %v2732 = vadd.f32 %v1863, %v2606
    %v2733 = vadd.f32 %v1868, %v2611
    %v2734 = vadd.f32 %v1871, %v2614
    %v2735 = vadd.f32 %v1876, %v2619
    %v2736 = vadd.f32 %v1879, %v2622
    %v2737 = vadd.f32 %v1884, %v2627
    %v2738 = vadd.f32 %v1887, %v2630
    %v2739 = vadd.f32 %v1892, %v2635
    %v2740 = vadd.f32 %v1895, %v2638
    %v2741 = vadd.f32 %v1900, %v2643
    %v2742 = vadd.f32 %v1903, %v2646
    %v2743 = vadd.f32 %v1908, %v2651
    %v2744 = vadd.f32 %v1911, %v2654
    %v2745 = vadd.f32 %v1916, %v2659
    %v2746 = vadd.f32 %v1919, %v2662
    %v2747 = vadd.f32 %v1924, %v2667
    %v2748 = vadd.f32 %v1927, %v2670
    %v2749 = vadd.f32 %v1932, %v2675
    %v2750 = vadd.f32 %v1935, %v2678
    %v2751 = vadd.f32 %v1940, %v2683
    %v2752 = vadd.f32 %v1943, %v2686
    %v2757 = vunpack.c.l.b16 %v72
    %v2758 = vunpack.c.l.b16 %v73
    %v2759 = vunpack.c.l.b16 %v126
    %v2760 = vunpack.c.l.b16 %v127
    %v2761 = vpack.c.b16 %v2758, %v2757
    %v2762 = vpack.c.b16 %v2760, %v2759
    %v2764 = vsel %vm1008, %v2761, 0
    %v2767 = vsel %vm1008, %v2762, 0
    %v2770 = vsel %vm1105, %v135, 0
    %2772 = vmatprep.subr.bf16.mxu0 0
    %2773 = vmatpush1.bf16.msra.mxu0 %v2770
    %2774 = vmatprep.subr.bf16.mxu0 0
    %2775 = vmatpush1.bf16.msra.mxu0 0
    %2776 = vmatprep.subr.bf16.mxu0 0
    %2777 = vmatpush1.bf16.msra.mxu0 0
    %2778 = vmatprep.subr.bf16.mxu0 0
    %2779 = vmatpush1.bf16.msra.mxu0 0
    %2780 = vmatprep.subr.bf16.mxu0 0
    %2781 = vmatpush1.bf16.msra.mxu0 0
    %2782 = vmatprep.subr.bf16.mxu0 0
    %2783 = vmatpush1.bf16.msra.mxu0 0
    %2784 = vmatprep.subr.bf16.mxu0 0
    %2785 = vmatpush1.bf16.msra.mxu0 0
    %2786 = vmatprep.subr.bf16.mxu0 0
    %2787 = vmatpush1.bf16.msra.mxu0 0
    %2788 = vmatprep.subr.bf16.mxu0 0
    %2789 = vmatpush1.bf16.msra.mxu0 0
    %2790 = vmatprep.subr.bf16.mxu0 0
    %2791 = vmatpush1.bf16.msra.mxu0 0
    %2792 = vmatprep.subr.bf16.mxu0 0
    %2793 = vmatpush1.bf16.msra.mxu0 0
    %2794 = vmatprep.subr.bf16.mxu0 0
    %2795 = vmatpush1.bf16.msra.mxu0 0
    %2796 = vmatprep.subr.bf16.mxu0 0
    %2797 = vmatpush1.bf16.msra.mxu0 0
    %2798 = vmatprep.subr.bf16.mxu0 0
    %2799 = vmatpush1.bf16.msra.mxu0 0
    %2800 = vmatprep.subr.bf16.mxu0 0
    %2801 = vmatpush1.bf16.msra.mxu0 0
    %2802 = vmatprep.subr.bf16.mxu0 0
    %2803 = vmatpush1.bf16.msra.mxu0 0
    %2804 = vmatprep.mubr.bf16.mxu0 0
    %2805 = vmatmul.mubr.bf16.gmra.mrb[0].mxu0 %v1562
    %v2806 = vpop.f32.mrb[0].mxu0
    %v2807 = vadd.f32 0.0, %v2806
    %v2808 = vpop.f32.mrb[0].mxu0
    %v2809 = vpop.f32.mrb[0].mxu0
    %v2810 = vadd.f32 0.0, %v2809
    %v2811 = vpop.f32.mrb[0].mxu0
    %2812 = vmatprep.mubr.bf16.mxu0 0
    %2813 = vmatmul.mubr.bf16.gmra.mrb[0].mxu0 %v1565
    %v2814 = vpop.f32.mrb[0].mxu0
    %v2815 = vadd.f32 0.0, %v2814
    %v2816 = vpop.f32.mrb[0].mxu0
    %v2817 = vpop.f32.mrb[0].mxu0
    %v2818 = vadd.f32 0.0, %v2817
    %v2819 = vpop.f32.mrb[0].mxu0
    %2820 = vmatprep.mubr.bf16.mxu0 0
    %2821 = vmatmul.mubr.bf16.gmra.mrb[0].mxu0 %v1568
    %v2822 = vpop.f32.mrb[0].mxu0
    %v2823 = vadd.f32 0.0, %v2822
    %v2824 = vpop.f32.mrb[0].mxu0
    %v2825 = vpop.f32.mrb[0].mxu0
    %v2826 = vadd.f32 0.0, %v2825
    %v2827 = vpop.f32.mrb[0].mxu0
    %2828 = vmatprep.mubr.bf16.mxu0 0
    %2829 = vmatmul.mubr.bf16.gmra.mrb[0].mxu0 %v1571
    %v2830 = vpop.f32.mrb[0].mxu0
    %v2831 = vadd.f32 0.0, %v2830
    %v2832 = vpop.f32.mrb[0].mxu0
    %v2833 = vpop.f32.mrb[0].mxu0
    %v2834 = vadd.f32 0.0, %v2833
    %v2835 = vpop.f32.mrb[0].mxu0
    %2836 = vmatprep.mubr.bf16.mxu0 0
    %2837 = vmatmul.mubr.bf16.gmra.mrb[0].mxu0 %v1574
    %v2838 = vpop.f32.mrb[0].mxu0
    %v2839 = vadd.f32 0.0, %v2838
    %v2840 = vpop.f32.mrb[0].mxu0
    %v2841 = vpop.f32.mrb[0].mxu0
    %v2842 = vadd.f32 0.0, %v2841
    %v2843 = vpop.f32.mrb[0].mxu0
    %2844 = vmatprep.mubr.bf16.mxu0 0
    %2845 = vmatmul.mubr.bf16.gmra.mrb[0].mxu0 %v1577
    %v2846 = vpop.f32.mrb[0].mxu0
    %v2847 = vadd.f32 0.0, %v2846
    %v2848 = vpop.f32.mrb[0].mxu0
    %v2849 = vpop.f32.mrb[0].mxu0
    %v2850 = vadd.f32 0.0, %v2849
    %v2851 = vpop.f32.mrb[0].mxu0
    %2852 = vmatprep.mubr.bf16.mxu0 0
    %2853 = vmatmul.mubr.bf16.gmra.mrb[0].mxu0 %v1580
    %v2854 = vpop.f32.mrb[0].mxu0
    %v2855 = vadd.f32 0.0, %v2854
    %v2856 = vpop.f32.mrb[0].mxu0
    %v2857 = vpop.f32.mrb[0].mxu0
    %v2858 = vadd.f32 0.0, %v2857
    %v2859 = vpop.f32.mrb[0].mxu0
    %2860 = vmatprep.mubr.bf16.mxu0 0
    %2861 = vmatmul.mubr.bf16.gmra.mrb[0].mxu0 %v1583
    %v2862 = vpop.f32.mrb[0].mxu0
    %v2863 = vadd.f32 0.0, %v2862
    %v2864 = vpop.f32.mrb[0].mxu0
    %v2865 = vpop.f32.mrb[0].mxu0
    %v2866 = vadd.f32 0.0, %v2865
    %v2867 = vpop.f32.mrb[0].mxu0
    %2868 = vmatprep.mubr.bf16.mxu0 0
    %2869 = vmatmul.mubr.bf16.gmra.mrb[0].mxu0 %v1586
    %v2870 = vpop.f32.mrb[0].mxu0
    %v2871 = vadd.f32 0.0, %v2870
    %v2872 = vpop.f32.mrb[0].mxu0
    %v2873 = vpop.f32.mrb[0].mxu0
    %v2874 = vadd.f32 0.0, %v2873
    %v2875 = vpop.f32.mrb[0].mxu0
    %2876 = vmatprep.mubr.bf16.mxu0 0
    %2877 = vmatmul.mubr.bf16.gmra.mrb[0].mxu0 %v1589
    %v2878 = vpop.f32.mrb[0].mxu0
    %v2879 = vadd.f32 0.0, %v2878
    %v2880 = vpop.f32.mrb[0].mxu0
    %v2881 = vpop.f32.mrb[0].mxu0
    %v2882 = vadd.f32 0.0, %v2881
    %v2883 = vpop.f32.mrb[0].mxu0
    %2884 = vmatprep.mubr.bf16.mxu0 0
    %2885 = vmatmul.mubr.bf16.gmra.mrb[0].mxu0 %v1592
    %v2886 = vpop.f32.mrb[0].mxu0
    %v2887 = vadd.f32 0.0, %v2886
    %v2888 = vpop.f32.mrb[0].mxu0
    %v2889 = vpop.f32.mrb[0].mxu0
    %v2890 = vadd.f32 0.0, %v2889
    %v2891 = vpop.f32.mrb[0].mxu0
    %2892 = vmatprep.mubr.bf16.mxu0 0
    %2893 = vmatmul.mubr.bf16.gmra.mrb[0].mxu0 %v1595
    %v2894 = vpop.f32.mrb[0].mxu0
    %v2895 = vadd.f32 0.0, %v2894
    %v2896 = vpop.f32.mrb[0].mxu0
    %v2897 = vpop.f32.mrb[0].mxu0
    %v2898 = vadd.f32 0.0, %v2897
    %v2899 = vpop.f32.mrb[0].mxu0
    %2900 = vmatprep.mubr.bf16.mxu0 0
    %2901 = vmatmul.mubr.bf16.gmra.mrb[0].mxu0 %v1598
    %v2902 = vpop.f32.mrb[0].mxu0
    %v2903 = vadd.f32 0.0, %v2902
    %v2904 = vpop.f32.mrb[0].mxu0
    %v2905 = vpop.f32.mrb[0].mxu0
    %v2906 = vadd.f32 0.0, %v2905
    %v2907 = vpop.f32.mrb[0].mxu0
    %2908 = vmatprep.mubr.bf16.mxu0 0
    %2909 = vmatmul.mubr.bf16.gmra.mrb[0].mxu0 %v1601
    %v2910 = vpop.f32.mrb[0].mxu0
    %v2911 = vadd.f32 0.0, %v2910
    %v2912 = vpop.f32.mrb[0].mxu0
    %v2913 = vpop.f32.mrb[0].mxu0
    %v2914 = vadd.f32 0.0, %v2913
    %v2915 = vpop.f32.mrb[0].mxu0
    %2916 = vmatprep.mubr.bf16.mxu0 0
    %2917 = vmatmul.mubr.bf16.gmra.mrb[0].mxu0 %v1604
    %v2918 = vpop.f32.mrb[0].mxu0
    %v2919 = vadd.f32 0.0, %v2918
    %v2920 = vpop.f32.mrb[0].mxu0
    %v2921 = vpop.f32.mrb[0].mxu0
    %v2922 = vadd.f32 0.0, %v2921
    %v2923 = vpop.f32.mrb[0].mxu0
    %2924 = vmatprep.mubr.bf16.mxu0 0
    %2925 = vmatmul.mubr.bf16.gmra.mrb[0].mxu0 %v2764
    %v2926 = vpop.f32.mrb[0].mxu0
    %v2927 = vadd.f32 0.0, %v2926
    %v2928 = vpop.f32.mrb[0].mxu0
    %v2929 = vpop.f32.mrb[0].mxu0
    %v2930 = vadd.f32 0.0, %v2929
    %v2931 = vpop.f32.mrb[0].mxu0
    %2932 = vmatprep.mubr.bf16.mxu0 0
    %2933 = vmatmul.mubr.bf16.gmra.mrb[0].mxu0 %v1610
    %v2934 = vpop.f32.mrb[0].mxu0
    %v2935 = vadd.f32 0.0, %v2934
    %v2936 = vpop.f32.mrb[0].mxu0
    %v2937 = vpop.f32.mrb[0].mxu0
    %v2938 = vadd.f32 0.0, %v2937
    %v2939 = vpop.f32.mrb[0].mxu0
    %2940 = vmatprep.mubr.bf16.mxu0 0
    %2941 = vmatmul.mubr.bf16.gmra.mrb[0].mxu0 %v1613
    %v2942 = vpop.f32.mrb[0].mxu0
    %v2943 = vadd.f32 0.0, %v2942
    %v2944 = vpop.f32.mrb[0].mxu0
    %v2945 = vpop.f32.mrb[0].mxu0
    %v2946 = vadd.f32 0.0, %v2945
    %v2947 = vpop.f32.mrb[0].mxu0
    %2948 = vmatprep.mubr.bf16.mxu0 0
    %2949 = vmatmul.mubr.bf16.gmra.mrb[0].mxu0 %v1616
    %v2950 = vpop.f32.mrb[0].mxu0
    %v2951 = vadd.f32 0.0, %v2950
    %v2952 = vpop.f32.mrb[0].mxu0
    %v2953 = vpop.f32.mrb[0].mxu0
    %v2954 = vadd.f32 0.0, %v2953
    %v2955 = vpop.f32.mrb[0].mxu0
    %2956 = vmatprep.mubr.bf16.mxu0 0
    %2957 = vmatmul.mubr.bf16.gmra.mrb[0].mxu0 %v1619
    %v2958 = vpop.f32.mrb[0].mxu0
    %v2959 = vadd.f32 0.0, %v2958
    %v2960 = vpop.f32.mrb[0].mxu0
    %v2961 = vpop.f32.mrb[0].mxu0
    %v2962 = vadd.f32 0.0, %v2961
    %v2963 = vpop.f32.mrb[0].mxu0
    %2964 = vmatprep.mubr.bf16.mxu0 0
    %2965 = vmatmul.mubr.bf16.gmra.mrb[0].mxu0 %v1622
    %v2966 = vpop.f32.mrb[0].mxu0
    %v2967 = vadd.f32 0.0, %v2966
    %v2968 = vpop.f32.mrb[0].mxu0
    %v2969 = vpop.f32.mrb[0].mxu0
    %v2970 = vadd.f32 0.0, %v2969
    %v2971 = vpop.f32.mrb[0].mxu0
    %2972 = vmatprep.mubr.bf16.mxu0 0
    %2973 = vmatmul.mubr.bf16.gmra.mrb[0].mxu0 %v1625
    %v2974 = vpop.f32.mrb[0].mxu0
    %v2975 = vadd.f32 0.0, %v2974
    %v2976 = vpop.f32.mrb[0].mxu0
    %v2977 = vpop.f32.mrb[0].mxu0
    %v2978 = vadd.f32 0.0, %v2977
    %v2979 = vpop.f32.mrb[0].mxu0
    %2980 = vmatprep.mubr.bf16.mxu0 0
    %2981 = vmatmul.mubr.bf16.gmra.mrb[0].mxu0 %v1628
    %v2982 = vpop.f32.mrb[0].mxu0
    %v2983 = vadd.f32 0.0, %v2982
    %v2984 = vpop.f32.mrb[0].mxu0
    %v2985 = vpop.f32.mrb[0].mxu0
    %v2986 = vadd.f32 0.0, %v2985
    %v2987 = vpop.f32.mrb[0].mxu0
    %2988 = vmatprep.mubr.bf16.mxu0 0
    %2989 = vmatmul.mubr.bf16.gmra.mrb[0].mxu0 %v1631
    %v2990 = vpop.f32.mrb[0].mxu0
    %v2991 = vadd.f32 0.0, %v2990
    %v2992 = vpop.f32.mrb[0].mxu0
    %v2993 = vpop.f32.mrb[0].mxu0
    %v2994 = vadd.f32 0.0, %v2993
    %v2995 = vpop.f32.mrb[0].mxu0
    %2996 = vmatprep.mubr.bf16.mxu0 0
    %2997 = vmatmul.mubr.bf16.gmra.mrb[0].mxu0 %v1634
    %v2998 = vpop.f32.mrb[0].mxu0
    %v2999 = vadd.f32 0.0, %v2998
    %v3000 = vpop.f32.mrb[0].mxu0
    %v3001 = vpop.f32.mrb[0].mxu0
    %v3002 = vadd.f32 0.0, %v3001
    %v3003 = vpop.f32.mrb[0].mxu0
    %3004 = vmatprep.mubr.bf16.mxu0 0
    %3005 = vmatmul.mubr.bf16.gmra.mrb[0].mxu0 %v1637
    %v3006 = vpop.f32.mrb[0].mxu0
    %v3007 = vadd.f32 0.0, %v3006
    %v3008 = vpop.f32.mrb[0].mxu0
    %v3009 = vpop.f32.mrb[0].mxu0
    %v3010 = vadd.f32 0.0, %v3009
    %v3011 = vpop.f32.mrb[0].mxu0
    %3012 = vmatprep.mubr.bf16.mxu0 0
    %3013 = vmatmul.mubr.bf16.gmra.mrb[0].mxu0 %v1640
    %v3014 = vpop.f32.mrb[0].mxu0
    %v3015 = vadd.f32 0.0, %v3014
    %v3016 = vpop.f32.mrb[0].mxu0
    %v3017 = vpop.f32.mrb[0].mxu0
    %v3018 = vadd.f32 0.0, %v3017
    %v3019 = vpop.f32.mrb[0].mxu0
    %3020 = vmatprep.mubr.bf16.mxu0 0
    %3021 = vmatmul.mubr.bf16.gmra.mrb[0].mxu0 %v1643
    %v3022 = vpop.f32.mrb[0].mxu0
    %v3023 = vadd.f32 0.0, %v3022
    %v3024 = vpop.f32.mrb[0].mxu0
    %v3025 = vpop.f32.mrb[0].mxu0
    %v3026 = vadd.f32 0.0, %v3025
    %v3027 = vpop.f32.mrb[0].mxu0
    %3028 = vmatprep.mubr.bf16.mxu0 0
    %3029 = vmatmul.mubr.bf16.gmra.mrb[0].mxu0 %v1646
    %v3030 = vpop.f32.mrb[0].mxu0
    %v3031 = vadd.f32 0.0, %v3030
    %v3032 = vpop.f32.mrb[0].mxu0
    %v3033 = vpop.f32.mrb[0].mxu0
    %v3034 = vadd.f32 0.0, %v3033
    %v3035 = vpop.f32.mrb[0].mxu0
    %3036 = vmatprep.mubr.bf16.mxu0 0
    %3037 = vmatmul.mubr.bf16.gmra.mrb[0].mxu0 %v1649
    %v3038 = vpop.f32.mrb[0].mxu0
    %v3039 = vadd.f32 0.0, %v3038
    %v3040 = vpop.f32.mrb[0].mxu0
    %v3041 = vpop.f32.mrb[0].mxu0
    %v3042 = vadd.f32 0.0, %v3041
    %v3043 = vpop.f32.mrb[0].mxu0
    %3044 = vmatprep.mubr.bf16.mxu0 0
    %3045 = vmatmul.mubr.bf16.gmra.mrb[0].mxu0 %v1652
    %v3046 = vpop.f32.mrb[0].mxu0
    %v3047 = vadd.f32 0.0, %v3046
    %v3048 = vpop.f32.mrb[0].mxu0
    %v3049 = vpop.f32.mrb[0].mxu0
    %v3050 = vadd.f32 0.0, %v3049
    %v3051 = vpop.f32.mrb[0].mxu0
    %3052 = vmatprep.mubr.bf16.mxu0 0
    %3053 = vmatmul.mubr.bf16.gmra.mrb[0].mxu0 %v2767
    %v3054 = vpop.f32.mrb[0].mxu0
    %v3055 = vadd.f32 0.0, %v3054
    %v3056 = vpop.f32.mrb[0].mxu0
    %v3057 = vpop.f32.mrb[0].mxu0
    %v3058 = vadd.f32 0.0, %v3057
    %v3059 = vpop.f32.mrb[0].mxu0
    %3060 = vdwg.mxu0
    %v3061 = vadd.f32 %v2689, %v2807
    %v3062 = vadd.f32 %v2690, %v2810
    %v3063 = vadd.f32 %v2691, %v2815
    %v3064 = vadd.f32 %v2692, %v2818
    %v3065 = vadd.f32 %v2693, %v2823
    %v3066 = vadd.f32 %v2694, %v2826
    %v3067 = vadd.f32 %v2695, %v2831
    %v3068 = vadd.f32 %v2696, %v2834
    %v3069 = vadd.f32 %v2697, %v2839
    %v3070 = vadd.f32 %v2698, %v2842
    %v3071 = vadd.f32 %v2699, %v2847
    %v3072 = vadd.f32 %v2700, %v2850
    %v3073 = vadd.f32 %v2701, %v2855
    %v3074 = vadd.f32 %v2702, %v2858
    %v3075 = vadd.f32 %v2703, %v2863
    %v3076 = vadd.f32 %v2704, %v2866
    %v3077 = vadd.f32 %v2705, %v2871
    %v3078 = vadd.f32 %v2706, %v2874
    %v3079 = vadd.f32 %v2707, %v2879
    %v3080 = vadd.f32 %v2708, %v2882
    %v3081 = vadd.f32 %v2709, %v2887
    %v3082 = vadd.f32 %v2710, %v2890
    %v3083 = vadd.f32 %v2711, %v2895
    %v3084 = vadd.f32 %v2712, %v2898
    %v3085 = vadd.f32 %v2713, %v2903
    %v3086 = vadd.f32 %v2714, %v2906
    %v3087 = vadd.f32 %v2715, %v2911
    %v3088 = vadd.f32 %v2716, %v2914
    %v3089 = vadd.f32 %v2717, %v2919
    %v3090 = vadd.f32 %v2718, %v2922
    %v3091 = vadd.f32 %v2719, %v2927
    %v3092 = vadd.f32 %v2720, %v2930
    %v3093 = vadd.f32 %v2721, %v2935
    %v3094 = vadd.f32 %v2722, %v2938
    %v3095 = vadd.f32 %v2723, %v2943
    %v3096 = vadd.f32 %v2724, %v2946
    %v3097 = vadd.f32 %v2725, %v2951
    %v3098 = vadd.f32 %v2726, %v2954
    %v3099 = vadd.f32 %v2727, %v2959
    %v3100 = vadd.f32 %v2728, %v2962
    %v3101 = vadd.f32 %v2729, %v2967
    %v3102 = vadd.f32 %v2730, %v2970
    %v3103 = vadd.f32 %v2731, %v2975
    %v3104 = vadd.f32 %v2732, %v2978
    %v3105 = vadd.f32 %v2733, %v2983
    %v3106 = vadd.f32 %v2734, %v2986
    %v3107 = vadd.f32 %v2735, %v2991
    %v3108 = vadd.f32 %v2736, %v2994
    %v3109 = vadd.f32 %v2737, %v2999
    %v3110 = vadd.f32 %v2738, %v3002
    %v3111 = vadd.f32 %v2739, %v3007
    %v3112 = vadd.f32 %v2740, %v3010
    %v3113 = vadd.f32 %v2741, %v3015
    %v3114 = vadd.f32 %v2742, %v3018
    %v3115 = vadd.f32 %v2743, %v3023
    %v3116 = vadd.f32 %v2744, %v3026
    %v3117 = vadd.f32 %v2745, %v3031
    %v3118 = vadd.f32 %v2746, %v3034
    %v3119 = vadd.f32 %v2747, %v3039
    %v3120 = vadd.f32 %v2748, %v3042
    %v3121 = vadd.f32 %v2749, %v3047
    %v3122 = vadd.f32 %v2750, %v3050
    %v3123 = vadd.f32 %v2751, %v3055
    %v3124 = vadd.f32 %v2752, %v3058
    %v3126 = vshrl.u32 %v72, 16
    %v3128 = vrot.slane %v3126, 4
    %v3129 = vshll.u32 %v72, 16
    %v3131 = vrot.slane %v3129, 5
    %v3132 = vor.u32 %v3128, %v3131
    %v3133 = vrot.slane %v3132, 4
    %v3135 = vshll.u32 %v73, 16
    %v3137 = vrot.slane %v3135, 5
    %v3138 = vsel %vm143, %v3133, %v3137
    %v3139 = vshrl.u32 %v73, 16
    %v3141 = vrot.slane %v3139, 4
    %v3142 = vor.u32 %v3141, %v3137
    %v3143 = vrot.slane %v3142, 4
    %v3145 = vshll.u32 %v74, 16
    %v3147 = vrot.slane %v3145, 5
    %v3148 = vsel %vm143, %v3143, %v3147
    %v3150 = vshrl.u32 %v126, 16
    %v3152 = vrot.slane %v3150, 4
    %v3153 = vshll.u32 %v126, 16
    %v3155 = vrot.slane %v3153, 5
    %v3156 = vor.u32 %v3152, %v3155
    %v3157 = vrot.slane %v3156, 4
    %v3159 = vshll.u32 %v127, 16
    %v3161 = vrot.slane %v3159, 5
    %v3162 = vsel %vm143, %v3157, %v3161
    %v3163 = vshrl.u32 %v127, 16
    %v3165 = vrot.slane %v3163, 4
    %v3166 = vor.u32 %v3165, %v3161
    %v3167 = vrot.slane %v3166, 4
    %v3169 = vshll.u32 %v128, 16
    %v3171 = vrot.slane %v3169, 5
    %v3172 = vsel %vm143, %v3167, %v3171
    %v3173 = vunpack.c.l.b16 %v3138
    %v3174 = vunpack.c.l.b16 %v3148
    %v3175 = vunpack.c.l.b16 %v3162
    %v3176 = vunpack.c.l.b16 %v3172
    %v3177 = vpack.c.b16 %v3174, %v3173
    %v3178 = vpack.c.b16 %v3176, %v3175
    %v3180 = vsel %vm1008, %v3177, 0
    %v3183 = vsel %vm1008, %v3178, 0
    %v3186 = vsel %vm1105, %v136, 0
    %3188 = vmatprep.subr.bf16.mxu0 0
    %3189 = vmatpush1.bf16.msra.mxu0 %v3186
    %3190 = vmatprep.subr.bf16.mxu0 0
    %3191 = vmatpush1.bf16.msra.mxu0 0
    %3192 = vmatprep.subr.bf16.mxu0 0
    %3193 = vmatpush1.bf16.msra.mxu0 0
    %3194 = vmatprep.subr.bf16.mxu0 0
    %3195 = vmatpush1.bf16.msra.mxu0 0
    %3196 = vmatprep.subr.bf16.mxu0 0
    %3197 = vmatpush1.bf16.msra.mxu0 0
    %3198 = vmatprep.subr.bf16.mxu0 0
    %3199 = vmatpush1.bf16.msra.mxu0 0
    %3200 = vmatprep.subr.bf16.mxu0 0
    %3201 = vmatpush1.bf16.msra.mxu0 0
    %3202 = vmatprep.subr.bf16.mxu0 0
    %3203 = vmatpush1.bf16.msra.mxu0 0
    %3204 = vmatprep.subr.bf16.mxu0 0
    %3205 = vmatpush1.bf16.msra.mxu0 0
    %3206 = vmatprep.subr.bf16.mxu0 0
    %3207 = vmatpush1.bf16.msra.mxu0 0
    %3208 = vmatprep.subr.bf16.mxu0 0
    %3209 = vmatpush1.bf16.msra.mxu0 0
    %3210 = vmatprep.subr.bf16.mxu0 0
    %3211 = vmatpush1.bf16.msra.mxu0 0
    %3212 = vmatprep.subr.bf16.mxu0 0
    %3213 = vmatpush1.bf16.msra.mxu0 0
    %3214 = vmatprep.subr.bf16.mxu0 0
    %3215 = vmatpush1.bf16.msra.mxu0 0
    %3216 = vmatprep.subr.bf16.mxu0 0
    %3217 = vmatpush1.bf16.msra.mxu0 0
    %3218 = vmatprep.subr.bf16.mxu0 0
    %3219 = vmatpush1.bf16.msra.mxu0 0
    %3220 = vmatprep.mubr.bf16.mxu0 0
    %3221 = vmatmul.mubr.bf16.gmra.mrb[0].mxu0 %v1013
    %v3222 = vpop.f32.mrb[0].mxu0
    %v3223 = vadd.f32 0.0, %v3222
    %v3224 = vpop.f32.mrb[0].mxu0
    %v3225 = vpop.f32.mrb[0].mxu0
    %v3226 = vadd.f32 0.0, %v3225
    %v3227 = vpop.f32.mrb[0].mxu0
    %3228 = vmatprep.mubr.bf16.mxu0 0
    %3229 = vmatmul.mubr.bf16.gmra.mrb[0].mxu0 %v1016
    %v3230 = vpop.f32.mrb[0].mxu0
    %v3231 = vadd.f32 0.0, %v3230
    %v3232 = vpop.f32.mrb[0].mxu0
    %v3233 = vpop.f32.mrb[0].mxu0
    %v3234 = vadd.f32 0.0, %v3233
    %v3235 = vpop.f32.mrb[0].mxu0
    %3236 = vmatprep.mubr.bf16.mxu0 0
    %3237 = vmatmul.mubr.bf16.gmra.mrb[0].mxu0 %v1019
    %v3238 = vpop.f32.mrb[0].mxu0
    %v3239 = vadd.f32 0.0, %v3238
    %v3240 = vpop.f32.mrb[0].mxu0
    %v3241 = vpop.f32.mrb[0].mxu0
    %v3242 = vadd.f32 0.0, %v3241
    %v3243 = vpop.f32.mrb[0].mxu0
    %3244 = vmatprep.mubr.bf16.mxu0 0
    %3245 = vmatmul.mubr.bf16.gmra.mrb[0].mxu0 %v1022
    %v3246 = vpop.f32.mrb[0].mxu0
    %v3247 = vadd.f32 0.0, %v3246
    %v3248 = vpop.f32.mrb[0].mxu0
    %v3249 = vpop.f32.mrb[0].mxu0
    %v3250 = vadd.f32 0.0, %v3249
    %v3251 = vpop.f32.mrb[0].mxu0
    %3252 = vmatprep.mubr.bf16.mxu0 0
    %3253 = vmatmul.mubr.bf16.gmra.mrb[0].mxu0 %v1025
    %v3254 = vpop.f32.mrb[0].mxu0
    %v3255 = vadd.f32 0.0, %v3254
    %v3256 = vpop.f32.mrb[0].mxu0
    %v3257 = vpop.f32.mrb[0].mxu0
    %v3258 = vadd.f32 0.0, %v3257
    %v3259 = vpop.f32.mrb[0].mxu0
    %3260 = vmatprep.mubr.bf16.mxu0 0
    %3261 = vmatmul.mubr.bf16.gmra.mrb[0].mxu0 %v1028
    %v3262 = vpop.f32.mrb[0].mxu0
    %v3263 = vadd.f32 0.0, %v3262
    %v3264 = vpop.f32.mrb[0].mxu0
    %v3265 = vpop.f32.mrb[0].mxu0
    %v3266 = vadd.f32 0.0, %v3265
    %v3267 = vpop.f32.mrb[0].mxu0
    %3268 = vmatprep.mubr.bf16.mxu0 0
    %3269 = vmatmul.mubr.bf16.gmra.mrb[0].mxu0 %v1031
    %v3270 = vpop.f32.mrb[0].mxu0
    %v3271 = vadd.f32 0.0, %v3270
    %v3272 = vpop.f32.mrb[0].mxu0
    %v3273 = vpop.f32.mrb[0].mxu0
    %v3274 = vadd.f32 0.0, %v3273
    %v3275 = vpop.f32.mrb[0].mxu0
    %3276 = vmatprep.mubr.bf16.mxu0 0
    %3277 = vmatmul.mubr.bf16.gmra.mrb[0].mxu0 %v1034
    %v3278 = vpop.f32.mrb[0].mxu0
    %v3279 = vadd.f32 0.0, %v3278
    %v3280 = vpop.f32.mrb[0].mxu0
    %v3281 = vpop.f32.mrb[0].mxu0
    %v3282 = vadd.f32 0.0, %v3281
    %v3283 = vpop.f32.mrb[0].mxu0
    %3284 = vmatprep.mubr.bf16.mxu0 0
    %3285 = vmatmul.mubr.bf16.gmra.mrb[0].mxu0 %v1037
    %v3286 = vpop.f32.mrb[0].mxu0
    %v3287 = vadd.f32 0.0, %v3286
    %v3288 = vpop.f32.mrb[0].mxu0
    %v3289 = vpop.f32.mrb[0].mxu0
    %v3290 = vadd.f32 0.0, %v3289
    %v3291 = vpop.f32.mrb[0].mxu0
    %3292 = vmatprep.mubr.bf16.mxu0 0
    %3293 = vmatmul.mubr.bf16.gmra.mrb[0].mxu0 %v1040
    %v3294 = vpop.f32.mrb[0].mxu0
    %v3295 = vadd.f32 0.0, %v3294
    %v3296 = vpop.f32.mrb[0].mxu0
    %v3297 = vpop.f32.mrb[0].mxu0
    %v3298 = vadd.f32 0.0, %v3297
    %v3299 = vpop.f32.mrb[0].mxu0
    %3300 = vmatprep.mubr.bf16.mxu0 0
    %3301 = vmatmul.mubr.bf16.gmra.mrb[0].mxu0 %v1043
    %v3302 = vpop.f32.mrb[0].mxu0
    %v3303 = vadd.f32 0.0, %v3302
    %v3304 = vpop.f32.mrb[0].mxu0
    %v3305 = vpop.f32.mrb[0].mxu0
    %v3306 = vadd.f32 0.0, %v3305
    %v3307 = vpop.f32.mrb[0].mxu0
    %3308 = vmatprep.mubr.bf16.mxu0 0
    %3309 = vmatmul.mubr.bf16.gmra.mrb[0].mxu0 %v1046
    %v3310 = vpop.f32.mrb[0].mxu0
    %v3311 = vadd.f32 0.0, %v3310
    %v3312 = vpop.f32.mrb[0].mxu0
    %v3313 = vpop.f32.mrb[0].mxu0
    %v3314 = vadd.f32 0.0, %v3313
    %v3315 = vpop.f32.mrb[0].mxu0
    %3316 = vmatprep.mubr.bf16.mxu0 0
    %3317 = vmatmul.mubr.bf16.gmra.mrb[0].mxu0 %v1049
    %v3318 = vpop.f32.mrb[0].mxu0
    %v3319 = vadd.f32 0.0, %v3318
    %v3320 = vpop.f32.mrb[0].mxu0
    %v3321 = vpop.f32.mrb[0].mxu0
    %v3322 = vadd.f32 0.0, %v3321
    %v3323 = vpop.f32.mrb[0].mxu0
    %3324 = vmatprep.mubr.bf16.mxu0 0
    %3325 = vmatmul.mubr.bf16.gmra.mrb[0].mxu0 %v1052
    %v3326 = vpop.f32.mrb[0].mxu0
    %v3327 = vadd.f32 0.0, %v3326
    %v3328 = vpop.f32.mrb[0].mxu0
    %v3329 = vpop.f32.mrb[0].mxu0
    %v3330 = vadd.f32 0.0, %v3329
    %v3331 = vpop.f32.mrb[0].mxu0
    %3332 = vmatprep.mubr.bf16.mxu0 0
    %3333 = vmatmul.mubr.bf16.gmra.mrb[0].mxu0 %v1055
    %v3334 = vpop.f32.mrb[0].mxu0
    %v3335 = vadd.f32 0.0, %v3334
    %v3336 = vpop.f32.mrb[0].mxu0
    %v3337 = vpop.f32.mrb[0].mxu0
    %v3338 = vadd.f32 0.0, %v3337
    %v3339 = vpop.f32.mrb[0].mxu0
    %3340 = vmatprep.mubr.bf16.mxu0 0
    %3341 = vmatmul.mubr.bf16.gmra.mrb[0].mxu0 %v3180
    %v3342 = vpop.f32.mrb[0].mxu0
    %v3343 = vadd.f32 0.0, %v3342
    %v3344 = vpop.f32.mrb[0].mxu0
    %v3345 = vpop.f32.mrb[0].mxu0
    %v3346 = vadd.f32 0.0, %v3345
    %v3347 = vpop.f32.mrb[0].mxu0
    %3348 = vmatprep.mubr.bf16.mxu0 0
    %3349 = vmatmul.mubr.bf16.gmra.mrb[0].mxu0 %v1061
    %v3350 = vpop.f32.mrb[0].mxu0
    %v3351 = vadd.f32 0.0, %v3350
    %v3352 = vpop.f32.mrb[0].mxu0
    %v3353 = vpop.f32.mrb[0].mxu0
    %v3354 = vadd.f32 0.0, %v3353
    %v3355 = vpop.f32.mrb[0].mxu0
    %3356 = vmatprep.mubr.bf16.mxu0 0
    %3357 = vmatmul.mubr.bf16.gmra.mrb[0].mxu0 %v1064
    %v3358 = vpop.f32.mrb[0].mxu0
    %v3359 = vadd.f32 0.0, %v3358
    %v3360 = vpop.f32.mrb[0].mxu0
    %v3361 = vpop.f32.mrb[0].mxu0
    %v3362 = vadd.f32 0.0, %v3361
    %v3363 = vpop.f32.mrb[0].mxu0
    %3364 = vmatprep.mubr.bf16.mxu0 0
    %3365 = vmatmul.mubr.bf16.gmra.mrb[0].mxu0 %v1067
    %v3366 = vpop.f32.mrb[0].mxu0
    %v3367 = vadd.f32 0.0, %v3366
    %v3368 = vpop.f32.mrb[0].mxu0
    %v3369 = vpop.f32.mrb[0].mxu0
    %v3370 = vadd.f32 0.0, %v3369
    %v3371 = vpop.f32.mrb[0].mxu0
    %3372 = vmatprep.mubr.bf16.mxu0 0
    %3373 = vmatmul.mubr.bf16.gmra.mrb[0].mxu0 %v1070
    %v3374 = vpop.f32.mrb[0].mxu0
    %v3375 = vadd.f32 0.0, %v3374
    %v3376 = vpop.f32.mrb[0].mxu0
    %v3377 = vpop.f32.mrb[0].mxu0
    %v3378 = vadd.f32 0.0, %v3377
    %v3379 = vpop.f32.mrb[0].mxu0
    %3380 = vmatprep.mubr.bf16.mxu0 0
    %3381 = vmatmul.mubr.bf16.gmra.mrb[0].mxu0 %v1073
    %v3382 = vpop.f32.mrb[0].mxu0
    %v3383 = vadd.f32 0.0, %v3382
    %v3384 = vpop.f32.mrb[0].mxu0
    %v3385 = vpop.f32.mrb[0].mxu0
    %v3386 = vadd.f32 0.0, %v3385
    %v3387 = vpop.f32.mrb[0].mxu0
    %3388 = vmatprep.mubr.bf16.mxu0 0
    %3389 = vmatmul.mubr.bf16.gmra.mrb[0].mxu0 %v1076
    %v3390 = vpop.f32.mrb[0].mxu0
    %v3391 = vadd.f32 0.0, %v3390
    %v3392 = vpop.f32.mrb[0].mxu0
    %v3393 = vpop.f32.mrb[0].mxu0
    %v3394 = vadd.f32 0.0, %v3393
    %v3395 = vpop.f32.mrb[0].mxu0
    %3396 = vmatprep.mubr.bf16.mxu0 0
    %3397 = vmatmul.mubr.bf16.gmra.mrb[0].mxu0 %v1079
    %v3398 = vpop.f32.mrb[0].mxu0
    %v3399 = vadd.f32 0.0, %v3398
    %v3400 = vpop.f32.mrb[0].mxu0
    %v3401 = vpop.f32.mrb[0].mxu0
    %v3402 = vadd.f32 0.0, %v3401
    %v3403 = vpop.f32.mrb[0].mxu0
    %3404 = vmatprep.mubr.bf16.mxu0 0
    %3405 = vmatmul.mubr.bf16.gmra.mrb[0].mxu0 %v1082
    %v3406 = vpop.f32.mrb[0].mxu0
    %v3407 = vadd.f32 0.0, %v3406
    %v3408 = vpop.f32.mrb[0].mxu0
    %v3409 = vpop.f32.mrb[0].mxu0
    %v3410 = vadd.f32 0.0, %v3409
    %v3411 = vpop.f32.mrb[0].mxu0
    %3412 = vmatprep.mubr.bf16.mxu0 0
    %3413 = vmatmul.mubr.bf16.gmra.mrb[0].mxu0 %v1085
    %v3414 = vpop.f32.mrb[0].mxu0
    %v3415 = vadd.f32 0.0, %v3414
    %v3416 = vpop.f32.mrb[0].mxu0
    %v3417 = vpop.f32.mrb[0].mxu0
    %v3418 = vadd.f32 0.0, %v3417
    %v3419 = vpop.f32.mrb[0].mxu0
    %3420 = vmatprep.mubr.bf16.mxu0 0
    %3421 = vmatmul.mubr.bf16.gmra.mrb[0].mxu0 %v1088
    %v3422 = vpop.f32.mrb[0].mxu0
    %v3423 = vadd.f32 0.0, %v3422
    %v3424 = vpop.f32.mrb[0].mxu0
    %v3425 = vpop.f32.mrb[0].mxu0
    %v3426 = vadd.f32 0.0, %v3425
    %v3427 = vpop.f32.mrb[0].mxu0
    %3428 = vmatprep.mubr.bf16.mxu0 0
    %3429 = vmatmul.mubr.bf16.gmra.mrb[0].mxu0 %v1091
    %v3430 = vpop.f32.mrb[0].mxu0
    %v3431 = vadd.f32 0.0, %v3430
    %v3432 = vpop.f32.mrb[0].mxu0
    %v3433 = vpop.f32.mrb[0].mxu0
    %v3434 = vadd.f32 0.0, %v3433
    %v3435 = vpop.f32.mrb[0].mxu0
    %3436 = vmatprep.mubr.bf16.mxu0 0
    %3437 = vmatmul.mubr.bf16.gmra.mrb[0].mxu0 %v1094
    %v3438 = vpop.f32.mrb[0].mxu0
    %v3439 = vadd.f32 0.0, %v3438
    %v3440 = vpop.f32.mrb[0].mxu0
    %v3441 = vpop.f32.mrb[0].mxu0
    %v3442 = vadd.f32 0.0, %v3441
    %v3443 = vpop.f32.mrb[0].mxu0
    %3444 = vmatprep.mubr.bf16.mxu0 0
    %3445 = vmatmul.mubr.bf16.gmra.mrb[0].mxu0 %v1097
    %v3446 = vpop.f32.mrb[0].mxu0
    %v3447 = vadd.f32 0.0, %v3446
    %v3448 = vpop.f32.mrb[0].mxu0
    %v3449 = vpop.f32.mrb[0].mxu0
    %v3450 = vadd.f32 0.0, %v3449
    %v3451 = vpop.f32.mrb[0].mxu0
    %3452 = vmatprep.mubr.bf16.mxu0 0
    %3453 = vmatmul.mubr.bf16.gmra.mrb[0].mxu0 %v1100
    %v3454 = vpop.f32.mrb[0].mxu0
    %v3455 = vadd.f32 0.0, %v3454
    %v3456 = vpop.f32.mrb[0].mxu0
    %v3457 = vpop.f32.mrb[0].mxu0
    %v3458 = vadd.f32 0.0, %v3457
    %v3459 = vpop.f32.mrb[0].mxu0
    %3460 = vmatprep.mubr.bf16.mxu0 0
    %3461 = vmatmul.mubr.bf16.gmra.mrb[0].mxu0 %v1103
    %v3462 = vpop.f32.mrb[0].mxu0
    %v3463 = vadd.f32 0.0, %v3462
    %v3464 = vpop.f32.mrb[0].mxu0
    %v3465 = vpop.f32.mrb[0].mxu0
    %v3466 = vadd.f32 0.0, %v3465
    %v3467 = vpop.f32.mrb[0].mxu0
    %3468 = vmatprep.mubr.bf16.mxu0 0
    %3469 = vmatmul.mubr.bf16.gmra.mrb[0].mxu0 %v3183
    %v3470 = vpop.f32.mrb[0].mxu0
    %v3471 = vadd.f32 0.0, %v3470
    %v3472 = vpop.f32.mrb[0].mxu0
    %v3473 = vpop.f32.mrb[0].mxu0
    %v3474 = vadd.f32 0.0, %v3473
    %v3475 = vpop.f32.mrb[0].mxu0
    %3476 = vdwg.mxu0
    %v3477 = vadd.f32 %v3061, %v3223
    %v3478 = vadd.f32 %v3062, %v3226
    %v3479 = vadd.f32 %v3063, %v3231
    %v3480 = vadd.f32 %v3064, %v3234
    %v3481 = vadd.f32 %v3065, %v3239
    %v3482 = vadd.f32 %v3066, %v3242
    %v3483 = vadd.f32 %v3067, %v3247
    %v3484 = vadd.f32 %v3068, %v3250
    %v3485 = vadd.f32 %v3069, %v3255
    %v3486 = vadd.f32 %v3070, %v3258
    %v3487 = vadd.f32 %v3071, %v3263
    %v3488 = vadd.f32 %v3072, %v3266
    %v3489 = vadd.f32 %v3073, %v3271
    %v3490 = vadd.f32 %v3074, %v3274
    %v3491 = vadd.f32 %v3075, %v3279
    %v3492 = vadd.f32 %v3076, %v3282
    %v3493 = vadd.f32 %v3077, %v3287
    %v3494 = vadd.f32 %v3078, %v3290
    %v3495 = vadd.f32 %v3079, %v3295
    %v3496 = vadd.f32 %v3080, %v3298
    %v3497 = vadd.f32 %v3081, %v3303
    %v3498 = vadd.f32 %v3082, %v3306
    %v3499 = vadd.f32 %v3083, %v3311
    %v3500 = vadd.f32 %v3084, %v3314
    %v3501 = vadd.f32 %v3085, %v3319
    %v3502 = vadd.f32 %v3086, %v3322
    %v3503 = vadd.f32 %v3087, %v3327
    %v3504 = vadd.f32 %v3088, %v3330
    %v3505 = vadd.f32 %v3089, %v3335
    %v3506 = vadd.f32 %v3090, %v3338
    %v3507 = vadd.f32 %v3091, %v3343
    %v3508 = vadd.f32 %v3092, %v3346
    %v3509 = vadd.f32 %v3093, %v3351
    %v3510 = vadd.f32 %v3094, %v3354
    %v3511 = vadd.f32 %v3095, %v3359
    %v3512 = vadd.f32 %v3096, %v3362
    %v3513 = vadd.f32 %v3097, %v3367
    %v3514 = vadd.f32 %v3098, %v3370
    %v3515 = vadd.f32 %v3099, %v3375
    %v3516 = vadd.f32 %v3100, %v3378
    %v3517 = vadd.f32 %v3101, %v3383
    %v3518 = vadd.f32 %v3102, %v3386
    %v3519 = vadd.f32 %v3103, %v3391
    %v3520 = vadd.f32 %v3104, %v3394
    %v3521 = vadd.f32 %v3105, %v3399
    %v3522 = vadd.f32 %v3106, %v3402
    %v3523 = vadd.f32 %v3107, %v3407
    %v3524 = vadd.f32 %v3108, %v3410
    %v3525 = vadd.f32 %v3109, %v3415
    %v3526 = vadd.f32 %v3110, %v3418
    %v3527 = vadd.f32 %v3111, %v3423
    %v3528 = vadd.f32 %v3112, %v3426
    %v3529 = vadd.f32 %v3113, %v3431
    %v3530 = vadd.f32 %v3114, %v3434
    %v3531 = vadd.f32 %v3115, %v3439
    %v3532 = vadd.f32 %v3116, %v3442
    %v3533 = vadd.f32 %v3117, %v3447
    %v3534 = vadd.f32 %v3118, %v3450
    %v3535 = vadd.f32 %v3119, %v3455
    %v3536 = vadd.f32 %v3120, %v3458
    %v3537 = vadd.f32 %v3121, %v3463
    %v3538 = vadd.f32 %v3122, %v3466
    %v3539 = vadd.f32 %v3123, %v3471
    %v3540 = vadd.f32 %v3124, %v3474
    %v3543 = vrot.slane %v72, 5
    %v3544 = vrot.slane %v3543, 4
    %v3545 = vrot.slane %v73, 5
    %v3546 = vsel %vm1980, %v3544, %v3545
    %v3547 = vrot.slane %v3545, 4
    %v3548 = vrot.slane %v74, 5
    %v3549 = vsel %vm1980, %v3547, %v3548
    %v3550 = vrot.slane %v126, 5
    %v3551 = vrot.slane %v3550, 4
    %v3552 = vrot.slane %v127, 5
    %v3553 = vsel %vm1980, %v3551, %v3552
    %v3554 = vrot.slane %v3552, 4
    %v3555 = vrot.slane %v128, 5
    %v3556 = vsel %vm1980, %v3554, %v3555
    %v3557 = vunpack.c.l.b16 %v3546
    %v3558 = vunpack.c.l.b16 %v3549
    %v3559 = vunpack.c.l.b16 %v3553
    %v3560 = vunpack.c.l.b16 %v3556
    %v3561 = vpack.c.b16 %v3558, %v3557
    %v3562 = vpack.c.b16 %v3560, %v3559
    %v3564 = vsel %vm1008, %v3561, 0
    %v3567 = vsel %vm1008, %v3562, 0
    %v3570 = vsel %vm1105, %v137, 0
    %3572 = vmatprep.subr.bf16.mxu0 0
    %3573 = vmatpush1.bf16.msra.mxu0 %v3570
    %3574 = vmatprep.subr.bf16.mxu0 0
    %3575 = vmatpush1.bf16.msra.mxu0 0
    %3576 = vmatprep.subr.bf16.mxu0 0
    %3577 = vmatpush1.bf16.msra.mxu0 0
    %3578 = vmatprep.subr.bf16.mxu0 0
    %3579 = vmatpush1.bf16.msra.mxu0 0
    %3580 = vmatprep.subr.bf16.mxu0 0
    %3581 = vmatpush1.bf16.msra.mxu0 0
    %3582 = vmatprep.subr.bf16.mxu0 0
    %3583 = vmatpush1.bf16.msra.mxu0 0
    %3584 = vmatprep.subr.bf16.mxu0 0
    %3585 = vmatpush1.bf16.msra.mxu0 0
    %3586 = vmatprep.subr.bf16.mxu0 0
    %3587 = vmatpush1.bf16.msra.mxu0 0
    %3588 = vmatprep.subr.bf16.mxu0 0
    %3589 = vmatpush1.bf16.msra.mxu0 0
    %3590 = vmatprep.subr.bf16.mxu0 0
    %3591 = vmatpush1.bf16.msra.mxu0 0
    %3592 = vmatprep.subr.bf16.mxu0 0
    %3593 = vmatpush1.bf16.msra.mxu0 0
    %3594 = vmatprep.subr.bf16.mxu0 0
    %3595 = vmatpush1.bf16.msra.mxu0 0
    %3596 = vmatprep.subr.bf16.mxu0 0
    %3597 = vmatpush1.bf16.msra.mxu0 0
    %3598 = vmatprep.subr.bf16.mxu0 0
    %3599 = vmatpush1.bf16.msra.mxu0 0
    %3600 = vmatprep.subr.bf16.mxu0 0
    %3601 = vmatpush1.bf16.msra.mxu0 0
    %3602 = vmatprep.subr.bf16.mxu0 0
    %3603 = vmatpush1.bf16.msra.mxu0 0
    %3604 = vmatprep.mubr.bf16.mxu0 0
    %3605 = vmatmul.mubr.bf16.gmra.mrb[0].mxu0 %v2305
    %v3606 = vpop.f32.mrb[0].mxu0
    %v3607 = vadd.f32 0.0, %v3606
    %v3608 = vpop.f32.mrb[0].mxu0
    %v3609 = vpop.f32.mrb[0].mxu0
    %v3610 = vadd.f32 0.0, %v3609
    %v3611 = vpop.f32.mrb[0].mxu0
    %3612 = vmatprep.mubr.bf16.mxu0 0
    %3613 = vmatmul.mubr.bf16.gmra.mrb[0].mxu0 %v2308
    %v3614 = vpop.f32.mrb[0].mxu0
    %v3615 = vadd.f32 0.0, %v3614
    %v3616 = vpop.f32.mrb[0].mxu0
    %v3617 = vpop.f32.mrb[0].mxu0
    %v3618 = vadd.f32 0.0, %v3617
    %v3619 = vpop.f32.mrb[0].mxu0
    %3620 = vmatprep.mubr.bf16.mxu0 0
    %3621 = vmatmul.mubr.bf16.gmra.mrb[0].mxu0 %v2311
    %v3622 = vpop.f32.mrb[0].mxu0
    %v3623 = vadd.f32 0.0, %v3622
    %v3624 = vpop.f32.mrb[0].mxu0
    %v3625 = vpop.f32.mrb[0].mxu0
    %v3626 = vadd.f32 0.0, %v3625
    %v3627 = vpop.f32.mrb[0].mxu0
    %3628 = vmatprep.mubr.bf16.mxu0 0
    %3629 = vmatmul.mubr.bf16.gmra.mrb[0].mxu0 %v2314
    %v3630 = vpop.f32.mrb[0].mxu0
    %v3631 = vadd.f32 0.0, %v3630
    %v3632 = vpop.f32.mrb[0].mxu0
    %v3633 = vpop.f32.mrb[0].mxu0
    %v3634 = vadd.f32 0.0, %v3633
    %v3635 = vpop.f32.mrb[0].mxu0
    %3636 = vmatprep.mubr.bf16.mxu0 0
    %3637 = vmatmul.mubr.bf16.gmra.mrb[0].mxu0 %v2317
    %v3638 = vpop.f32.mrb[0].mxu0
    %v3639 = vadd.f32 0.0, %v3638
    %v3640 = vpop.f32.mrb[0].mxu0
    %v3641 = vpop.f32.mrb[0].mxu0
    %v3642 = vadd.f32 0.0, %v3641
    %v3643 = vpop.f32.mrb[0].mxu0
    %3644 = vmatprep.mubr.bf16.mxu0 0
    %3645 = vmatmul.mubr.bf16.gmra.mrb[0].mxu0 %v2320
    %v3646 = vpop.f32.mrb[0].mxu0
    %v3647 = vadd.f32 0.0, %v3646
    %v3648 = vpop.f32.mrb[0].mxu0
    %v3649 = vpop.f32.mrb[0].mxu0
    %v3650 = vadd.f32 0.0, %v3649
    %v3651 = vpop.f32.mrb[0].mxu0
    %3652 = vmatprep.mubr.bf16.mxu0 0
    %3653 = vmatmul.mubr.bf16.gmra.mrb[0].mxu0 %v2323
    %v3654 = vpop.f32.mrb[0].mxu0
    %v3655 = vadd.f32 0.0, %v3654
    %v3656 = vpop.f32.mrb[0].mxu0
    %v3657 = vpop.f32.mrb[0].mxu0
    %v3658 = vadd.f32 0.0, %v3657
    %v3659 = vpop.f32.mrb[0].mxu0
    %3660 = vmatprep.mubr.bf16.mxu0 0
    %3661 = vmatmul.mubr.bf16.gmra.mrb[0].mxu0 %v2326
    %v3662 = vpop.f32.mrb[0].mxu0
    %v3663 = vadd.f32 0.0, %v3662
    %v3664 = vpop.f32.mrb[0].mxu0
    %v3665 = vpop.f32.mrb[0].mxu0
    %v3666 = vadd.f32 0.0, %v3665
    %v3667 = vpop.f32.mrb[0].mxu0
    %3668 = vmatprep.mubr.bf16.mxu0 0
    %3669 = vmatmul.mubr.bf16.gmra.mrb[0].mxu0 %v2329
    %v3670 = vpop.f32.mrb[0].mxu0
    %v3671 = vadd.f32 0.0, %v3670
    %v3672 = vpop.f32.mrb[0].mxu0
    %v3673 = vpop.f32.mrb[0].mxu0
    %v3674 = vadd.f32 0.0, %v3673
    %v3675 = vpop.f32.mrb[0].mxu0
    %3676 = vmatprep.mubr.bf16.mxu0 0
    %3677 = vmatmul.mubr.bf16.gmra.mrb[0].mxu0 %v2332
    %v3678 = vpop.f32.mrb[0].mxu0
    %v3679 = vadd.f32 0.0, %v3678
    %v3680 = vpop.f32.mrb[0].mxu0
    %v3681 = vpop.f32.mrb[0].mxu0
    %v3682 = vadd.f32 0.0, %v3681
    %v3683 = vpop.f32.mrb[0].mxu0
    %3684 = vmatprep.mubr.bf16.mxu0 0
    %3685 = vmatmul.mubr.bf16.gmra.mrb[0].mxu0 %v2335
    %v3686 = vpop.f32.mrb[0].mxu0
    %v3687 = vadd.f32 0.0, %v3686
    %v3688 = vpop.f32.mrb[0].mxu0
    %v3689 = vpop.f32.mrb[0].mxu0
    %v3690 = vadd.f32 0.0, %v3689
    %v3691 = vpop.f32.mrb[0].mxu0
    %3692 = vmatprep.mubr.bf16.mxu0 0
    %3693 = vmatmul.mubr.bf16.gmra.mrb[0].mxu0 %v2338
    %v3694 = vpop.f32.mrb[0].mxu0
    %v3695 = vadd.f32 0.0, %v3694
    %v3696 = vpop.f32.mrb[0].mxu0
    %v3697 = vpop.f32.mrb[0].mxu0
    %v3698 = vadd.f32 0.0, %v3697
    %v3699 = vpop.f32.mrb[0].mxu0
    %3700 = vmatprep.mubr.bf16.mxu0 0
    %3701 = vmatmul.mubr.bf16.gmra.mrb[0].mxu0 %v2341
    %v3702 = vpop.f32.mrb[0].mxu0
    %v3703 = vadd.f32 0.0, %v3702
    %v3704 = vpop.f32.mrb[0].mxu0
    %v3705 = vpop.f32.mrb[0].mxu0
    %v3706 = vadd.f32 0.0, %v3705
    %v3707 = vpop.f32.mrb[0].mxu0
    %3708 = vmatprep.mubr.bf16.mxu0 0
    %3709 = vmatmul.mubr.bf16.gmra.mrb[0].mxu0 %v2344
    %v3710 = vpop.f32.mrb[0].mxu0
    %v3711 = vadd.f32 0.0, %v3710
    %v3712 = vpop.f32.mrb[0].mxu0
    %v3713 = vpop.f32.mrb[0].mxu0
    %v3714 = vadd.f32 0.0, %v3713
    %v3715 = vpop.f32.mrb[0].mxu0
    %3716 = vmatprep.mubr.bf16.mxu0 0
    %3717 = vmatmul.mubr.bf16.gmra.mrb[0].mxu0 %v2347
    %v3718 = vpop.f32.mrb[0].mxu0
    %v3719 = vadd.f32 0.0, %v3718
    %v3720 = vpop.f32.mrb[0].mxu0
    %v3721 = vpop.f32.mrb[0].mxu0
    %v3722 = vadd.f32 0.0, %v3721
    %v3723 = vpop.f32.mrb[0].mxu0
    %3724 = vmatprep.mubr.bf16.mxu0 0
    %3725 = vmatmul.mubr.bf16.gmra.mrb[0].mxu0 %v3564
    %v3726 = vpop.f32.mrb[0].mxu0
    %v3727 = vadd.f32 0.0, %v3726
    %v3728 = vpop.f32.mrb[0].mxu0
    %v3729 = vpop.f32.mrb[0].mxu0
    %v3730 = vadd.f32 0.0, %v3729
    %v3731 = vpop.f32.mrb[0].mxu0
    %3732 = vmatprep.mubr.bf16.mxu0 0
    %3733 = vmatmul.mubr.bf16.gmra.mrb[0].mxu0 %v2353
    %v3734 = vpop.f32.mrb[0].mxu0
    %v3735 = vadd.f32 0.0, %v3734
    %v3736 = vpop.f32.mrb[0].mxu0
    %v3737 = vpop.f32.mrb[0].mxu0
    %v3738 = vadd.f32 0.0, %v3737
    %v3739 = vpop.f32.mrb[0].mxu0
    %3740 = vmatprep.mubr.bf16.mxu0 0
    %3741 = vmatmul.mubr.bf16.gmra.mrb[0].mxu0 %v2356
    %v3742 = vpop.f32.mrb[0].mxu0
    %v3743 = vadd.f32 0.0, %v3742
    %v3744 = vpop.f32.mrb[0].mxu0
    %v3745 = vpop.f32.mrb[0].mxu0
    %v3746 = vadd.f32 0.0, %v3745
    %v3747 = vpop.f32.mrb[0].mxu0
    %3748 = vmatprep.mubr.bf16.mxu0 0
    %3749 = vmatmul.mubr.bf16.gmra.mrb[0].mxu0 %v2359
    %v3750 = vpop.f32.mrb[0].mxu0
    %v3751 = vadd.f32 0.0, %v3750
    %v3752 = vpop.f32.mrb[0].mxu0
    %v3753 = vpop.f32.mrb[0].mxu0
    %v3754 = vadd.f32 0.0, %v3753
    %v3755 = vpop.f32.mrb[0].mxu0
    %3756 = vmatprep.mubr.bf16.mxu0 0
    %3757 = vmatmul.mubr.bf16.gmra.mrb[0].mxu0 %v2362
    %v3758 = vpop.f32.mrb[0].mxu0
    %v3759 = vadd.f32 0.0, %v3758
    %v3760 = vpop.f32.mrb[0].mxu0
    %v3761 = vpop.f32.mrb[0].mxu0
    %v3762 = vadd.f32 0.0, %v3761
    %v3763 = vpop.f32.mrb[0].mxu0
    %3764 = vmatprep.mubr.bf16.mxu0 0
    %3765 = vmatmul.mubr.bf16.gmra.mrb[0].mxu0 %v2365
    %v3766 = vpop.f32.mrb[0].mxu0
    %v3767 = vadd.f32 0.0, %v3766
    %v3768 = vpop.f32.mrb[0].mxu0
    %v3769 = vpop.f32.mrb[0].mxu0
    %v3770 = vadd.f32 0.0, %v3769
    %v3771 = vpop.f32.mrb[0].mxu0
    %3772 = vmatprep.mubr.bf16.mxu0 0
    %3773 = vmatmul.mubr.bf16.gmra.mrb[0].mxu0 %v2368
    %v3774 = vpop.f32.mrb[0].mxu0
    %v3775 = vadd.f32 0.0, %v3774
    %v3776 = vpop.f32.mrb[0].mxu0
    %v3777 = vpop.f32.mrb[0].mxu0
    %v3778 = vadd.f32 0.0, %v3777
    %v3779 = vpop.f32.mrb[0].mxu0
    %3780 = vmatprep.mubr.bf16.mxu0 0
    %3781 = vmatmul.mubr.bf16.gmra.mrb[0].mxu0 %v2371
    %v3782 = vpop.f32.mrb[0].mxu0
    %v3783 = vadd.f32 0.0, %v3782
    %v3784 = vpop.f32.mrb[0].mxu0
    %v3785 = vpop.f32.mrb[0].mxu0
    %v3786 = vadd.f32 0.0, %v3785
    %v3787 = vpop.f32.mrb[0].mxu0
    %3788 = vmatprep.mubr.bf16.mxu0 0
    %3789 = vmatmul.mubr.bf16.gmra.mrb[0].mxu0 %v2374
    %v3790 = vpop.f32.mrb[0].mxu0
    %v3791 = vadd.f32 0.0, %v3790
    %v3792 = vpop.f32.mrb[0].mxu0
    %v3793 = vpop.f32.mrb[0].mxu0
    %v3794 = vadd.f32 0.0, %v3793
    %v3795 = vpop.f32.mrb[0].mxu0
    %3796 = vmatprep.mubr.bf16.mxu0 0
    %3797 = vmatmul.mubr.bf16.gmra.mrb[0].mxu0 %v2377
    %v3798 = vpop.f32.mrb[0].mxu0
    %v3799 = vadd.f32 0.0, %v3798
    %v3800 = vpop.f32.mrb[0].mxu0
    %v3801 = vpop.f32.mrb[0].mxu0
    %v3802 = vadd.f32 0.0, %v3801
    %v3803 = vpop.f32.mrb[0].mxu0
    %3804 = vmatprep.mubr.bf16.mxu0 0
    %3805 = vmatmul.mubr.bf16.gmra.mrb[0].mxu0 %v2380
    %v3806 = vpop.f32.mrb[0].mxu0
    %v3807 = vadd.f32 0.0, %v3806
    %v3808 = vpop.f32.mrb[0].mxu0
    %v3809 = vpop.f32.mrb[0].mxu0
    %v3810 = vadd.f32 0.0, %v3809
    %v3811 = vpop.f32.mrb[0].mxu0
    %3812 = vmatprep.mubr.bf16.mxu0 0
    %3813 = vmatmul.mubr.bf16.gmra.mrb[0].mxu0 %v2383
    %v3814 = vpop.f32.mrb[0].mxu0
    %v3815 = vadd.f32 0.0, %v3814
    %v3816 = vpop.f32.mrb[0].mxu0
    %v3817 = vpop.f32.mrb[0].mxu0
    %v3818 = vadd.f32 0.0, %v3817
    %v3819 = vpop.f32.mrb[0].mxu0
    %3820 = vmatprep.mubr.bf16.mxu0 0
    %3821 = vmatmul.mubr.bf16.gmra.mrb[0].mxu0 %v2386
    %v3822 = vpop.f32.mrb[0].mxu0
    %v3823 = vadd.f32 0.0, %v3822
    %v3824 = vpop.f32.mrb[0].mxu0
    %v3825 = vpop.f32.mrb[0].mxu0
    %v3826 = vadd.f32 0.0, %v3825
    %v3827 = vpop.f32.mrb[0].mxu0
    %3828 = vmatprep.mubr.bf16.mxu0 0
    %3829 = vmatmul.mubr.bf16.gmra.mrb[0].mxu0 %v2389
    %v3830 = vpop.f32.mrb[0].mxu0
    %v3831 = vadd.f32 0.0, %v3830
    %v3832 = vpop.f32.mrb[0].mxu0
    %v3833 = vpop.f32.mrb[0].mxu0
    %v3834 = vadd.f32 0.0, %v3833
    %v3835 = vpop.f32.mrb[0].mxu0
    %3836 = vmatprep.mubr.bf16.mxu0 0
    %3837 = vmatmul.mubr.bf16.gmra.mrb[0].mxu0 %v2392
    %v3838 = vpop.f32.mrb[0].mxu0
    %v3839 = vadd.f32 0.0, %v3838
    %v3840 = vpop.f32.mrb[0].mxu0
    %v3841 = vpop.f32.mrb[0].mxu0
    %v3842 = vadd.f32 0.0, %v3841
    %v3843 = vpop.f32.mrb[0].mxu0
    %3844 = vmatprep.mubr.bf16.mxu0 0
    %3845 = vmatmul.mubr.bf16.gmra.mrb[0].mxu0 %v2395
    %v3846 = vpop.f32.mrb[0].mxu0
    %v3847 = vadd.f32 0.0, %v3846
    %v3848 = vpop.f32.mrb[0].mxu0
    %v3849 = vpop.f32.mrb[0].mxu0
    %v3850 = vadd.f32 0.0, %v3849
    %v3851 = vpop.f32.mrb[0].mxu0
    %3852 = vmatprep.mubr.bf16.mxu0 0
    %3853 = vmatmul.mubr.bf16.gmra.mrb[0].mxu0 %v3567
    %v3854 = vpop.f32.mrb[0].mxu0
    %v3855 = vadd.f32 0.0, %v3854
    %v3856 = vpop.f32.mrb[0].mxu0
    %v3857 = vpop.f32.mrb[0].mxu0
    %v3858 = vadd.f32 0.0, %v3857
    %v3859 = vpop.f32.mrb[0].mxu0
    %3860 = vdwg.mxu0
    %v3861 = vadd.f32 %v3477, %v3607
    %v3862 = vadd.f32 %v3478, %v3610
    %v3863 = vadd.f32 %v3479, %v3615
    %v3864 = vadd.f32 %v3480, %v3618
    %v3865 = vadd.f32 %v3481, %v3623
    %v3866 = vadd.f32 %v3482, %v3626
    %v3867 = vadd.f32 %v3483, %v3631
    %v3868 = vadd.f32 %v3484, %v3634
    %v3869 = vadd.f32 %v3485, %v3639
    %v3870 = vadd.f32 %v3486, %v3642
    %v3871 = vadd.f32 %v3487, %v3647
    %v3872 = vadd.f32 %v3488, %v3650
    %v3873 = vadd.f32 %v3489, %v3655
    %v3874 = vadd.f32 %v3490, %v3658
    %v3875 = vadd.f32 %v3491, %v3663
    %v3876 = vadd.f32 %v3492, %v3666
    %v3877 = vadd.f32 %v3493, %v3671
    %v3878 = vadd.f32 %v3494, %v3674
    %v3879 = vadd.f32 %v3495, %v3679
    %v3880 = vadd.f32 %v3496, %v3682
    %v3881 = vadd.f32 %v3497, %v3687
    %v3882 = vadd.f32 %v3498, %v3690
    %v3883 = vadd.f32 %v3499, %v3695
    %v3884 = vadd.f32 %v3500, %v3698
    %v3885 = vadd.f32 %v3501, %v3703
    %v3886 = vadd.f32 %v3502, %v3706
    %v3887 = vadd.f32 %v3503, %v3711
    %v3888 = vadd.f32 %v3504, %v3714
    %v3889 = vadd.f32 %v3505, %v3719
    %v3890 = vadd.f32 %v3506, %v3722
    %v3891 = vadd.f32 %v3507, %v3727
    %v3892 = vadd.f32 %v3508, %v3730
    %v3893 = vadd.f32 %v3509, %v3735
    %v3894 = vadd.f32 %v3510, %v3738
    %v3895 = vadd.f32 %v3511, %v3743
    %v3896 = vadd.f32 %v3512, %v3746
    %v3897 = vadd.f32 %v3513, %v3751
    %v3898 = vadd.f32 %v3514, %v3754
    %v3899 = vadd.f32 %v3515, %v3759
    %v3900 = vadd.f32 %v3516, %v3762
    %v3901 = vadd.f32 %v3517, %v3767
    %v3902 = vadd.f32 %v3518, %v3770
    %v3903 = vadd.f32 %v3519, %v3775
    %v3904 = vadd.f32 %v3520, %v3778
    %v3905 = vadd.f32 %v3521, %v3783
    %v3906 = vadd.f32 %v3522, %v3786
    %v3907 = vadd.f32 %v3523, %v3791
    %v3908 = vadd.f32 %v3524, %v3794
    %v3909 = vadd.f32 %v3525, %v3799
    %v3910 = vadd.f32 %v3526, %v3802
    %v3911 = vadd.f32 %v3527, %v3807
    %v3912 = vadd.f32 %v3528, %v3810
    %v3913 = vadd.f32 %v3529, %v3815
    %v3914 = vadd.f32 %v3530, %v3818
    %v3915 = vadd.f32 %v3531, %v3823
    %v3916 = vadd.f32 %v3532, %v3826
    %v3917 = vadd.f32 %v3533, %v3831
    %v3918 = vadd.f32 %v3534, %v3834
    %v3919 = vadd.f32 %v3535, %v3839
    %v3920 = vadd.f32 %v3536, %v3842
    %v3921 = vadd.f32 %v3537, %v3847
    %v3922 = vadd.f32 %v3538, %v3850
    %v3923 = vadd.f32 %v3539, %v3855
    %v3924 = vadd.f32 %v3540, %v3858
    %v3929 = vunpack.c.l.b16 %v75
    %v3930 = vunpack.c.l.b16 %v76
    %v3931 = vunpack.c.l.b16 %v129
    %v3932 = vunpack.c.l.b16 %v130
    %v3933 = vpack.c.b16 %v3930, %v3929
    %v3934 = vpack.c.b16 %v3932, %v3931
    %v3936 = vsel %vm1008, %v3933, 0
    %v3939 = vsel %vm1008, %v3934, 0
    %v3942 = vsel %vm1105, %v138, 0
    %3944 = vmatprep.subr.bf16.mxu0 0
    %3945 = vmatpush1.bf16.msra.mxu0 %v3942
    %3946 = vmatprep.subr.bf16.mxu0 0
    %3947 = vmatpush1.bf16.msra.mxu0 0
    %3948 = vmatprep.subr.bf16.mxu0 0
    %3949 = vmatpush1.bf16.msra.mxu0 0
    %3950 = vmatprep.subr.bf16.mxu0 0
    %3951 = vmatpush1.bf16.msra.mxu0 0
    %3952 = vmatprep.subr.bf16.mxu0 0
    %3953 = vmatpush1.bf16.msra.mxu0 0
    %3954 = vmatprep.subr.bf16.mxu0 0
    %3955 = vmatpush1.bf16.msra.mxu0 0
    %3956 = vmatprep.subr.bf16.mxu0 0
    %3957 = vmatpush1.bf16.msra.mxu0 0
    %3958 = vmatprep.subr.bf16.mxu0 0
    %3959 = vmatpush1.bf16.msra.mxu0 0
    %3960 = vmatprep.subr.bf16.mxu0 0
    %3961 = vmatpush1.bf16.msra.mxu0 0
    %3962 = vmatprep.subr.bf16.mxu0 0
    %3963 = vmatpush1.bf16.msra.mxu0 0
    %3964 = vmatprep.subr.bf16.mxu0 0
    %3965 = vmatpush1.bf16.msra.mxu0 0
    %3966 = vmatprep.subr.bf16.mxu0 0
    %3967 = vmatpush1.bf16.msra.mxu0 0
    %3968 = vmatprep.subr.bf16.mxu0 0
    %3969 = vmatpush1.bf16.msra.mxu0 0
    %3970 = vmatprep.subr.bf16.mxu0 0
    %3971 = vmatpush1.bf16.msra.mxu0 0
    %3972 = vmatprep.subr.bf16.mxu0 0
    %3973 = vmatpush1.bf16.msra.mxu0 0
    %3974 = vmatprep.subr.bf16.mxu0 0
    %3975 = vmatpush1.bf16.msra.mxu0 0
    %3976 = vmatprep.mubr.bf16.mxu0 0
    %3977 = vmatmul.mubr.bf16.gmra.mrb[0].mxu0 %v1565
    %v3978 = vpop.f32.mrb[0].mxu0
    %v3979 = vadd.f32 0.0, %v3978
    %v3980 = vpop.f32.mrb[0].mxu0
    %v3981 = vpop.f32.mrb[0].mxu0
    %v3982 = vadd.f32 0.0, %v3981
    %v3983 = vpop.f32.mrb[0].mxu0
    %3984 = vmatprep.mubr.bf16.mxu0 0
    %3985 = vmatmul.mubr.bf16.gmra.mrb[0].mxu0 %v1568
    %v3986 = vpop.f32.mrb[0].mxu0
    %v3987 = vadd.f32 0.0, %v3986
    %v3988 = vpop.f32.mrb[0].mxu0
    %v3989 = vpop.f32.mrb[0].mxu0
    %v3990 = vadd.f32 0.0, %v3989
    %v3991 = vpop.f32.mrb[0].mxu0
    %3992 = vmatprep.mubr.bf16.mxu0 0
    %3993 = vmatmul.mubr.bf16.gmra.mrb[0].mxu0 %v1571
    %v3994 = vpop.f32.mrb[0].mxu0
    %v3995 = vadd.f32 0.0, %v3994
    %v3996 = vpop.f32.mrb[0].mxu0
    %v3997 = vpop.f32.mrb[0].mxu0
    %v3998 = vadd.f32 0.0, %v3997
    %v3999 = vpop.f32.mrb[0].mxu0
    %4000 = vmatprep.mubr.bf16.mxu0 0
    %4001 = vmatmul.mubr.bf16.gmra.mrb[0].mxu0 %v1574
    %v4002 = vpop.f32.mrb[0].mxu0
    %v4003 = vadd.f32 0.0, %v4002
    %v4004 = vpop.f32.mrb[0].mxu0
    %v4005 = vpop.f32.mrb[0].mxu0
    %v4006 = vadd.f32 0.0, %v4005
    %v4007 = vpop.f32.mrb[0].mxu0
    %4008 = vmatprep.mubr.bf16.mxu0 0
    %4009 = vmatmul.mubr.bf16.gmra.mrb[0].mxu0 %v1577
    %v4010 = vpop.f32.mrb[0].mxu0
    %v4011 = vadd.f32 0.0, %v4010
    %v4012 = vpop.f32.mrb[0].mxu0
    %v4013 = vpop.f32.mrb[0].mxu0
    %v4014 = vadd.f32 0.0, %v4013
    %v4015 = vpop.f32.mrb[0].mxu0
    %4016 = vmatprep.mubr.bf16.mxu0 0
    %4017 = vmatmul.mubr.bf16.gmra.mrb[0].mxu0 %v1580
    %v4018 = vpop.f32.mrb[0].mxu0
    %v4019 = vadd.f32 0.0, %v4018
    %v4020 = vpop.f32.mrb[0].mxu0
    %v4021 = vpop.f32.mrb[0].mxu0
    %v4022 = vadd.f32 0.0, %v4021
    %v4023 = vpop.f32.mrb[0].mxu0
    %4024 = vmatprep.mubr.bf16.mxu0 0
    %4025 = vmatmul.mubr.bf16.gmra.mrb[0].mxu0 %v1583
    %v4026 = vpop.f32.mrb[0].mxu0
    %v4027 = vadd.f32 0.0, %v4026
    %v4028 = vpop.f32.mrb[0].mxu0
    %v4029 = vpop.f32.mrb[0].mxu0
    %v4030 = vadd.f32 0.0, %v4029
    %v4031 = vpop.f32.mrb[0].mxu0
    %4032 = vmatprep.mubr.bf16.mxu0 0
    %4033 = vmatmul.mubr.bf16.gmra.mrb[0].mxu0 %v1586
    %v4034 = vpop.f32.mrb[0].mxu0
    %v4035 = vadd.f32 0.0, %v4034
    %v4036 = vpop.f32.mrb[0].mxu0
    %v4037 = vpop.f32.mrb[0].mxu0
    %v4038 = vadd.f32 0.0, %v4037
    %v4039 = vpop.f32.mrb[0].mxu0
    %4040 = vmatprep.mubr.bf16.mxu0 0
    %4041 = vmatmul.mubr.bf16.gmra.mrb[0].mxu0 %v1589
    %v4042 = vpop.f32.mrb[0].mxu0
    %v4043 = vadd.f32 0.0, %v4042
    %v4044 = vpop.f32.mrb[0].mxu0
    %v4045 = vpop.f32.mrb[0].mxu0
    %v4046 = vadd.f32 0.0, %v4045
    %v4047 = vpop.f32.mrb[0].mxu0
    %4048 = vmatprep.mubr.bf16.mxu0 0
    %4049 = vmatmul.mubr.bf16.gmra.mrb[0].mxu0 %v1592
    %v4050 = vpop.f32.mrb[0].mxu0
    %v4051 = vadd.f32 0.0, %v4050
    %v4052 = vpop.f32.mrb[0].mxu0
    %v4053 = vpop.f32.mrb[0].mxu0
    %v4054 = vadd.f32 0.0, %v4053
    %v4055 = vpop.f32.mrb[0].mxu0
    %4056 = vmatprep.mubr.bf16.mxu0 0
    %4057 = vmatmul.mubr.bf16.gmra.mrb[0].mxu0 %v1595
    %v4058 = vpop.f32.mrb[0].mxu0
    %v4059 = vadd.f32 0.0, %v4058
    %v4060 = vpop.f32.mrb[0].mxu0
    %v4061 = vpop.f32.mrb[0].mxu0
    %v4062 = vadd.f32 0.0, %v4061
    %v4063 = vpop.f32.mrb[0].mxu0
    %4064 = vmatprep.mubr.bf16.mxu0 0
    %4065 = vmatmul.mubr.bf16.gmra.mrb[0].mxu0 %v1598
    %v4066 = vpop.f32.mrb[0].mxu0
    %v4067 = vadd.f32 0.0, %v4066
    %v4068 = vpop.f32.mrb[0].mxu0
    %v4069 = vpop.f32.mrb[0].mxu0
    %v4070 = vadd.f32 0.0, %v4069
    %v4071 = vpop.f32.mrb[0].mxu0
    %4072 = vmatprep.mubr.bf16.mxu0 0
    %4073 = vmatmul.mubr.bf16.gmra.mrb[0].mxu0 %v1601
    %v4074 = vpop.f32.mrb[0].mxu0
    %v4075 = vadd.f32 0.0, %v4074
    %v4076 = vpop.f32.mrb[0].mxu0
    %v4077 = vpop.f32.mrb[0].mxu0
    %v4078 = vadd.f32 0.0, %v4077
    %v4079 = vpop.f32.mrb[0].mxu0
    %4080 = vmatprep.mubr.bf16.mxu0 0
    %4081 = vmatmul.mubr.bf16.gmra.mrb[0].mxu0 %v1604
    %v4082 = vpop.f32.mrb[0].mxu0
    %v4083 = vadd.f32 0.0, %v4082
    %v4084 = vpop.f32.mrb[0].mxu0
    %v4085 = vpop.f32.mrb[0].mxu0
    %v4086 = vadd.f32 0.0, %v4085
    %v4087 = vpop.f32.mrb[0].mxu0
    %4088 = vmatprep.mubr.bf16.mxu0 0
    %4089 = vmatmul.mubr.bf16.gmra.mrb[0].mxu0 %v2764
    %v4090 = vpop.f32.mrb[0].mxu0
    %v4091 = vadd.f32 0.0, %v4090
    %v4092 = vpop.f32.mrb[0].mxu0
    %v4093 = vpop.f32.mrb[0].mxu0
    %v4094 = vadd.f32 0.0, %v4093
    %v4095 = vpop.f32.mrb[0].mxu0
    %4096 = vmatprep.mubr.bf16.mxu0 0
    %4097 = vmatmul.mubr.bf16.gmra.mrb[0].mxu0 %v3936
    %v4098 = vpop.f32.mrb[0].mxu0
    %v4099 = vadd.f32 0.0, %v4098
    %v4100 = vpop.f32.mrb[0].mxu0
    %v4101 = vpop.f32.mrb[0].mxu0
    %v4102 = vadd.f32 0.0, %v4101
    %v4103 = vpop.f32.mrb[0].mxu0
    %4104 = vmatprep.mubr.bf16.mxu0 0
    %4105 = vmatmul.mubr.bf16.gmra.mrb[0].mxu0 %v1613
    %v4106 = vpop.f32.mrb[0].mxu0
    %v4107 = vadd.f32 0.0, %v4106
    %v4108 = vpop.f32.mrb[0].mxu0
    %v4109 = vpop.f32.mrb[0].mxu0
    %v4110 = vadd.f32 0.0, %v4109
    %v4111 = vpop.f32.mrb[0].mxu0
    %4112 = vmatprep.mubr.bf16.mxu0 0
    %4113 = vmatmul.mubr.bf16.gmra.mrb[0].mxu0 %v1616
    %v4114 = vpop.f32.mrb[0].mxu0
    %v4115 = vadd.f32 0.0, %v4114
    %v4116 = vpop.f32.mrb[0].mxu0
    %v4117 = vpop.f32.mrb[0].mxu0
    %v4118 = vadd.f32 0.0, %v4117
    %v4119 = vpop.f32.mrb[0].mxu0
    %4120 = vmatprep.mubr.bf16.mxu0 0
    %4121 = vmatmul.mubr.bf16.gmra.mrb[0].mxu0 %v1619
    %v4122 = vpop.f32.mrb[0].mxu0
    %v4123 = vadd.f32 0.0, %v4122
    %v4124 = vpop.f32.mrb[0].mxu0
    %v4125 = vpop.f32.mrb[0].mxu0
    %v4126 = vadd.f32 0.0, %v4125
    %v4127 = vpop.f32.mrb[0].mxu0
    %4128 = vmatprep.mubr.bf16.mxu0 0
    %4129 = vmatmul.mubr.bf16.gmra.mrb[0].mxu0 %v1622
    %v4130 = vpop.f32.mrb[0].mxu0
    %v4131 = vadd.f32 0.0, %v4130
    %v4132 = vpop.f32.mrb[0].mxu0
    %v4133 = vpop.f32.mrb[0].mxu0
    %v4134 = vadd.f32 0.0, %v4133
    %v4135 = vpop.f32.mrb[0].mxu0
    %4136 = vmatprep.mubr.bf16.mxu0 0
    %4137 = vmatmul.mubr.bf16.gmra.mrb[0].mxu0 %v1625
    %v4138 = vpop.f32.mrb[0].mxu0
    %v4139 = vadd.f32 0.0, %v4138
    %v4140 = vpop.f32.mrb[0].mxu0
    %v4141 = vpop.f32.mrb[0].mxu0
    %v4142 = vadd.f32 0.0, %v4141
    %v4143 = vpop.f32.mrb[0].mxu0
    %4144 = vmatprep.mubr.bf16.mxu0 0
    %4145 = vmatmul.mubr.bf16.gmra.mrb[0].mxu0 %v1628
    %v4146 = vpop.f32.mrb[0].mxu0
    %v4147 = vadd.f32 0.0, %v4146
    %v4148 = vpop.f32.mrb[0].mxu0
    %v4149 = vpop.f32.mrb[0].mxu0
    %v4150 = vadd.f32 0.0, %v4149
    %v4151 = vpop.f32.mrb[0].mxu0
    %4152 = vmatprep.mubr.bf16.mxu0 0
    %4153 = vmatmul.mubr.bf16.gmra.mrb[0].mxu0 %v1631
    %v4154 = vpop.f32.mrb[0].mxu0
    %v4155 = vadd.f32 0.0, %v4154
    %v4156 = vpop.f32.mrb[0].mxu0
    %v4157 = vpop.f32.mrb[0].mxu0
    %v4158 = vadd.f32 0.0, %v4157
    %v4159 = vpop.f32.mrb[0].mxu0
    %4160 = vmatprep.mubr.bf16.mxu0 0
    %4161 = vmatmul.mubr.bf16.gmra.mrb[0].mxu0 %v1634
    %v4162 = vpop.f32.mrb[0].mxu0
    %v4163 = vadd.f32 0.0, %v4162
    %v4164 = vpop.f32.mrb[0].mxu0
    %v4165 = vpop.f32.mrb[0].mxu0
    %v4166 = vadd.f32 0.0, %v4165
    %v4167 = vpop.f32.mrb[0].mxu0
    %4168 = vmatprep.mubr.bf16.mxu0 0
    %4169 = vmatmul.mubr.bf16.gmra.mrb[0].mxu0 %v1637
    %v4170 = vpop.f32.mrb[0].mxu0
    %v4171 = vadd.f32 0.0, %v4170
    %v4172 = vpop.f32.mrb[0].mxu0
    %v4173 = vpop.f32.mrb[0].mxu0
    %v4174 = vadd.f32 0.0, %v4173
    %v4175 = vpop.f32.mrb[0].mxu0
    %4176 = vmatprep.mubr.bf16.mxu0 0
    %4177 = vmatmul.mubr.bf16.gmra.mrb[0].mxu0 %v1640
    %v4178 = vpop.f32.mrb[0].mxu0
    %v4179 = vadd.f32 0.0, %v4178
    %v4180 = vpop.f32.mrb[0].mxu0
    %v4181 = vpop.f32.mrb[0].mxu0
    %v4182 = vadd.f32 0.0, %v4181
    %v4183 = vpop.f32.mrb[0].mxu0
    %4184 = vmatprep.mubr.bf16.mxu0 0
    %4185 = vmatmul.mubr.bf16.gmra.mrb[0].mxu0 %v1643
    %v4186 = vpop.f32.mrb[0].mxu0
    %v4187 = vadd.f32 0.0, %v4186
    %v4188 = vpop.f32.mrb[0].mxu0
    %v4189 = vpop.f32.mrb[0].mxu0
    %v4190 = vadd.f32 0.0, %v4189
    %v4191 = vpop.f32.mrb[0].mxu0
    %4192 = vmatprep.mubr.bf16.mxu0 0
    %4193 = vmatmul.mubr.bf16.gmra.mrb[0].mxu0 %v1646
    %v4194 = vpop.f32.mrb[0].mxu0
    %v4195 = vadd.f32 0.0, %v4194
    %v4196 = vpop.f32.mrb[0].mxu0
    %v4197 = vpop.f32.mrb[0].mxu0
    %v4198 = vadd.f32 0.0, %v4197
    %v4199 = vpop.f32.mrb[0].mxu0
    %4200 = vmatprep.mubr.bf16.mxu0 0
    %4201 = vmatmul.mubr.bf16.gmra.mrb[0].mxu0 %v1649
    %v4202 = vpop.f32.mrb[0].mxu0
    %v4203 = vadd.f32 0.0, %v4202
    %v4204 = vpop.f32.mrb[0].mxu0
    %v4205 = vpop.f32.mrb[0].mxu0
    %v4206 = vadd.f32 0.0, %v4205
    %v4207 = vpop.f32.mrb[0].mxu0
    %4208 = vmatprep.mubr.bf16.mxu0 0
    %4209 = vmatmul.mubr.bf16.gmra.mrb[0].mxu0 %v1652
    %v4210 = vpop.f32.mrb[0].mxu0
    %v4211 = vadd.f32 0.0, %v4210
    %v4212 = vpop.f32.mrb[0].mxu0
    %v4213 = vpop.f32.mrb[0].mxu0
    %v4214 = vadd.f32 0.0, %v4213
    %v4215 = vpop.f32.mrb[0].mxu0
    %4216 = vmatprep.mubr.bf16.mxu0 0
    %4217 = vmatmul.mubr.bf16.gmra.mrb[0].mxu0 %v2767
    %v4218 = vpop.f32.mrb[0].mxu0
    %v4219 = vadd.f32 0.0, %v4218
    %v4220 = vpop.f32.mrb[0].mxu0
    %v4221 = vpop.f32.mrb[0].mxu0
    %v4222 = vadd.f32 0.0, %v4221
    %v4223 = vpop.f32.mrb[0].mxu0
    %4224 = vmatprep.mubr.bf16.mxu0 0
    %4225 = vmatmul.mubr.bf16.gmra.mrb[0].mxu0 %v3939
    %v4226 = vpop.f32.mrb[0].mxu0
    %v4227 = vadd.f32 0.0, %v4226
    %v4228 = vpop.f32.mrb[0].mxu0
    %v4229 = vpop.f32.mrb[0].mxu0
    %v4230 = vadd.f32 0.0, %v4229
    %v4231 = vpop.f32.mrb[0].mxu0
    %4232 = vdwg.mxu0
    %v4233 = vadd.f32 %v3861, %v3979
    %v4234 = vadd.f32 %v3862, %v3982
    %v4235 = vadd.f32 %v3863, %v3987
    %v4236 = vadd.f32 %v3864, %v3990
    %v4237 = vadd.f32 %v3865, %v3995
    %v4238 = vadd.f32 %v3866, %v3998
    %v4239 = vadd.f32 %v3867, %v4003
    %v4240 = vadd.f32 %v3868, %v4006
    %v4241 = vadd.f32 %v3869, %v4011
    %v4242 = vadd.f32 %v3870, %v4014
    %v4243 = vadd.f32 %v3871, %v4019
    %v4244 = vadd.f32 %v3872, %v4022
    %v4245 = vadd.f32 %v3873, %v4027
    %v4246 = vadd.f32 %v3874, %v4030
    %v4247 = vadd.f32 %v3875, %v4035
    %v4248 = vadd.f32 %v3876, %v4038
    %v4249 = vadd.f32 %v3877, %v4043
    %v4250 = vadd.f32 %v3878, %v4046
    %v4251 = vadd.f32 %v3879, %v4051
    %v4252 = vadd.f32 %v3880, %v4054
    %v4253 = vadd.f32 %v3881, %v4059
    %v4254 = vadd.f32 %v3882, %v4062
    %v4255 = vadd.f32 %v3883, %v4067
    %v4256 = vadd.f32 %v3884, %v4070
    %v4257 = vadd.f32 %v3885, %v4075
    %v4258 = vadd.f32 %v3886, %v4078
    %v4259 = vadd.f32 %v3887, %v4083
    %v4260 = vadd.f32 %v3888, %v4086
    %v4261 = vadd.f32 %v3889, %v4091
    %v4262 = vadd.f32 %v3890, %v4094
    %v4263 = vadd.f32 %v3891, %v4099
    %v4264 = vadd.f32 %v3892, %v4102
    %v4265 = vadd.f32 %v3893, %v4107
    %v4266 = vadd.f32 %v3894, %v4110
    %v4267 = vadd.f32 %v3895, %v4115
    %v4268 = vadd.f32 %v3896, %v4118
    %v4269 = vadd.f32 %v3897, %v4123
    %v4270 = vadd.f32 %v3898, %v4126
    %v4271 = vadd.f32 %v3899, %v4131
    %v4272 = vadd.f32 %v3900, %v4134
    %v4273 = vadd.f32 %v3901, %v4139
    %v4274 = vadd.f32 %v3902, %v4142
    %v4275 = vadd.f32 %v3903, %v4147
    %v4276 = vadd.f32 %v3904, %v4150
    %v4277 = vadd.f32 %v3905, %v4155
    %v4278 = vadd.f32 %v3906, %v4158
    %v4279 = vadd.f32 %v3907, %v4163
    %v4280 = vadd.f32 %v3908, %v4166
    %v4281 = vadd.f32 %v3909, %v4171
    %v4282 = vadd.f32 %v3910, %v4174
    %v4283 = vadd.f32 %v3911, %v4179
    %v4284 = vadd.f32 %v3912, %v4182
    %v4285 = vadd.f32 %v3913, %v4187
    %v4286 = vadd.f32 %v3914, %v4190
    %v4287 = vadd.f32 %v3915, %v4195
    %v4288 = vadd.f32 %v3916, %v4198
    %v4289 = vadd.f32 %v3917, %v4203
    %v4290 = vadd.f32 %v3918, %v4206
    %v4291 = vadd.f32 %v3919, %v4211
    %v4292 = vadd.f32 %v3920, %v4214
    %v4293 = vadd.f32 %v3921, %v4219
    %v4294 = vadd.f32 %v3922, %v4222
    %v4295 = vadd.f32 %v3923, %v4227
    %v4296 = vadd.f32 %v3924, %v4230
    %v4298 = vshrl.u32 %v75, 16
    %v4300 = vrot.slane %v4298, 4
    %v4301 = vshll.u32 %v75, 16
    %v4303 = vrot.slane %v4301, 5
    %v4304 = vor.u32 %v4300, %v4303
    %v4305 = vrot.slane %v4304, 4
    %v4307 = vshll.u32 %v76, 16
    %v4309 = vrot.slane %v4307, 5
    %v4310 = vsel %vm143, %v4305, %v4309
    %v4311 = vshrl.u32 %v76, 16
    %v4313 = vrot.slane %v4311, 4
    %v4314 = vor.u32 %v4313, %v4309
    %v4315 = vrot.slane %v4314, 4
    %v4317 = vshll.u32 %v77, 16
    %v4319 = vrot.slane %v4317, 5
    %v4320 = vsel %vm143, %v4315, %v4319
    %v4322 = vshrl.u32 %v129, 16
    %v4324 = vrot.slane %v4322, 4
    %v4325 = vshll.u32 %v129, 16
    %v4327 = vrot.slane %v4325, 5
    %v4328 = vor.u32 %v4324, %v4327
    %v4329 = vrot.slane %v4328, 4
    %v4331 = vshll.u32 %v130, 16
    %v4333 = vrot.slane %v4331, 5
    %v4334 = vsel %vm143, %v4329, %v4333
    %v4335 = vshrl.u32 %v130, 16
    %v4337 = vrot.slane %v4335, 4
    %v4338 = vor.u32 %v4337, %v4333
    %v4339 = vrot.slane %v4338, 4
    %v4341 = vshll.u32 %v131, 16
    %v4343 = vrot.slane %v4341, 5
    %v4344 = vsel %vm143, %v4339, %v4343
    %v4345 = vunpack.c.l.b16 %v4310
    %v4346 = vunpack.c.l.b16 %v4320
    %v4347 = vunpack.c.l.b16 %v4334
    %v4348 = vunpack.c.l.b16 %v4344
    %v4349 = vpack.c.b16 %v4346, %v4345
    %v4350 = vpack.c.b16 %v4348, %v4347
    %v4352 = vsel %vm1008, %v4349, 0
    %v4355 = vsel %vm1008, %v4350, 0
    %v4358 = vsel %vm1105, %v139, 0
    %4360 = vmatprep.subr.bf16.mxu0 0
    %4361 = vmatpush1.bf16.msra.mxu0 %v4358
    %4362 = vmatprep.subr.bf16.mxu0 0
    %4363 = vmatpush1.bf16.msra.mxu0 0
    %4364 = vmatprep.subr.bf16.mxu0 0
    %4365 = vmatpush1.bf16.msra.mxu0 0
    %4366 = vmatprep.subr.bf16.mxu0 0
    %4367 = vmatpush1.bf16.msra.mxu0 0
    %4368 = vmatprep.subr.bf16.mxu0 0
    %4369 = vmatpush1.bf16.msra.mxu0 0
    %4370 = vmatprep.subr.bf16.mxu0 0
    %4371 = vmatpush1.bf16.msra.mxu0 0
    %4372 = vmatprep.subr.bf16.mxu0 0
    %4373 = vmatpush1.bf16.msra.mxu0 0
    %4374 = vmatprep.subr.bf16.mxu0 0
    %4375 = vmatpush1.bf16.msra.mxu0 0
    %4376 = vmatprep.subr.bf16.mxu0 0
    %4377 = vmatpush1.bf16.msra.mxu0 0
    %4378 = vmatprep.subr.bf16.mxu0 0
    %4379 = vmatpush1.bf16.msra.mxu0 0
    %4380 = vmatprep.subr.bf16.mxu0 0
    %4381 = vmatpush1.bf16.msra.mxu0 0
    %4382 = vmatprep.subr.bf16.mxu0 0
    %4383 = vmatpush1.bf16.msra.mxu0 0
    %4384 = vmatprep.subr.bf16.mxu0 0
    %4385 = vmatpush1.bf16.msra.mxu0 0
    %4386 = vmatprep.subr.bf16.mxu0 0
    %4387 = vmatpush1.bf16.msra.mxu0 0
    %4388 = vmatprep.subr.bf16.mxu0 0
    %4389 = vmatpush1.bf16.msra.mxu0 0
    %4390 = vmatprep.subr.bf16.mxu0 0
    %4391 = vmatpush1.bf16.msra.mxu0 0
    %4392 = vmatprep.mubr.bf16.mxu0 0
    %4393 = vmatmul.mubr.bf16.gmra.mrb[0].mxu0 %v1016
    %v4394 = vpop.f32.mrb[0].mxu0
    %v4395 = vadd.f32 0.0, %v4394
    %v4396 = vpop.f32.mrb[0].mxu0
    %v4397 = vpop.f32.mrb[0].mxu0
    %v4398 = vadd.f32 0.0, %v4397
    %v4399 = vpop.f32.mrb[0].mxu0
    %4400 = vmatprep.mubr.bf16.mxu0 0
    %4401 = vmatmul.mubr.bf16.gmra.mrb[0].mxu0 %v1019
    %v4402 = vpop.f32.mrb[0].mxu0
    %v4403 = vadd.f32 0.0, %v4402
    %v4404 = vpop.f32.mrb[0].mxu0
    %v4405 = vpop.f32.mrb[0].mxu0
    %v4406 = vadd.f32 0.0, %v4405
    %v4407 = vpop.f32.mrb[0].mxu0
    %4408 = vmatprep.mubr.bf16.mxu0 0
    %4409 = vmatmul.mubr.bf16.gmra.mrb[0].mxu0 %v1022
    %v4410 = vpop.f32.mrb[0].mxu0
    %v4411 = vadd.f32 0.0, %v4410
    %v4412 = vpop.f32.mrb[0].mxu0
    %v4413 = vpop.f32.mrb[0].mxu0
    %v4414 = vadd.f32 0.0, %v4413
    %v4415 = vpop.f32.mrb[0].mxu0
    %4416 = vmatprep.mubr.bf16.mxu0 0
    %4417 = vmatmul.mubr.bf16.gmra.mrb[0].mxu0 %v1025
    %v4418 = vpop.f32.mrb[0].mxu0
    %v4419 = vadd.f32 0.0, %v4418
    %v4420 = vpop.f32.mrb[0].mxu0
    %v4421 = vpop.f32.mrb[0].mxu0
    %v4422 = vadd.f32 0.0, %v4421
    %v4423 = vpop.f32.mrb[0].mxu0
    %4424 = vmatprep.mubr.bf16.mxu0 0
    %4425 = vmatmul.mubr.bf16.gmra.mrb[0].mxu0 %v1028
    %v4426 = vpop.f32.mrb[0].mxu0
    %v4427 = vadd.f32 0.0, %v4426
    %v4428 = vpop.f32.mrb[0].mxu0
    %v4429 = vpop.f32.mrb[0].mxu0
    %v4430 = vadd.f32 0.0, %v4429
    %v4431 = vpop.f32.mrb[0].mxu0
    %4432 = vmatprep.mubr.bf16.mxu0 0
    %4433 = vmatmul.mubr.bf16.gmra.mrb[0].mxu0 %v1031
    %v4434 = vpop.f32.mrb[0].mxu0
    %v4435 = vadd.f32 0.0, %v4434
    %v4436 = vpop.f32.mrb[0].mxu0
    %v4437 = vpop.f32.mrb[0].mxu0
    %v4438 = vadd.f32 0.0, %v4437
    %v4439 = vpop.f32.mrb[0].mxu0
    %4440 = vmatprep.mubr.bf16.mxu0 0
    %4441 = vmatmul.mubr.bf16.gmra.mrb[0].mxu0 %v1034
    %v4442 = vpop.f32.mrb[0].mxu0
    %v4443 = vadd.f32 0.0, %v4442
    %v4444 = vpop.f32.mrb[0].mxu0
    %v4445 = vpop.f32.mrb[0].mxu0
    %v4446 = vadd.f32 0.0, %v4445
    %v4447 = vpop.f32.mrb[0].mxu0
    %4448 = vmatprep.mubr.bf16.mxu0 0
    %4449 = vmatmul.mubr.bf16.gmra.mrb[0].mxu0 %v1037
    %v4450 = vpop.f32.mrb[0].mxu0
    %v4451 = vadd.f32 0.0, %v4450
    %v4452 = vpop.f32.mrb[0].mxu0
    %v4453 = vpop.f32.mrb[0].mxu0
    %v4454 = vadd.f32 0.0, %v4453
    %v4455 = vpop.f32.mrb[0].mxu0
    %4456 = vmatprep.mubr.bf16.mxu0 0
    %4457 = vmatmul.mubr.bf16.gmra.mrb[0].mxu0 %v1040
    %v4458 = vpop.f32.mrb[0].mxu0
    %v4459 = vadd.f32 0.0, %v4458
    %v4460 = vpop.f32.mrb[0].mxu0
    %v4461 = vpop.f32.mrb[0].mxu0
    %v4462 = vadd.f32 0.0, %v4461
    %v4463 = vpop.f32.mrb[0].mxu0
    %4464 = vmatprep.mubr.bf16.mxu0 0
    %4465 = vmatmul.mubr.bf16.gmra.mrb[0].mxu0 %v1043
    %v4466 = vpop.f32.mrb[0].mxu0
    %v4467 = vadd.f32 0.0, %v4466
    %v4468 = vpop.f32.mrb[0].mxu0
    %v4469 = vpop.f32.mrb[0].mxu0
    %v4470 = vadd.f32 0.0, %v4469
    %v4471 = vpop.f32.mrb[0].mxu0
    %4472 = vmatprep.mubr.bf16.mxu0 0
    %4473 = vmatmul.mubr.bf16.gmra.mrb[0].mxu0 %v1046
    %v4474 = vpop.f32.mrb[0].mxu0
    %v4475 = vadd.f32 0.0, %v4474
    %v4476 = vpop.f32.mrb[0].mxu0
    %v4477 = vpop.f32.mrb[0].mxu0
    %v4478 = vadd.f32 0.0, %v4477
    %v4479 = vpop.f32.mrb[0].mxu0
    %4480 = vmatprep.mubr.bf16.mxu0 0
    %4481 = vmatmul.mubr.bf16.gmra.mrb[0].mxu0 %v1049
    %v4482 = vpop.f32.mrb[0].mxu0
    %v4483 = vadd.f32 0.0, %v4482
    %v4484 = vpop.f32.mrb[0].mxu0
    %v4485 = vpop.f32.mrb[0].mxu0
    %v4486 = vadd.f32 0.0, %v4485
    %v4487 = vpop.f32.mrb[0].mxu0
    %4488 = vmatprep.mubr.bf16.mxu0 0
    %4489 = vmatmul.mubr.bf16.gmra.mrb[0].mxu0 %v1052
    %v4490 = vpop.f32.mrb[0].mxu0
    %v4491 = vadd.f32 0.0, %v4490
    %v4492 = vpop.f32.mrb[0].mxu0
    %v4493 = vpop.f32.mrb[0].mxu0
    %v4494 = vadd.f32 0.0, %v4493
    %v4495 = vpop.f32.mrb[0].mxu0
    %4496 = vmatprep.mubr.bf16.mxu0 0
    %4497 = vmatmul.mubr.bf16.gmra.mrb[0].mxu0 %v1055
    %v4498 = vpop.f32.mrb[0].mxu0
    %v4499 = vadd.f32 0.0, %v4498
    %v4500 = vpop.f32.mrb[0].mxu0
    %v4501 = vpop.f32.mrb[0].mxu0
    %v4502 = vadd.f32 0.0, %v4501
    %v4503 = vpop.f32.mrb[0].mxu0
    %4504 = vmatprep.mubr.bf16.mxu0 0
    %4505 = vmatmul.mubr.bf16.gmra.mrb[0].mxu0 %v3180
    %v4506 = vpop.f32.mrb[0].mxu0
    %v4507 = vadd.f32 0.0, %v4506
    %v4508 = vpop.f32.mrb[0].mxu0
    %v4509 = vpop.f32.mrb[0].mxu0
    %v4510 = vadd.f32 0.0, %v4509
    %v4511 = vpop.f32.mrb[0].mxu0
    %4512 = vmatprep.mubr.bf16.mxu0 0
    %4513 = vmatmul.mubr.bf16.gmra.mrb[0].mxu0 %v4352
    %v4514 = vpop.f32.mrb[0].mxu0
    %v4515 = vadd.f32 0.0, %v4514
    %v4516 = vpop.f32.mrb[0].mxu0
    %v4517 = vpop.f32.mrb[0].mxu0
    %v4518 = vadd.f32 0.0, %v4517
    %v4519 = vpop.f32.mrb[0].mxu0
    %4520 = vmatprep.mubr.bf16.mxu0 0
    %4521 = vmatmul.mubr.bf16.gmra.mrb[0].mxu0 %v1064
    %v4522 = vpop.f32.mrb[0].mxu0
    %v4523 = vadd.f32 0.0, %v4522
    %v4524 = vpop.f32.mrb[0].mxu0
    %v4525 = vpop.f32.mrb[0].mxu0
    %v4526 = vadd.f32 0.0, %v4525
    %v4527 = vpop.f32.mrb[0].mxu0
    %4528 = vmatprep.mubr.bf16.mxu0 0
    %4529 = vmatmul.mubr.bf16.gmra.mrb[0].mxu0 %v1067
    %v4530 = vpop.f32.mrb[0].mxu0
    %v4531 = vadd.f32 0.0, %v4530
    %v4532 = vpop.f32.mrb[0].mxu0
    %v4533 = vpop.f32.mrb[0].mxu0
    %v4534 = vadd.f32 0.0, %v4533
    %v4535 = vpop.f32.mrb[0].mxu0
    %4536 = vmatprep.mubr.bf16.mxu0 0
    %4537 = vmatmul.mubr.bf16.gmra.mrb[0].mxu0 %v1070
    %v4538 = vpop.f32.mrb[0].mxu0
    %v4539 = vadd.f32 0.0, %v4538
    %v4540 = vpop.f32.mrb[0].mxu0
    %v4541 = vpop.f32.mrb[0].mxu0
    %v4542 = vadd.f32 0.0, %v4541
    %v4543 = vpop.f32.mrb[0].mxu0
    %4544 = vmatprep.mubr.bf16.mxu0 0
    %4545 = vmatmul.mubr.bf16.gmra.mrb[0].mxu0 %v1073
    %v4546 = vpop.f32.mrb[0].mxu0
    %v4547 = vadd.f32 0.0, %v4546
    %v4548 = vpop.f32.mrb[0].mxu0
    %v4549 = vpop.f32.mrb[0].mxu0
    %v4550 = vadd.f32 0.0, %v4549
    %v4551 = vpop.f32.mrb[0].mxu0
    %4552 = vmatprep.mubr.bf16.mxu0 0
    %4553 = vmatmul.mubr.bf16.gmra.mrb[0].mxu0 %v1076
    %v4554 = vpop.f32.mrb[0].mxu0
    %v4555 = vadd.f32 0.0, %v4554
    %v4556 = vpop.f32.mrb[0].mxu0
    %v4557 = vpop.f32.mrb[0].mxu0
    %v4558 = vadd.f32 0.0, %v4557
    %v4559 = vpop.f32.mrb[0].mxu0
    %4560 = vmatprep.mubr.bf16.mxu0 0
    %4561 = vmatmul.mubr.bf16.gmra.mrb[0].mxu0 %v1079
    %v4562 = vpop.f32.mrb[0].mxu0
    %v4563 = vadd.f32 0.0, %v4562
    %v4564 = vpop.f32.mrb[0].mxu0
    %v4565 = vpop.f32.mrb[0].mxu0
    %v4566 = vadd.f32 0.0, %v4565
    %v4567 = vpop.f32.mrb[0].mxu0
    %4568 = vmatprep.mubr.bf16.mxu0 0
    %4569 = vmatmul.mubr.bf16.gmra.mrb[0].mxu0 %v1082
    %v4570 = vpop.f32.mrb[0].mxu0
    %v4571 = vadd.f32 0.0, %v4570
    %v4572 = vpop.f32.mrb[0].mxu0
    %v4573 = vpop.f32.mrb[0].mxu0
    %v4574 = vadd.f32 0.0, %v4573
    %v4575 = vpop.f32.mrb[0].mxu0
    %4576 = vmatprep.mubr.bf16.mxu0 0
    %4577 = vmatmul.mubr.bf16.gmra.mrb[0].mxu0 %v1085
    %v4578 = vpop.f32.mrb[0].mxu0
    %v4579 = vadd.f32 0.0, %v4578
    %v4580 = vpop.f32.mrb[0].mxu0
    %v4581 = vpop.f32.mrb[0].mxu0
    %v4582 = vadd.f32 0.0, %v4581
    %v4583 = vpop.f32.mrb[0].mxu0
    %4584 = vmatprep.mubr.bf16.mxu0 0
    %4585 = vmatmul.mubr.bf16.gmra.mrb[0].mxu0 %v1088
    %v4586 = vpop.f32.mrb[0].mxu0
    %v4587 = vadd.f32 0.0, %v4586
    %v4588 = vpop.f32.mrb[0].mxu0
    %v4589 = vpop.f32.mrb[0].mxu0
    %v4590 = vadd.f32 0.0, %v4589
    %v4591 = vpop.f32.mrb[0].mxu0
    %4592 = vmatprep.mubr.bf16.mxu0 0
    %4593 = vmatmul.mubr.bf16.gmra.mrb[0].mxu0 %v1091
    %v4594 = vpop.f32.mrb[0].mxu0
    %v4595 = vadd.f32 0.0, %v4594
    %v4596 = vpop.f32.mrb[0].mxu0
    %v4597 = vpop.f32.mrb[0].mxu0
    %v4598 = vadd.f32 0.0, %v4597
    %v4599 = vpop.f32.mrb[0].mxu0
    %4600 = vmatprep.mubr.bf16.mxu0 0
    %4601 = vmatmul.mubr.bf16.gmra.mrb[0].mxu0 %v1094
    %v4602 = vpop.f32.mrb[0].mxu0
    %v4603 = vadd.f32 0.0, %v4602
    %v4604 = vpop.f32.mrb[0].mxu0
    %v4605 = vpop.f32.mrb[0].mxu0
    %v4606 = vadd.f32 0.0, %v4605
    %v4607 = vpop.f32.mrb[0].mxu0
    %4608 = vmatprep.mubr.bf16.mxu0 0
    %4609 = vmatmul.mubr.bf16.gmra.mrb[0].mxu0 %v1097
    %v4610 = vpop.f32.mrb[0].mxu0
    %v4611 = vadd.f32 0.0, %v4610
    %v4612 = vpop.f32.mrb[0].mxu0
    %v4613 = vpop.f32.mrb[0].mxu0
    %v4614 = vadd.f32 0.0, %v4613
    %v4615 = vpop.f32.mrb[0].mxu0
    %4616 = vmatprep.mubr.bf16.mxu0 0
    %4617 = vmatmul.mubr.bf16.gmra.mrb[0].mxu0 %v1100
    %v4618 = vpop.f32.mrb[0].mxu0
    %v4619 = vadd.f32 0.0, %v4618
    %v4620 = vpop.f32.mrb[0].mxu0
    %v4621 = vpop.f32.mrb[0].mxu0
    %v4622 = vadd.f32 0.0, %v4621
    %v4623 = vpop.f32.mrb[0].mxu0
    %4624 = vmatprep.mubr.bf16.mxu0 0
    %4625 = vmatmul.mubr.bf16.gmra.mrb[0].mxu0 %v1103
    %v4626 = vpop.f32.mrb[0].mxu0
    %v4627 = vadd.f32 0.0, %v4626
    %v4628 = vpop.f32.mrb[0].mxu0
    %v4629 = vpop.f32.mrb[0].mxu0
    %v4630 = vadd.f32 0.0, %v4629
    %v4631 = vpop.f32.mrb[0].mxu0
    %4632 = vmatprep.mubr.bf16.mxu0 0
    %4633 = vmatmul.mubr.bf16.gmra.mrb[0].mxu0 %v3183
    %v4634 = vpop.f32.mrb[0].mxu0
    %v4635 = vadd.f32 0.0, %v4634
    %v4636 = vpop.f32.mrb[0].mxu0
    %v4637 = vpop.f32.mrb[0].mxu0
    %v4638 = vadd.f32 0.0, %v4637
    %v4639 = vpop.f32.mrb[0].mxu0
    %4640 = vmatprep.mubr.bf16.mxu0 0
    %4641 = vmatmul.mubr.bf16.gmra.mrb[0].mxu0 %v4355
    %v4642 = vpop.f32.mrb[0].mxu0
    %v4643 = vadd.f32 0.0, %v4642
    %v4644 = vpop.f32.mrb[0].mxu0
    %v4645 = vpop.f32.mrb[0].mxu0
    %v4646 = vadd.f32 0.0, %v4645
    %v4647 = vpop.f32.mrb[0].mxu0
    %4648 = vdwg.mxu0
    %v4649 = vadd.f32 %v4233, %v4395
    %v4650 = vadd.f32 %v4234, %v4398
    %v4651 = vadd.f32 %v4235, %v4403
    %v4652 = vadd.f32 %v4236, %v4406
    %v4653 = vadd.f32 %v4237, %v4411
    %v4654 = vadd.f32 %v4238, %v4414
    %v4655 = vadd.f32 %v4239, %v4419
    %v4656 = vadd.f32 %v4240, %v4422
    %v4657 = vadd.f32 %v4241, %v4427
    %v4658 = vadd.f32 %v4242, %v4430
    %v4659 = vadd.f32 %v4243, %v4435
    %v4660 = vadd.f32 %v4244, %v4438
    %v4661 = vadd.f32 %v4245, %v4443
    %v4662 = vadd.f32 %v4246, %v4446
    %v4663 = vadd.f32 %v4247, %v4451
    %v4664 = vadd.f32 %v4248, %v4454
    %v4665 = vadd.f32 %v4249, %v4459
    %v4666 = vadd.f32 %v4250, %v4462
    %v4667 = vadd.f32 %v4251, %v4467
    %v4668 = vadd.f32 %v4252, %v4470
    %v4669 = vadd.f32 %v4253, %v4475
    %v4670 = vadd.f32 %v4254, %v4478
    %v4671 = vadd.f32 %v4255, %v4483
    %v4672 = vadd.f32 %v4256, %v4486
    %v4673 = vadd.f32 %v4257, %v4491
    %v4674 = vadd.f32 %v4258, %v4494
    %v4675 = vadd.f32 %v4259, %v4499
    %v4676 = vadd.f32 %v4260, %v4502
    %v4677 = vadd.f32 %v4261, %v4507
    %v4678 = vadd.f32 %v4262, %v4510
    %v4679 = vadd.f32 %v4263, %v4515
    %v4680 = vadd.f32 %v4264, %v4518
    %v4681 = vadd.f32 %v4265, %v4523
    %v4682 = vadd.f32 %v4266, %v4526
    %v4683 = vadd.f32 %v4267, %v4531
    %v4684 = vadd.f32 %v4268, %v4534
    %v4685 = vadd.f32 %v4269, %v4539
    %v4686 = vadd.f32 %v4270, %v4542
    %v4687 = vadd.f32 %v4271, %v4547
    %v4688 = vadd.f32 %v4272, %v4550
    %v4689 = vadd.f32 %v4273, %v4555
    %v4690 = vadd.f32 %v4274, %v4558
    %v4691 = vadd.f32 %v4275, %v4563
    %v4692 = vadd.f32 %v4276, %v4566
    %v4693 = vadd.f32 %v4277, %v4571
    %v4694 = vadd.f32 %v4278, %v4574
    %v4695 = vadd.f32 %v4279, %v4579
    %v4696 = vadd.f32 %v4280, %v4582
    %v4697 = vadd.f32 %v4281, %v4587
    %v4698 = vadd.f32 %v4282, %v4590
    %v4699 = vadd.f32 %v4283, %v4595
    %v4700 = vadd.f32 %v4284, %v4598
    %v4701 = vadd.f32 %v4285, %v4603
    %v4702 = vadd.f32 %v4286, %v4606
    %v4703 = vadd.f32 %v4287, %v4611
    %v4704 = vadd.f32 %v4288, %v4614
    %v4705 = vadd.f32 %v4289, %v4619
    %v4706 = vadd.f32 %v4290, %v4622
    %v4707 = vadd.f32 %v4291, %v4627
    %v4708 = vadd.f32 %v4292, %v4630
    %v4709 = vadd.f32 %v4293, %v4635
    %v4710 = vadd.f32 %v4294, %v4638
    %v4711 = vadd.f32 %v4295, %v4643
    %v4712 = vadd.f32 %v4296, %v4646
    %v4715 = vrot.slane %v75, 5
    %v4716 = vrot.slane %v4715, 4
    %v4717 = vrot.slane %v76, 5
    %v4718 = vsel %vm1980, %v4716, %v4717
    %v4719 = vrot.slane %v4717, 4
    %v4720 = vrot.slane %v77, 5
    %v4721 = vsel %vm1980, %v4719, %v4720
    %v4722 = vrot.slane %v129, 5
    %v4723 = vrot.slane %v4722, 4
    %v4724 = vrot.slane %v130, 5
    %v4725 = vsel %vm1980, %v4723, %v4724
    %v4726 = vrot.slane %v4724, 4
    %v4727 = vrot.slane %v131, 5
    %v4728 = vsel %vm1980, %v4726, %v4727
    %v4729 = vunpack.c.l.b16 %v4718
    %v4730 = vunpack.c.l.b16 %v4721
    %v4731 = vunpack.c.l.b16 %v4725
    %v4732 = vunpack.c.l.b16 %v4728
    %v4733 = vpack.c.b16 %v4730, %v4729
    %v4734 = vpack.c.b16 %v4732, %v4731
    %v4736 = vsel %vm1008, %v4733, 0
    %v4739 = vsel %vm1008, %v4734, 0
    %v4742 = vsel %vm1105, %v140, 0
    %4744 = vmatprep.subr.bf16.mxu0 0
    %4745 = vmatpush1.bf16.msra.mxu0 %v4742
    %4746 = vmatprep.subr.bf16.mxu0 0
    %4747 = vmatpush1.bf16.msra.mxu0 0
    %4748 = vmatprep.subr.bf16.mxu0 0
    %4749 = vmatpush1.bf16.msra.mxu0 0
    %4750 = vmatprep.subr.bf16.mxu0 0
    %4751 = vmatpush1.bf16.msra.mxu0 0
    %4752 = vmatprep.subr.bf16.mxu0 0
    %4753 = vmatpush1.bf16.msra.mxu0 0
    %4754 = vmatprep.subr.bf16.mxu0 0
    %4755 = vmatpush1.bf16.msra.mxu0 0
    %4756 = vmatprep.subr.bf16.mxu0 0
    %4757 = vmatpush1.bf16.msra.mxu0 0
    %4758 = vmatprep.subr.bf16.mxu0 0
    %4759 = vmatpush1.bf16.msra.mxu0 0
    %4760 = vmatprep.subr.bf16.mxu0 0
    %4761 = vmatpush1.bf16.msra.mxu0 0
    %4762 = vmatprep.subr.bf16.mxu0 0
    %4763 = vmatpush1.bf16.msra.mxu0 0
    %4764 = vmatprep.subr.bf16.mxu0 0
    %4765 = vmatpush1.bf16.msra.mxu0 0
    %4766 = vmatprep.subr.bf16.mxu0 0
    %4767 = vmatpush1.bf16.msra.mxu0 0
    %4768 = vmatprep.subr.bf16.mxu0 0
    %4769 = vmatpush1.bf16.msra.mxu0 0
    %4770 = vmatprep.subr.bf16.mxu0 0
    %4771 = vmatpush1.bf16.msra.mxu0 0
    %4772 = vmatprep.subr.bf16.mxu0 0
    %4773 = vmatpush1.bf16.msra.mxu0 0
    %4774 = vmatprep.subr.bf16.mxu0 0
    %4775 = vmatpush1.bf16.msra.mxu0 0
    %4776 = vmatprep.mubr.bf16.mxu0 0
    %4777 = vmatmul.mubr.bf16.gmra.mrb[0].mxu0 %v2308
    %v4778 = vpop.f32.mrb[0].mxu0
    %v4779 = vadd.f32 0.0, %v4778
    %v4780 = vpop.f32.mrb[0].mxu0
    %v4781 = vpop.f32.mrb[0].mxu0
    %v4782 = vadd.f32 0.0, %v4781
    %v4783 = vpop.f32.mrb[0].mxu0
    %4784 = vmatprep.mubr.bf16.mxu0 0
    %4785 = vmatmul.mubr.bf16.gmra.mrb[0].mxu0 %v2311
    %v4786 = vpop.f32.mrb[0].mxu0
    %v4787 = vadd.f32 0.0, %v4786
    %v4788 = vpop.f32.mrb[0].mxu0
    %v4789 = vpop.f32.mrb[0].mxu0
    %v4790 = vadd.f32 0.0, %v4789
    %v4791 = vpop.f32.mrb[0].mxu0
    %4792 = vmatprep.mubr.bf16.mxu0 0
    %4793 = vmatmul.mubr.bf16.gmra.mrb[0].mxu0 %v2314
    %v4794 = vpop.f32.mrb[0].mxu0
    %v4795 = vadd.f32 0.0, %v4794
    %v4796 = vpop.f32.mrb[0].mxu0
    %v4797 = vpop.f32.mrb[0].mxu0
    %v4798 = vadd.f32 0.0, %v4797
    %v4799 = vpop.f32.mrb[0].mxu0
    %4800 = vmatprep.mubr.bf16.mxu0 0
    %4801 = vmatmul.mubr.bf16.gmra.mrb[0].mxu0 %v2317
    %v4802 = vpop.f32.mrb[0].mxu0
    %v4803 = vadd.f32 0.0, %v4802
    %v4804 = vpop.f32.mrb[0].mxu0
    %v4805 = vpop.f32.mrb[0].mxu0
    %v4806 = vadd.f32 0.0, %v4805
    %v4807 = vpop.f32.mrb[0].mxu0
    %4808 = vmatprep.mubr.bf16.mxu0 0
    %4809 = vmatmul.mubr.bf16.gmra.mrb[0].mxu0 %v2320
    %v4810 = vpop.f32.mrb[0].mxu0
    %v4811 = vadd.f32 0.0, %v4810
    %v4812 = vpop.f32.mrb[0].mxu0
    %v4813 = vpop.f32.mrb[0].mxu0
    %v4814 = vadd.f32 0.0, %v4813
    %v4815 = vpop.f32.mrb[0].mxu0
    %4816 = vmatprep.mubr.bf16.mxu0 0
    %4817 = vmatmul.mubr.bf16.gmra.mrb[0].mxu0 %v2323
    %v4818 = vpop.f32.mrb[0].mxu0
    %v4819 = vadd.f32 0.0, %v4818
    %v4820 = vpop.f32.mrb[0].mxu0
    %v4821 = vpop.f32.mrb[0].mxu0
    %v4822 = vadd.f32 0.0, %v4821
    %v4823 = vpop.f32.mrb[0].mxu0
    %4824 = vmatprep.mubr.bf16.mxu0 0
    %4825 = vmatmul.mubr.bf16.gmra.mrb[0].mxu0 %v2326
    %v4826 = vpop.f32.mrb[0].mxu0
    %v4827 = vadd.f32 0.0, %v4826
    %v4828 = vpop.f32.mrb[0].mxu0
    %v4829 = vpop.f32.mrb[0].mxu0
    %v4830 = vadd.f32 0.0, %v4829
    %v4831 = vpop.f32.mrb[0].mxu0
    %4832 = vmatprep.mubr.bf16.mxu0 0
    %4833 = vmatmul.mubr.bf16.gmra.mrb[0].mxu0 %v2329
    %v4834 = vpop.f32.mrb[0].mxu0
    %v4835 = vadd.f32 0.0, %v4834
    %v4836 = vpop.f32.mrb[0].mxu0
    %v4837 = vpop.f32.mrb[0].mxu0
    %v4838 = vadd.f32 0.0, %v4837
    %v4839 = vpop.f32.mrb[0].mxu0
    %4840 = vmatprep.mubr.bf16.mxu0 0
    %4841 = vmatmul.mubr.bf16.gmra.mrb[0].mxu0 %v2332
    %v4842 = vpop.f32.mrb[0].mxu0
    %v4843 = vadd.f32 0.0, %v4842
    %v4844 = vpop.f32.mrb[0].mxu0
    %v4845 = vpop.f32.mrb[0].mxu0
    %v4846 = vadd.f32 0.0, %v4845
    %v4847 = vpop.f32.mrb[0].mxu0
    %4848 = vmatprep.mubr.bf16.mxu0 0
    %4849 = vmatmul.mubr.bf16.gmra.mrb[0].mxu0 %v2335
    %v4850 = vpop.f32.mrb[0].mxu0
    %v4851 = vadd.f32 0.0, %v4850
    %v4852 = vpop.f32.mrb[0].mxu0
    %v4853 = vpop.f32.mrb[0].mxu0
    %v4854 = vadd.f32 0.0, %v4853
    %v4855 = vpop.f32.mrb[0].mxu0
    %4856 = vmatprep.mubr.bf16.mxu0 0
    %4857 = vmatmul.mubr.bf16.gmra.mrb[0].mxu0 %v2338
    %v4858 = vpop.f32.mrb[0].mxu0
    %v4859 = vadd.f32 0.0, %v4858
    %v4860 = vpop.f32.mrb[0].mxu0
    %v4861 = vpop.f32.mrb[0].mxu0
    %v4862 = vadd.f32 0.0, %v4861
    %v4863 = vpop.f32.mrb[0].mxu0
    %4864 = vmatprep.mubr.bf16.mxu0 0
    %4865 = vmatmul.mubr.bf16.gmra.mrb[0].mxu0 %v2341
    %v4866 = vpop.f32.mrb[0].mxu0
    %v4867 = vadd.f32 0.0, %v4866
    %v4868 = vpop.f32.mrb[0].mxu0
    %v4869 = vpop.f32.mrb[0].mxu0
    %v4870 = vadd.f32 0.0, %v4869
    %v4871 = vpop.f32.mrb[0].mxu0
    %4872 = vmatprep.mubr.bf16.mxu0 0
    %4873 = vmatmul.mubr.bf16.gmra.mrb[0].mxu0 %v2344
    %v4874 = vpop.f32.mrb[0].mxu0
    %v4875 = vadd.f32 0.0, %v4874
    %v4876 = vpop.f32.mrb[0].mxu0
    %v4877 = vpop.f32.mrb[0].mxu0
    %v4878 = vadd.f32 0.0, %v4877
    %v4879 = vpop.f32.mrb[0].mxu0
    %4880 = vmatprep.mubr.bf16.mxu0 0
    %4881 = vmatmul.mubr.bf16.gmra.mrb[0].mxu0 %v2347
    %v4882 = vpop.f32.mrb[0].mxu0
    %v4883 = vadd.f32 0.0, %v4882
    %v4884 = vpop.f32.mrb[0].mxu0
    %v4885 = vpop.f32.mrb[0].mxu0
    %v4886 = vadd.f32 0.0, %v4885
    %v4887 = vpop.f32.mrb[0].mxu0
    %4888 = vmatprep.mubr.bf16.mxu0 0
    %4889 = vmatmul.mubr.bf16.gmra.mrb[0].mxu0 %v3564
    %v4890 = vpop.f32.mrb[0].mxu0
    %v4891 = vadd.f32 0.0, %v4890
    %v4892 = vpop.f32.mrb[0].mxu0
    %v4893 = vpop.f32.mrb[0].mxu0
    %v4894 = vadd.f32 0.0, %v4893
    %v4895 = vpop.f32.mrb[0].mxu0
    %4896 = vmatprep.mubr.bf16.mxu0 0
    %4897 = vmatmul.mubr.bf16.gmra.mrb[0].mxu0 %v4736
    %v4898 = vpop.f32.mrb[0].mxu0
    %v4899 = vadd.f32 0.0, %v4898
    %v4900 = vpop.f32.mrb[0].mxu0
    %v4901 = vpop.f32.mrb[0].mxu0
    %v4902 = vadd.f32 0.0, %v4901
    %v4903 = vpop.f32.mrb[0].mxu0
    %4904 = vmatprep.mubr.bf16.mxu0 0
    %4905 = vmatmul.mubr.bf16.gmra.mrb[0].mxu0 %v2356
    %v4906 = vpop.f32.mrb[0].mxu0
    %v4907 = vadd.f32 0.0, %v4906
    %v4908 = vpop.f32.mrb[0].mxu0
    %v4909 = vpop.f32.mrb[0].mxu0
    %v4910 = vadd.f32 0.0, %v4909
    %v4911 = vpop.f32.mrb[0].mxu0
    %4912 = vmatprep.mubr.bf16.mxu0 0
    %4913 = vmatmul.mubr.bf16.gmra.mrb[0].mxu0 %v2359
    %v4914 = vpop.f32.mrb[0].mxu0
    %v4915 = vadd.f32 0.0, %v4914
    %v4916 = vpop.f32.mrb[0].mxu0
    %v4917 = vpop.f32.mrb[0].mxu0
    %v4918 = vadd.f32 0.0, %v4917
    %v4919 = vpop.f32.mrb[0].mxu0
    %4920 = vmatprep.mubr.bf16.mxu0 0
    %4921 = vmatmul.mubr.bf16.gmra.mrb[0].mxu0 %v2362
    %v4922 = vpop.f32.mrb[0].mxu0
    %v4923 = vadd.f32 0.0, %v4922
    %v4924 = vpop.f32.mrb[0].mxu0
    %v4925 = vpop.f32.mrb[0].mxu0
    %v4926 = vadd.f32 0.0, %v4925
    %v4927 = vpop.f32.mrb[0].mxu0
    %4928 = vmatprep.mubr.bf16.mxu0 0
    %4929 = vmatmul.mubr.bf16.gmra.mrb[0].mxu0 %v2365
    %v4930 = vpop.f32.mrb[0].mxu0
    %v4931 = vadd.f32 0.0, %v4930
    %v4932 = vpop.f32.mrb[0].mxu0
    %v4933 = vpop.f32.mrb[0].mxu0
    %v4934 = vadd.f32 0.0, %v4933
    %v4935 = vpop.f32.mrb[0].mxu0
    %4936 = vmatprep.mubr.bf16.mxu0 0
    %4937 = vmatmul.mubr.bf16.gmra.mrb[0].mxu0 %v2368
    %v4938 = vpop.f32.mrb[0].mxu0
    %v4939 = vadd.f32 0.0, %v4938
    %v4940 = vpop.f32.mrb[0].mxu0
    %v4941 = vpop.f32.mrb[0].mxu0
    %v4942 = vadd.f32 0.0, %v4941
    %v4943 = vpop.f32.mrb[0].mxu0
    %4944 = vmatprep.mubr.bf16.mxu0 0
    %4945 = vmatmul.mubr.bf16.gmra.mrb[0].mxu0 %v2371
    %v4946 = vpop.f32.mrb[0].mxu0
    %v4947 = vadd.f32 0.0, %v4946
    %v4948 = vpop.f32.mrb[0].mxu0
    %v4949 = vpop.f32.mrb[0].mxu0
    %v4950 = vadd.f32 0.0, %v4949
    %v4951 = vpop.f32.mrb[0].mxu0
    %4952 = vmatprep.mubr.bf16.mxu0 0
    %4953 = vmatmul.mubr.bf16.gmra.mrb[0].mxu0 %v2374
    %v4954 = vpop.f32.mrb[0].mxu0
    %v4955 = vadd.f32 0.0, %v4954
    %v4956 = vpop.f32.mrb[0].mxu0
    %v4957 = vpop.f32.mrb[0].mxu0
    %v4958 = vadd.f32 0.0, %v4957
    %v4959 = vpop.f32.mrb[0].mxu0
    %4960 = vmatprep.mubr.bf16.mxu0 0
    %4961 = vmatmul.mubr.bf16.gmra.mrb[0].mxu0 %v2377
    %v4962 = vpop.f32.mrb[0].mxu0
    %v4963 = vadd.f32 0.0, %v4962
    %v4964 = vpop.f32.mrb[0].mxu0
    %v4965 = vpop.f32.mrb[0].mxu0
    %v4966 = vadd.f32 0.0, %v4965
    %v4967 = vpop.f32.mrb[0].mxu0
    %4968 = vmatprep.mubr.bf16.mxu0 0
    %4969 = vmatmul.mubr.bf16.gmra.mrb[0].mxu0 %v2380
    %v4970 = vpop.f32.mrb[0].mxu0
    %v4971 = vadd.f32 0.0, %v4970
    %v4972 = vpop.f32.mrb[0].mxu0
    %v4973 = vpop.f32.mrb[0].mxu0
    %v4974 = vadd.f32 0.0, %v4973
    %v4975 = vpop.f32.mrb[0].mxu0
    %4976 = vmatprep.mubr.bf16.mxu0 0
    %4977 = vmatmul.mubr.bf16.gmra.mrb[0].mxu0 %v2383
    %v4978 = vpop.f32.mrb[0].mxu0
    %v4979 = vadd.f32 0.0, %v4978
    %v4980 = vpop.f32.mrb[0].mxu0
    %v4981 = vpop.f32.mrb[0].mxu0
    %v4982 = vadd.f32 0.0, %v4981
    %v4983 = vpop.f32.mrb[0].mxu0
    %4984 = vmatprep.mubr.bf16.mxu0 0
    %4985 = vmatmul.mubr.bf16.gmra.mrb[0].mxu0 %v2386
    %v4986 = vpop.f32.mrb[0].mxu0
    %v4987 = vadd.f32 0.0, %v4986
    %v4988 = vpop.f32.mrb[0].mxu0
    %v4989 = vpop.f32.mrb[0].mxu0
    %v4990 = vadd.f32 0.0, %v4989
    %v4991 = vpop.f32.mrb[0].mxu0
    %4992 = vmatprep.mubr.bf16.mxu0 0
    %4993 = vmatmul.mubr.bf16.gmra.mrb[0].mxu0 %v2389
    %v4994 = vpop.f32.mrb[0].mxu0
    %v4995 = vadd.f32 0.0, %v4994
    %v4996 = vpop.f32.mrb[0].mxu0
    %v4997 = vpop.f32.mrb[0].mxu0
    %v4998 = vadd.f32 0.0, %v4997
    %v4999 = vpop.f32.mrb[0].mxu0
    %5000 = vmatprep.mubr.bf16.mxu0 0
    %5001 = vmatmul.mubr.bf16.gmra.mrb[0].mxu0 %v2392
    %v5002 = vpop.f32.mrb[0].mxu0
    %v5003 = vadd.f32 0.0, %v5002
    %v5004 = vpop.f32.mrb[0].mxu0
    %v5005 = vpop.f32.mrb[0].mxu0
    %v5006 = vadd.f32 0.0, %v5005
    %v5007 = vpop.f32.mrb[0].mxu0
    %5008 = vmatprep.mubr.bf16.mxu0 0
    %5009 = vmatmul.mubr.bf16.gmra.mrb[0].mxu0 %v2395
    %v5010 = vpop.f32.mrb[0].mxu0
    %v5011 = vadd.f32 0.0, %v5010
    %v5012 = vpop.f32.mrb[0].mxu0
    %v5013 = vpop.f32.mrb[0].mxu0
    %v5014 = vadd.f32 0.0, %v5013
    %v5015 = vpop.f32.mrb[0].mxu0
    %5016 = vmatprep.mubr.bf16.mxu0 0
    %5017 = vmatmul.mubr.bf16.gmra.mrb[0].mxu0 %v3567
    %v5018 = vpop.f32.mrb[0].mxu0
    %v5019 = vadd.f32 0.0, %v5018
    %v5020 = vpop.f32.mrb[0].mxu0
    %v5021 = vpop.f32.mrb[0].mxu0
    %v5022 = vadd.f32 0.0, %v5021
    %v5023 = vpop.f32.mrb[0].mxu0
    %5024 = vmatprep.mubr.bf16.mxu0 0
    %5025 = vmatmul.mubr.bf16.gmra.mrb[0].mxu0 %v4739
    %v5026 = vpop.f32.mrb[0].mxu0
    %v5027 = vadd.f32 0.0, %v5026
    %v5028 = vpop.f32.mrb[0].mxu0
    %v5029 = vpop.f32.mrb[0].mxu0
    %v5030 = vadd.f32 0.0, %v5029
    %v5031 = vpop.f32.mrb[0].mxu0
    %5032 = vdwg.mxu0
    %v5033 = vadd.f32 %v4649, %v4779
    %v5034 = vadd.f32 %v4650, %v4782
    %v5035 = vadd.f32 %v4651, %v4787
    %v5036 = vadd.f32 %v4652, %v4790
    %v5037 = vadd.f32 %v4653, %v4795
    %v5038 = vadd.f32 %v4654, %v4798
    %v5039 = vadd.f32 %v4655, %v4803
    %v5040 = vadd.f32 %v4656, %v4806
    %v5041 = vadd.f32 %v4657, %v4811
    %v5042 = vadd.f32 %v4658, %v4814
    %v5043 = vadd.f32 %v4659, %v4819
    %v5044 = vadd.f32 %v4660, %v4822
    %v5045 = vadd.f32 %v4661, %v4827
    %v5046 = vadd.f32 %v4662, %v4830
    %v5047 = vadd.f32 %v4663, %v4835
    %v5048 = vadd.f32 %v4664, %v4838
    %v5049 = vadd.f32 %v4665, %v4843
    %v5050 = vadd.f32 %v4666, %v4846
    %v5051 = vadd.f32 %v4667, %v4851
    %v5052 = vadd.f32 %v4668, %v4854
    %v5053 = vadd.f32 %v4669, %v4859
    %v5054 = vadd.f32 %v4670, %v4862
    %v5055 = vadd.f32 %v4671, %v4867
    %v5056 = vadd.f32 %v4672, %v4870
    %v5057 = vadd.f32 %v4673, %v4875
    %v5058 = vadd.f32 %v4674, %v4878
    %v5059 = vadd.f32 %v4675, %v4883
    %v5060 = vadd.f32 %v4676, %v4886
    %v5061 = vadd.f32 %v4677, %v4891
    %v5062 = vadd.f32 %v4678, %v4894
    %v5063 = vadd.f32 %v4679, %v4899
    %v5064 = vadd.f32 %v4680, %v4902
    %v5065 = vadd.f32 %v4681, %v4907
    %v5066 = vadd.f32 %v4682, %v4910
    %v5067 = vadd.f32 %v4683, %v4915
    %v5068 = vadd.f32 %v4684, %v4918
    %v5069 = vadd.f32 %v4685, %v4923
    %v5070 = vadd.f32 %v4686, %v4926
    %v5071 = vadd.f32 %v4687, %v4931
    %v5072 = vadd.f32 %v4688, %v4934
    %v5073 = vadd.f32 %v4689, %v4939
    %v5074 = vadd.f32 %v4690, %v4942
    %v5075 = vadd.f32 %v4691, %v4947
    %v5076 = vadd.f32 %v4692, %v4950
    %v5077 = vadd.f32 %v4693, %v4955
    %v5078 = vadd.f32 %v4694, %v4958
    %v5079 = vadd.f32 %v4695, %v4963
    %v5080 = vadd.f32 %v4696, %v4966
    %v5081 = vadd.f32 %v4697, %v4971
    %v5082 = vadd.f32 %v4698, %v4974
    %v5083 = vadd.f32 %v4699, %v4979
    %v5084 = vadd.f32 %v4700, %v4982
    %v5085 = vadd.f32 %v4701, %v4987
    %v5086 = vadd.f32 %v4702, %v4990
    %v5087 = vadd.f32 %v4703, %v4995
    %v5088 = vadd.f32 %v4704, %v4998
    %v5089 = vadd.f32 %v4705, %v5003
    %v5090 = vadd.f32 %v4706, %v5006
    %v5091 = vadd.f32 %v4707, %v5011
    %v5092 = vadd.f32 %v4708, %v5014
    %v5093 = vadd.f32 %v4709, %v5019
    %v5094 = vadd.f32 %v4710, %v5022
    %v5095 = vadd.f32 %v4711, %v5027
    %v5096 = vadd.f32 %v4712, %v5030
    %v5097 = vld [vmem:[%s3] sm:$0x1]
    %v5099 = vlaneseq
    %v5100 = vshrl.u32 %v5099, 7
    %v5101 = vsub.s32 0, %v5100
    %v5102 = vrot.slane %v5097, %v5101
    %v5104 = vadd.f32 %v5033, %v5102
    %v5105 = vadd.f32 %v5034, %v5102
    %v5106 = vadd.f32 %v5035, %v5102
    %v5107 = vadd.f32 %v5036, %v5102
    %v5108 = vadd.f32 %v5037, %v5102
    %v5109 = vadd.f32 %v5038, %v5102
    %v5110 = vadd.f32 %v5039, %v5102
    %v5111 = vadd.f32 %v5040, %v5102
    %v5112 = vadd.f32 %v5041, %v5102
    %v5113 = vadd.f32 %v5042, %v5102
    %v5114 = vadd.f32 %v5043, %v5102
    %v5115 = vadd.f32 %v5044, %v5102
    %v5116 = vadd.f32 %v5045, %v5102
    %v5117 = vadd.f32 %v5046, %v5102
    %v5118 = vadd.f32 %v5047, %v5102
    %v5119 = vadd.f32 %v5048, %v5102
    %v5120 = vadd.f32 %v5049, %v5102
    %v5121 = vadd.f32 %v5050, %v5102
    %v5122 = vadd.f32 %v5051, %v5102
    %v5123 = vadd.f32 %v5052, %v5102
    %v5124 = vadd.f32 %v5053, %v5102
    %v5125 = vadd.f32 %v5054, %v5102
    %v5126 = vadd.f32 %v5055, %v5102
    %v5127 = vadd.f32 %v5056, %v5102
    %v5128 = vadd.f32 %v5057, %v5102
    %v5129 = vadd.f32 %v5058, %v5102
    %v5130 = vadd.f32 %v5059, %v5102
    %v5131 = vadd.f32 %v5060, %v5102
    %v5132 = vadd.f32 %v5061, %v5102
    %v5133 = vadd.f32 %v5062, %v5102
    %v5134 = vadd.f32 %v5063, %v5102
    %v5135 = vadd.f32 %v5064, %v5102
    %v5136 = vadd.f32 %v5065, %v5102
    %v5137 = vadd.f32 %v5066, %v5102
    %v5138 = vadd.f32 %v5067, %v5102
    %v5139 = vadd.f32 %v5068, %v5102
    %v5140 = vadd.f32 %v5069, %v5102
    %v5141 = vadd.f32 %v5070, %v5102
    %v5142 = vadd.f32 %v5071, %v5102
    %v5143 = vadd.f32 %v5072, %v5102
    %v5144 = vadd.f32 %v5073, %v5102
    %v5145 = vadd.f32 %v5074, %v5102
    %v5146 = vadd.f32 %v5075, %v5102
    %v5147 = vadd.f32 %v5076, %v5102
    %v5148 = vadd.f32 %v5077, %v5102
    %v5149 = vadd.f32 %v5078, %v5102
    %v5150 = vadd.f32 %v5079, %v5102
    %v5151 = vadd.f32 %v5080, %v5102
    %v5152 = vadd.f32 %v5081, %v5102
    %v5153 = vadd.f32 %v5082, %v5102
    %v5154 = vadd.f32 %v5083, %v5102
    %v5155 = vadd.f32 %v5084, %v5102
    %v5156 = vadd.f32 %v5085, %v5102
    %v5157 = vadd.f32 %v5086, %v5102
    %v5158 = vadd.f32 %v5087, %v5102
    %v5159 = vadd.f32 %v5088, %v5102
    %v5160 = vadd.f32 %v5089, %v5102
    %v5161 = vadd.f32 %v5090, %v5102
    %v5162 = vadd.f32 %v5091, %v5102
    %v5163 = vadd.f32 %v5092, %v5102
    %v5164 = vadd.f32 %v5093, %v5102
    %v5165 = vadd.f32 %v5094, %v5102
    %v5166 = vadd.f32 %v5095, %v5102
    %v5167 = vadd.f32 %v5096, %v5102
    %v5168 = vmax.f32 %v5104, 0.0
    %v5169 = vmax.f32 %v5105, 0.0
    %v5170 = vmax.f32 %v5106, 0.0
    %v5171 = vmax.f32 %v5107, 0.0
    %v5172 = vmax.f32 %v5108, 0.0
    %v5173 = vmax.f32 %v5109, 0.0
    %v5174 = vmax.f32 %v5110, 0.0
    %v5175 = vmax.f32 %v5111, 0.0
    %v5176 = vmax.f32 %v5112, 0.0
    %v5177 = vmax.f32 %v5113, 0.0
    %v5178 = vmax.f32 %v5114, 0.0
    %v5179 = vmax.f32 %v5115, 0.0
    %v5180 = vmax.f32 %v5116, 0.0
    %v5181 = vmax.f32 %v5117, 0.0
    %v5182 = vmax.f32 %v5118, 0.0
    %v5183 = vmax.f32 %v5119, 0.0
    %v5184 = vmax.f32 %v5120, 0.0
    %v5185 = vmax.f32 %v5121, 0.0
    %v5186 = vmax.f32 %v5122, 0.0
    %v5187 = vmax.f32 %v5123, 0.0
    %v5188 = vmax.f32 %v5124, 0.0
    %v5189 = vmax.f32 %v5125, 0.0
    %v5190 = vmax.f32 %v5126, 0.0
    %v5191 = vmax.f32 %v5127, 0.0
    %v5192 = vmax.f32 %v5128, 0.0
    %v5193 = vmax.f32 %v5129, 0.0
    %v5194 = vmax.f32 %v5130, 0.0
    %v5195 = vmax.f32 %v5131, 0.0
    %v5196 = vmax.f32 %v5132, 0.0
    %v5197 = vmax.f32 %v5133, 0.0
    %v5198 = vmax.f32 %v5134, 0.0
    %v5199 = vmax.f32 %v5135, 0.0
    %v5200 = vmax.f32 %v5136, 0.0
    %v5201 = vmax.f32 %v5137, 0.0
    %v5202 = vmax.f32 %v5138, 0.0
    %v5203 = vmax.f32 %v5139, 0.0
    %v5204 = vmax.f32 %v5140, 0.0
    %v5205 = vmax.f32 %v5141, 0.0
    %v5206 = vmax.f32 %v5142, 0.0
    %v5207 = vmax.f32 %v5143, 0.0
    %v5208 = vmax.f32 %v5144, 0.0
    %v5209 = vmax.f32 %v5145, 0.0
    %v5210 = vmax.f32 %v5146, 0.0
    %v5211 = vmax.f32 %v5147, 0.0
    %v5212 = vmax.f32 %v5148, 0.0
    %v5213 = vmax.f32 %v5149, 0.0
    %v5214 = vmax.f32 %v5150, 0.0
    %v5215 = vmax.f32 %v5151, 0.0
    %v5216 = vmax.f32 %v5152, 0.0
    %v5217 = vmax.f32 %v5153, 0.0
    %v5218 = vmax.f32 %v5154, 0.0
    %v5219 = vmax.f32 %v5155, 0.0
    %v5220 = vmax.f32 %v5156, 0.0
    %v5221 = vmax.f32 %v5157, 0.0
    %v5222 = vmax.f32 %v5158, 0.0
    %v5223 = vmax.f32 %v5159, 0.0
    %v5224 = vmax.f32 %v5160, 0.0
    %v5225 = vmax.f32 %v5161, 0.0
    %v5226 = vmax.f32 %v5162, 0.0
    %v5227 = vmax.f32 %v5163, 0.0
    %v5228 = vmax.f32 %v5164, 0.0
    %v5229 = vmax.f32 %v5165, 0.0
    %v5230 = vmax.f32 %v5166, 0.0
    %v5231 = vmax.f32 %v5167, 0.0
    %vm5232 = vcmask 261120
    %v5233 = vsel %vm5232, %v5168, 0.0
    %v5234 = vsel %vm5232, %v5169, 0.0
    %v5235 = vadd.f32 %v5233, %v5234
    %v5236 = vsel %vm5232, %v5170, 0.0
    %v5237 = vadd.f32 %v5235, %v5236
    %v5238 = vsel %vm5232, %v5171, 0.0
    %v5239 = vadd.f32 %v5237, %v5238
    %v5240 = vsel %vm5232, %v5172, 0.0
    %v5241 = vadd.f32 %v5239, %v5240
    %v5242 = vsel %vm5232, %v5173, 0.0
    %v5243 = vadd.f32 %v5241, %v5242
    %v5244 = vsel %vm5232, %v5174, 0.0
    %v5245 = vadd.f32 %v5243, %v5244
    %v5246 = vsel %vm5232, %v5175, 0.0
    %v5247 = vadd.f32 %v5245, %v5246
    %v5248 = vsel %vm5232, %v5176, 0.0
    %v5249 = vadd.f32 %v5247, %v5248
    %v5250 = vsel %vm5232, %v5177, 0.0
    %v5251 = vadd.f32 %v5249, %v5250
    %v5252 = vsel %vm5232, %v5178, 0.0
    %v5253 = vadd.f32 %v5251, %v5252
    %v5254 = vsel %vm5232, %v5179, 0.0
    %v5255 = vadd.f32 %v5253, %v5254
    %v5256 = vsel %vm5232, %v5180, 0.0
    %v5257 = vadd.f32 %v5255, %v5256
    %v5258 = vsel %vm5232, %v5181, 0.0
    %v5259 = vadd.f32 %v5257, %v5258
    %v5260 = vsel %vm5232, %v5182, 0.0
    %v5261 = vadd.f32 %v5259, %v5260
    %v5262 = vsel %vm5232, %v5183, 0.0
    %v5263 = vadd.f32 %v5261, %v5262
    %v5264 = vsel %vm5232, %v5184, 0.0
    %v5265 = vadd.f32 %v5263, %v5264
    %v5266 = vsel %vm5232, %v5185, 0.0
    %v5267 = vadd.f32 %v5265, %v5266
    %v5268 = vsel %vm5232, %v5186, 0.0
    %v5269 = vadd.f32 %v5267, %v5268
    %v5270 = vsel %vm5232, %v5187, 0.0
    %v5271 = vadd.f32 %v5269, %v5270
    %v5272 = vsel %vm5232, %v5188, 0.0
    %v5273 = vadd.f32 %v5271, %v5272
    %v5274 = vsel %vm5232, %v5189, 0.0
    %v5275 = vadd.f32 %v5273, %v5274
    %v5276 = vsel %vm5232, %v5190, 0.0
    %v5277 = vadd.f32 %v5275, %v5276
    %v5278 = vsel %vm5232, %v5191, 0.0
    %v5279 = vadd.f32 %v5277, %v5278
    %v5280 = vsel %vm5232, %v5192, 0.0
    %v5281 = vadd.f32 %v5279, %v5280
    %v5282 = vsel %vm5232, %v5193, 0.0
    %v5283 = vadd.f32 %v5281, %v5282
    %v5284 = vsel %vm5232, %v5194, 0.0
    %v5285 = vadd.f32 %v5283, %v5284
    %v5286 = vsel %vm5232, %v5195, 0.0
    %v5287 = vadd.f32 %v5285, %v5286
    %v5288 = vsel %vm5232, %v5196, 0.0
    %v5289 = vadd.f32 %v5287, %v5288
    %v5290 = vsel %vm5232, %v5197, 0.0
    %v5291 = vadd.f32 %v5289, %v5290
    %v5292 = vsel %vm5232, %v5198, 0.0
    %v5293 = vadd.f32 %v5291, %v5292
    %v5294 = vsel %vm5232, %v5199, 0.0
    %v5295 = vadd.f32 %v5293, %v5294
    %v5296 = vrot.slane %v5295, 4
    %v5297 = vadd.f32 %v5295, %v5296
    %v5298 = vrot.slane %v5297, 2
    %v5299 = vadd.f32 %v5297, %v5298
    %v5300 = vrot.slane %v5299, 1
    %v5301 = vadd.f32 %v5299, %v5300
    %v5302 = vsel %vm5232, %v5200, 0.0
    %v5303 = vsel %vm5232, %v5201, 0.0
    %v5304 = vadd.f32 %v5302, %v5303
    %v5305 = vsel %vm5232, %v5202, 0.0
    %v5306 = vadd.f32 %v5304, %v5305
    %v5307 = vsel %vm5232, %v5203, 0.0
    %v5308 = vadd.f32 %v5306, %v5307
    %v5309 = vsel %vm5232, %v5204, 0.0
    %v5310 = vadd.f32 %v5308, %v5309
    %v5311 = vsel %vm5232, %v5205, 0.0
    %v5312 = vadd.f32 %v5310, %v5311
    %v5313 = vsel %vm5232, %v5206, 0.0
    %v5314 = vadd.f32 %v5312, %v5313
    %v5315 = vsel %vm5232, %v5207, 0.0
    %v5316 = vadd.f32 %v5314, %v5315
    %v5317 = vsel %vm5232, %v5208, 0.0
    %v5318 = vadd.f32 %v5316, %v5317
    %v5319 = vsel %vm5232, %v5209, 0.0
    %v5320 = vadd.f32 %v5318, %v5319
    %v5321 = vsel %vm5232, %v5210, 0.0
    %v5322 = vadd.f32 %v5320, %v5321
    %v5323 = vsel %vm5232, %v5211, 0.0
    %v5324 = vadd.f32 %v5322, %v5323
    %v5325 = vsel %vm5232, %v5212, 0.0
    %v5326 = vadd.f32 %v5324, %v5325
    %v5327 = vsel %vm5232, %v5213, 0.0
    %v5328 = vadd.f32 %v5326, %v5327
    %v5329 = vsel %vm5232, %v5214, 0.0
    %v5330 = vadd.f32 %v5328, %v5329
    %v5331 = vsel %vm5232, %v5215, 0.0
    %v5332 = vadd.f32 %v5330, %v5331
    %v5333 = vsel %vm5232, %v5216, 0.0
    %v5334 = vadd.f32 %v5332, %v5333
    %v5335 = vsel %vm5232, %v5217, 0.0
    %v5336 = vadd.f32 %v5334, %v5335
    %v5337 = vsel %vm5232, %v5218, 0.0
    %v5338 = vadd.f32 %v5336, %v5337
    %v5339 = vsel %vm5232, %v5219, 0.0
    %v5340 = vadd.f32 %v5338, %v5339
    %v5341 = vsel %vm5232, %v5220, 0.0
    %v5342 = vadd.f32 %v5340, %v5341
    %v5343 = vsel %vm5232, %v5221, 0.0
    %v5344 = vadd.f32 %v5342, %v5343
    %v5345 = vsel %vm5232, %v5222, 0.0
    %v5346 = vadd.f32 %v5344, %v5345
    %v5347 = vsel %vm5232, %v5223, 0.0
    %v5348 = vadd.f32 %v5346, %v5347
    %v5349 = vsel %vm5232, %v5224, 0.0
    %v5350 = vadd.f32 %v5348, %v5349
    %v5351 = vsel %vm5232, %v5225, 0.0
    %v5352 = vadd.f32 %v5350, %v5351
    %v5353 = vsel %vm5232, %v5226, 0.0
    %v5354 = vadd.f32 %v5352, %v5353
    %v5355 = vsel %vm5232, %v5227, 0.0
    %v5356 = vadd.f32 %v5354, %v5355
    %v5357 = vsel %vm5232, %v5228, 0.0
    %v5358 = vadd.f32 %v5356, %v5357
    %v5359 = vsel %vm5232, %v5229, 0.0
    %v5360 = vadd.f32 %v5358, %v5359
    %v5361 = vsel %vm5232, %v5230, 0.0
    %v5362 = vadd.f32 %v5360, %v5361
    %v5363 = vsel %vm5232, %v5231, 0.0
    %v5364 = vadd.f32 %v5362, %v5363
    %v5365 = vrot.slane %v5364, 4
    %v5366 = vadd.f32 %v5364, %v5365
    %v5367 = vrot.slane %v5366, 2
    %v5368 = vadd.f32 %v5366, %v5367
    %v5369 = vrot.slane %v5368, 1
    %v5370 = vadd.f32 %v5368, %v5369
    %v5371 = vmul.f32 %v5301, 0.00390625
    %v5372 = vmul.f32 %v5370, 0.00390625
    %v5373 = vpack.c.bf16 %v5371, %v5371
    %v5374 = vpack.c.bf16 %v5372, %v5372
    %v5375 = vld [vmem:[%s4] sm:$0xf]
    %v5376 = vld [vmem:[%s4 + $0x4] sm:$0xf]
    %v5377 = vld [vmem:[%s4 + $0x8] sm:$0xf]
    %v5378 = vld [vmem:[%s4 + $0xc] sm:$0xf]
    %v5379 = vld [vmem:[%s5] sm:$0x1]
    %v5381 = vlaneseq
    %v5382 = vshrl.u32 %v5381, 7
    %v5383 = vsub.s32 0, %v5382
    %v5384 = vrot.slane %v5379, %v5383
    %v5388 = vunpack.c.l.b16 %v5373
    %v5389 = vunpack.c.l.b16 %v5374
    %vm5390 = vcmask 1041409
    %v5391 = vsel %vm5390, %v5389, %v5388
    %v5392 = vpack.c.b16 %v5391, %v5391
    %v5397 = vunpack.c.l.b16 %v5375
    %v5398 = vunpack.c.l.b16 %v5376
    %v5399 = vunpack.c.l.b16 %v5377
    %v5400 = vunpack.c.l.b16 %v5378
    %v5401 = vpack.c.b16 %v5398, %v5397
    %v5402 = vpack.c.b16 %v5400, %v5399
    %v5406 = vsel %vm5232, %v5392, 0
    %5408 = vmatprep.subr.bf16.mxu0 0
    %5409 = vmatpush1.bf16.msra.mxu0 %v5401
    %5410 = vmatprep.subr.bf16.mxu0 0
    %5411 = vmatpush1.bf16.msra.mxu0 %v5402
    %5412 = vmatprep.subr.bf16.mxu0 0
    %5413 = vmatpush1.bf16.msra.mxu0 0
    %5414 = vmatprep.subr.bf16.mxu0 0
    %5415 = vmatpush1.bf16.msra.mxu0 0
    %5416 = vmatprep.subr.bf16.mxu0 0
    %5417 = vmatpush1.bf16.msra.mxu0 0
    %5418 = vmatprep.subr.bf16.mxu0 0
    %5419 = vmatpush1.bf16.msra.mxu0 0
    %5420 = vmatprep.subr.bf16.mxu0 0
    %5421 = vmatpush1.bf16.msra.mxu0 0
    %5422 = vmatprep.subr.bf16.mxu0 0
    %5423 = vmatpush1.bf16.msra.mxu0 0
    %5424 = vmatprep.subr.bf16.mxu0 0
    %5425 = vmatpush1.bf16.msra.mxu0 0
    %5426 = vmatprep.subr.bf16.mxu0 0
    %5427 = vmatpush1.bf16.msra.mxu0 0
    %5428 = vmatprep.subr.bf16.mxu0 0
    %5429 = vmatpush1.bf16.msra.mxu0 0
    %5430 = vmatprep.subr.bf16.mxu0 0
    %5431 = vmatpush1.bf16.msra.mxu0 0
    %5432 = vmatprep.subr.bf16.mxu0 0
    %5433 = vmatpush1.bf16.msra.mxu0 0
    %5434 = vmatprep.subr.bf16.mxu0 0
    %5435 = vmatpush1.bf16.msra.mxu0 0
    %5436 = vmatprep.subr.bf16.mxu0 0
    %5437 = vmatpush1.bf16.msra.mxu0 0
    %5438 = vmatprep.subr.bf16.mxu0 0
    %5439 = vmatpush1.bf16.msra.mxu0 0
    %5440 = vmatprep.mubr.bf16.mxu0 0
    %5441 = vmatmul.mubr.bf16.gmra.mrb[0].mxu0 %v5406
    %v5442 = vpop.f32.mrb[0].mxu0
    %v5443 = vadd.f32 %v5384, %v5442
    %v5444 = vpop.f32.mrb[0].mxu0
    %v5445 = vpop.f32.mrb[0].mxu0
    %v5446 = vpop.f32.mrb[0].mxu0
    %5447 = vdwg.mxu0
    %v5448 = vmax.f32 %v5443, 0.0
    %v5449 = vlaneseq
    %v5450 = vshrl.u32 %v5449, 7
    %s5451 = smul.u32 0, 2
    %v5452 = vstv %s5451
    %v5453 = vadd.s32 %v5450, %v5452
    %v5454 = vlaneseq
    %v5455 = vand.u32 %v5454, 127
    %v5456 = vmul.u32 %v5453, 32
    %v5457 = vadd.s32 %v5456, %v5455
    %s5458 = sld [smem:[#allocation3]]
    %s5459 = smul.u32 %s5458, 2654435769
    %v5460 = vstv %s5459
    %v5461 = vadd.s32 %v5457, %v5460
    %v5462 = vshrl.u32 %v5461, 16
    %v5463 = vxor.u32 %v5461, %v5462
    %v5464 = vmul.u32 %v5463, 2146121005
    %v5465 = vshrl.u32 %v5464, 15
    %v5466 = vxor.u32 %v5464, %v5465
    %v5467 = vmul.u32 %v5466, 2221713035
    %v5468 = vshrl.u32 %v5467, 16
    %v5469 = vxor.u32 %v5467, %v5468
    %v5470 = vshrl.u32 %v5469, 31
    %vm5471 = vcmp.eq.s32.totalorder %v5470, 0
    %v5472 = vmul.f32 %v5448, 2.0
    %v5473 = vsel %vm5471, %v5472, 0.0
    %vm5474 = vcmask 254976
    %5475 = vst.msk [vmem:[#allocation4] sm:$0x3] %vm5474, %v5473
    // Predicated region
    $region22: #{tpu_custom_call.1} parent=1 // pred_check
      _
    $region23: #{tpu_custom_call.1} parent=1 // pred_check_branch
      %5477 = sbr.rel (0) target = $region25
    $region24: #{tpu_custom_call.1} parent=1 // pred_region
      %s5479 = ssub.s32 32, 32
      %5480 = vsyncadd [#allocation5], %s5479
      %s5482 = sshll.u32 [#allocation4], 4
      %s5483 = int_to_ptr.vmem [resolvable:$true] %s5482
      %5485 = dma.vmem_to_hbm [thread:$0]  %s5483, 32, %s6, [#allocation5]
    $region25: #{tpu_custom_call.1} parent=1 // pred_fallthru
      _
    // Predicated region
    $region26: #{tpu_custom_call.1} parent=1 // pred_check
      _
    $region27: #{tpu_custom_call.1} parent=1 // pred_check_branch
      %5487 = sbr.rel (0) target = $region29
    $region28: #{tpu_custom_call.1} parent=1 // pred_region
      %5488 = dma.done [#allocation5], 32
    $region29: #{tpu_custom_call.1} parent=1 // pred_fallthru
      _
    %5489 = vsyncpa [#allocation5], 1

</llo_original>
